<compile_context>
chip_gen: v7x
topology: tpu7x:2x2x1
jax: 0.10.0
libtpu: 0.0.40
codegen_flags: <defaults>
</compile_context>

<pallas_src>
import functools

import jax
import jax.numpy as jnp
from jax import lax
from jax.experimental import pallas as pl
from jax.experimental.pallas import tpu as pltpu

EPS = 1e-5                        # PyTorch BatchNorm2d default
_VMEM_LIMIT = 32 * 1024 * 1024    # explicit scoped-VMEM budget (safe on v5e/v6e/v7x)


# ------------------------------ small helpers -------------------------------

def _round_up(x, m):
    return (x + m - 1) // m * m


def _pick_tn(nout):
    """Output-channel tile: 256 when possible (v6e/v7x 256x256 MXU), else 128."""
    if nout % 256 == 0:
        return 256
    if nout % 128 == 0:
        return 128
    return nout


def _pick_tm(m):
    """Pixel (row) tile: large enough to amortize grid overhead, VMEM-bounded."""
    return min(512, _round_up(m, 8))


def _pad_rows(a, m_pad):
    m = a.shape[0]
    if m_pad == m:
        return a
    return jnp.pad(a, ((0, m_pad - m), (0, 0)))


# ----------------------------- Pallas kernels -------------------------------

def _mm_bn_kernel(relu, x_ref, w_ref, p_ref, o_ref):
    """(TM,K)@(K,tn) * scale + bias (+ ReLU); f32 accumulate / epilogue."""
    acc = jnp.dot(x_ref[...], w_ref[...], preferred_element_type=jnp.float32)
    y = acc * p_ref[0:1, :] + p_ref[1:2, :]
    if relu:
        y = jnp.maximum(y, 0.0)
    o_ref[...] = y.astype(o_ref.dtype)


def _mm_residual_kernel(x_ref, w_ref, xs_ref, wid_ref, p_ref, o_ref):
    """Final 1x1 conv + BN fused with identity 1x1 conv + BN, add, ReLU."""
    acc = jnp.dot(x_ref[...], w_ref[...], preferred_element_type=jnp.float32)
    ide = jnp.dot(xs_ref[...], wid_ref[...], preferred_element_type=jnp.float32)
    y = (acc * p_ref[0:1, :] + p_ref[1:2, :]
         + ide * p_ref[2:3, :] + p_ref[3:4, :])
    o_ref[...] = jnp.maximum(y, 0.0).astype(o_ref.dtype)


def _conv3x3_kernel(wp, lout, x_ref, w_ref, p_ref, o_ref):
    """Grouped 3x3 conv for one image / one Cout tile, im2col fused in VMEM.

    x_ref: (Hp*Wp, C)  spatially padded activation rows (bf16), read once.
    w_ref: (9, C, tn)  per-tap (block-diagonal) weights.
    p_ref: (2, tn)     folded BN scale / bias.
    o_ref: (Lout, tn)  output rows in the W-padded row space (Lout = Ho*Wp).
    """
    tn = o_ref.shape[-1]
    acc = jnp.zeros((lout, tn), jnp.float32)
    for t in range(9):
        dy, dx = t // 3, t % 3
        start = dy * wp + dx                       # static shifted window
        xt = x_ref[start:start + lout, :]
        acc = acc + jnp.dot(xt, w_ref[t], preferred_element_type=jnp.float32)
    y = acc * p_ref[0:1, :] + p_ref[1:2, :]
    o_ref[...] = jnp.maximum(y, 0.0).astype(o_ref.dtype)


# ----------------------------- kernel wrappers -------------------------------

def matmul_bn(x2d, w, scale, bias, *, relu, out_dtype):
    """Fused (x @ w) * scale + bias (+ ReLU), tiled over rows and Cout."""
    m, k = x2d.shape
    nout = w.shape[1]
    tn = _pick_tn(nout)
    tm = _pick_tm(m)
    m_pad = _round_up(m, tm)
    x2d = _pad_rows(x2d, m_pad)
    params = jnp.stack([scale, bias]).astype(jnp.float32)      # (2, nout)

    out = pl.pallas_call(
        functools.partial(_mm_bn_kernel, relu),
        out_shape=jax.ShapeDtypeStruct((m_pad, nout), out_dtype),
        grid=(m_pad // tm, nout // tn),
        in_specs=[
            pl.BlockSpec((tm, k), lambda i, j: (i, 0)),
            pl.BlockSpec((k, tn), lambda i, j: (0, j)),
            pl.BlockSpec((2, tn), lambda i, j: (0, j)),
        ],
        out_specs=pl.BlockSpec((tm, tn), lambda i, j: (i, j)),
        compiler_params=pltpu.CompilerParams(
            dimension_semantics=("parallel", "parallel"),
            vmem_limit_bytes=_VMEM_LIMIT),
    )(x2d, w, params)
    return out[:m] if m_pad != m else out


def matmul_bn_residual(h2d, w, s, b, xs2d, wid, sid, bid, *, out_dtype):
    """relu((h @ w)*s + b + (xs @ wid)*sid + bid), tiled over rows and Cout."""
    m, k = h2d.shape
    kin = xs2d.shape[1]
    nout = w.shape[1]
    tn = _pick_tn(nout)
    tm = _pick_tm(m)
    m_pad = _round_up(m, tm)
    h2d = _pad_rows(h2d, m_pad)
    xs2d = _pad_rows(xs2d, m_pad)
    params = jnp.stack([s, b, sid, bid]).astype(jnp.float32)   # (4, nout)

    out = pl.pallas_call(
        _mm_residual_kernel,
        out_shape=jax.ShapeDtypeStruct((m_pad, nout), out_dtype),
        grid=(m_pad // tm, nout // tn),
        in_specs=[
            pl.BlockSpec((tm, k), lambda i, j: (i, 0)),
            pl.BlockSpec((k, tn), lambda i, j: (0, j)),
            pl.BlockSpec((tm, kin), lambda i, j: (i, 0)),
            pl.BlockSpec((kin, tn), lambda i, j: (0, j)),
            pl.BlockSpec((4, tn), lambda i, j: (0, j)),
        ],
        out_specs=pl.BlockSpec((tm, tn), lambda i, j: (i, j)),
        compiler_params=pltpu.CompilerParams(
            dimension_semantics=("parallel", "parallel"),
            vmem_limit_bytes=_VMEM_LIMIT),
    )(h2d, w, xs2d, wid, params)
    return out[:m] if m_pad != m else out


def grouped_conv3x3_bn_relu(h1_nhwc, w_taps, scale, bias, *, out_dtype):
    """3x3 stride-1 pad-1 (block-diagonal grouped) conv + BN + ReLU.

    The padded image is flattened to (Hp*Wp, C) so every tap (dy, dx) is a
    *contiguous* shifted row window inside the kernel; columns w >= Wo of the
    padded row space produce garbage that is sliced off afterwards.
    """
    nb, ho, wo, c = h1_nhwc.shape
    nout = w_taps.shape[-1]
    tn = _pick_tn(nout)
    wp = wo + 2
    hp = ho + 3          # pad 1 top, 2 bottom: covers the max tap shift of the
    lout = ho * wp       # contiguous Ho*Wp-row windows.
    xp = jnp.pad(h1_nhwc, ((0, 0), (1, 2), (1, 1), (0, 0)))
    x_flat = xp.reshape(nb, hp * wp, c)
    params = jnp.stack([scale, bias]).astype(jnp.float32)      # (2, nout)

    out = pl.pallas_call(
        functools.partial(_conv3x3_kernel, wp, lout),
        out_shape=jax.ShapeDtypeStruct((nb, lout, nout), out_dtype),
        grid=(nb, nout // tn),
        in_specs=[
            pl.BlockSpec((None, hp * wp, c), lambda b, j: (b, 0, 0)),
            pl.BlockSpec((9, c, tn), lambda b, j: (0, 0, j)),
            pl.BlockSpec((2, tn), lambda b, j: (0, j)),
        ],
        out_specs=pl.BlockSpec((None, lout, tn), lambda b, j: (b, 0, j)),
        compiler_params=pltpu.CompilerParams(
            dimension_semantics=("parallel", "parallel"),
            vmem_limit_bytes=_VMEM_LIMIT),
    )(x_flat, w_taps, params)
    # drop the Wp - Wo garbage columns of the padded row space
    return out.reshape(nb, ho, wp, nout)[:, :, :wo, :]


# ------------------------------- glue (JAX) ---------------------------------

def fold_bn(gamma, beta, mean, var, conv_bias):
    s = gamma / jnp.sqrt(var + EPS)
    b = (conv_bias - mean) * s + beta
    return s, b


def expand_grouped_weight(wg, groups):
    """(O, Cin/g, kh, kw) grouped weight -> dense block-diagonal (O, Cin, kh, kw)."""
    o, cpg, kh, kw = wg.shape
    cin = groups * cpg
    opg = o // groups
    dense = jnp.zeros((o, cin, kh, kw), wg.dtype)
    for g in range(groups):
        dense = dense.at[g * opg:(g + 1) * opg, g * cpg:(g + 1) * cpg].set(
            wg[g * opg:(g + 1) * opg])
    return dense


def bottleneck_forward(x_nchw, raw, groups=32, down=False, starting=False):
    if starting:
        down = False
    k = 2 if down else 1

    x = jnp.transpose(x_nchw, (0, 2, 3, 1))                    # NCHW -> NHWC
    xs = x[:, ::k, ::k, :]                                     # 1x1 conv stride k
    nb, ho, wo, cin = xs.shape
    m = nb * ho * wo
    xs2 = xs.reshape(m, cin).astype(jnp.bfloat16)

    # fold BN (+ conv bias) into per-output-channel scale / bias (f32)
    s1, b1 = fold_bn(raw['g1'], raw['be1'], raw['m1'], raw['v1'], raw['bc1'])
    s2, b2 = fold_bn(raw['g2'], raw['be2'], raw['m2'], raw['v2'], raw['bc2'])
    s3, b3 = fold_bn(raw['g3'], raw['be3'], raw['m3'], raw['v3'], raw['bc3'])
    sid, bid = fold_bn(raw['gid'], raw['beid'], raw['mid_'], raw['vid'], raw['bcid'])

    # conv weights as matmul operands (bf16 on the MXU, f32 accumulation)
    w1 = raw['w1'][:, :, 0, 0].T.astype(jnp.bfloat16)          # (cin, width)
    w3 = raw['w3'][:, :, 0, 0].T.astype(jnp.bfloat16)          # (width, out_dim)
    wid = raw['wid'][:, :, 0, 0].T.astype(jnp.bfloat16)        # (cin, out_dim)
    dense2 = expand_grouped_weight(raw['w2'], groups)          # (width, width, 3, 3)
    width = dense2.shape[0]
    # TODO(synk): with groups=32 only 1/groups of each per-tap (width, width)
    # weight is nonzero; pack groups more tightly per MXU tile once the 3x3
    # stage becomes compute bound instead of memory bound.
    w_taps = jnp.transpose(dense2, (2, 3, 1, 0)).reshape(9, width, width)
    w_taps = w_taps.astype(jnp.bfloat16)

    # main path conv1 1x1 + BN + ReLU
    h1 = matmul_bn(xs2, w1, s1, b1, relu=True, out_dtype=jnp.bfloat16)
    # grouped 3x3 conv + BN + ReLU (im2col fused in-kernel)
    h2 = grouped_conv3x3_bn_relu(h1.reshape(nb, ho, wo, width), w_taps, s2, b2,
                                 out_dtype=jnp.bfloat16)
    h2 = h2.reshape(m, width)
    # final 1x1 conv + BN, fused identity 1x1 conv + BN, residual add + ReLU
    out2 = matmul_bn_residual(h2, w3, s3, b3, xs2, wid, sid, bid,
                              out_dtype=jnp.float32)

    out = out2.reshape(nb, ho, wo, -1)
    return jnp.transpose(out, (0, 3, 1, 2))                    # NHWC -> NCHW


# ----------------------- pure-JAX reference (checking) ----------------------

def ref_forward(x, raw, groups=32, down=False, starting=False):
    if starting:
        down = False
    k = 2 if down else 1

    def conv(x, w, b, stride, padding, fgc=1):
        y = lax.conv_general_dilated(
            x, w, (stride, stride), padding,
            dimension_numbers=('NCHW', 'OIHW', 'NCHW'),
            feature_group_count=fgc)
        return y + b[None, :, None, None]

    def bn(x, g, be, m, v):
        return ((x - m[None, :, None, None])
                / jnp.sqrt(v[None, :, None, None] + EPS)
                * g[None, :, None, None] + be[None, :, None, None])

    ident = bn(conv(x, raw['wid'], raw['bcid'], k, 'VALID'),
               raw['gid'], raw['beid'], raw['mid_'], raw['vid'])
    h = jax.nn.relu(bn(conv(x, raw['w1'], raw['bc1'], k, 'VALID'),
                       raw['g1'], raw['be1'], raw['m1'], raw['v1']))
    h = jax.nn.relu(bn(conv(h, raw['w2'], raw['bc2'], 1, [(1, 1), (1, 1)], groups),
                       raw['g2'], raw['be2'], raw['m2'], raw['v2']))
    h = bn(conv(h, raw['w3'], raw['bc3'], 1, 'VALID'),
           raw['g3'], raw['be3'], raw['m3'], raw['v3'])
    return jax.nn.relu(h + ident)


# ------------------------------ parameter init ------------------------------

def init_params(key, in_dim, mid_dim, out_dim, groups=32):
    width = mid_dim // 64 * 32 * 4
    keys = iter(jax.random.split(key, 32))

    def nrm(shape, scale=0.1):
        return scale * jax.random.normal(next(keys), shape, jnp.float32)

    def bn_params(n):
        return (1.0 + nrm((n,)), nrm((n,)), nrm((n,)), 1.0 + jnp.abs(nrm((n,))))

    raw = {}
    raw['w1'], raw['bc1'] = nrm((width, in_dim, 1, 1)), nrm((width,))
    raw['g1'], raw['be1'], raw['m1'], raw['v1'] = bn_params(width)
    raw['w2'], raw['bc2'] = nrm((width, width // groups, 3, 3)), nrm((width,))
    raw['g2'], raw['be2'], raw['m2'], raw['v2'] = bn_params(width)
    raw['w3'], raw['bc3'] = nrm((out_dim, width, 1, 1)), nrm((out_dim,))
    raw['g3'], raw['be3'], raw['m3'], raw['v3'] = bn_params(out_dim)
    raw['wid'], raw['bcid'] = nrm((out_dim, in_dim, 1, 1)), nrm((out_dim,))
    raw['gid'], raw['beid'], raw['mid_'], raw['vid'] = bn_params(out_dim)
    return raw


# ---------------------------------- main ------------------------------------

if __name__ == "__main__":
    key = jax.random.PRNGKey(0)
    kx, kp = jax.random.split(key)

    # ResNeXt50 first bottleneck: in=64, mid=64 (-> width=128, groups=32), out=256
    in_dim, mid_dim, out_dim = 64, 64, 256
    x = jax.random.normal(kx, (2, in_dim, 8, 8), jnp.float32)
    raw = init_params(kp, in_dim, mid_dim, out_dim)

    fwd = jax.jit(functools.partial(bottleneck_forward,
                                    groups=32, down=False, starting=True))
    out = jax.block_until_ready(fwd(x, raw))

    ref = ref_forward(x, raw, down=False, starting=True)
    assert out.shape == ref.shape == (2, out_dim, 8, 8), (out.shape, ref.shape)
    err = float(jnp.max(jnp.abs(out - ref)))
    scale = float(jnp.max(jnp.abs(ref)))
    tol = 5e-2 * max(1.0, scale)          # relative-style tolerance (bf16 MXU inputs)
    assert err < tol, f"max abs err {err} (tol {tol})"

    print("KERNEL_OK")
</pallas_src>

<mosaic_0001>
module attributes {stable_mosaic.version = 11 : i64} {
  func.func @_mm_bn_kernel(%arg0: i32, %arg1: i32, %arg2: memref<128x64xbf16, #tpu.memory_space<vmem>>, %arg3: memref<64x128xbf16, #tpu.memory_space<vmem>>, %arg4: memref<2x128xf32, #tpu.memory_space<vmem>>, %arg5: memref<128x128xbf16, #tpu.memory_space<vmem>>) attributes {dimension_semantics = [#tpu.dimension_semantics<parallel>, #tpu.dimension_semantics<parallel>], iteration_bounds = array<i64: 1, 1>, scalar_prefetch = 0 : i64, scratch_operands = 0 : i64, tpu.core_type = #tpu.core_type<tc>, window_params = [{transform_indices = @transform_0, window_bounds = array<i64: 128, 64>}, {transform_indices = @transform_1, window_bounds = array<i64: 64, 128>}, {transform_indices = @transform_2, window_bounds = array<i64: 2, 128>}, {transform_indices = @transform_3, window_bounds = array<i64: 128, 128>}]} {
    %c0 = arith.constant 0 : index
    %c0_0 = arith.constant 0 : index
    %0 = vector.load %arg2[%c0, %c0_0] : memref<128x64xbf16, #tpu.memory_space<vmem>>, vector<128x64xbf16>
    %c0_1 = arith.constant 0 : index
    %c0_2 = arith.constant 0 : index
    %1 = vector.load %arg3[%c0_1, %c0_2] : memref<64x128xbf16, #tpu.memory_space<vmem>>, vector<64x128xbf16>
    %cst = arith.constant dense<0.000000e+00> : vector<128x128xf32>
    %2 = tpu.matmul %0, %1, %cst {dimension_numbers = #tpu.dot_dimension_numbers<[1], [0], [0], [1], [0, 0, 1, 1], [], []>} : vector<128x64xbf16>, vector<64x128xbf16>, vector<128x128xf32> -> vector<128x128xf32>
    %c0_3 = arith.constant 0 : index
    %c0_4 = arith.constant 0 : index
    %3 = vector.load %arg4[%c0_3, %c0_4] : memref<2x128xf32, #tpu.memory_space<vmem>>, vector<1x128xf32>
    %4 = vector.broadcast %3 : vector<1x128xf32> to vector<128x128xf32>
    %5 = arith.mulf %2, %4 : vector<128x128xf32>
    %c1 = arith.constant 1 : index
    %c0_5 = arith.constant 0 : index
    %6 = vector.load %arg4[%c1, %c0_5] : memref<2x128xf32, #tpu.memory_space<vmem>>, vector<1x128xf32>
    %7 = vector.broadcast %6 : vector<1x128xf32> to vector<128x128xf32>
    %8 = arith.addf %5, %7 : vector<128x128xf32>
    %cst_6 = arith.constant 0.000000e+00 : f32
    %9 = vector.broadcast %cst_6 : f32 to vector<128x128xf32>
    %10 = arith.maximumf %8, %9 : vector<128x128xf32>
    %11 = arith.truncf %10 : vector<128x128xf32> to vector<128x128xbf16>
    %c0_7 = arith.constant 0 : index
    %c0_8 = arith.constant 0 : index
    %12 = vector.load %arg5[%c0_7, %c0_8] : memref<128x128xbf16, #tpu.memory_space<vmem>>, vector<128x128xbf16>
    tpu.vector_store %arg5[%c0_7, %c0_8], %11 {strides = array<i32>} : memref<128x128xbf16, #tpu.memory_space<vmem>>, vector<128x128xbf16>,
    return
  }
  func.func @transform_0(%arg0: i32, %arg1: i32) -> (i32, i32) {
    %c0_i32 = arith.constant 0 : i32
    %c0_i32_0 = arith.constant 0 : i32
    return %arg0, %c0_i32 : i32, i32
  }
  func.func @transform_1(%arg0: i32, %arg1: i32) -> (i32, i32) {
    %c0_i32 = arith.constant 0 : i32
    %c0_i32_0 = arith.constant 0 : i32
    return %c0_i32, %arg1 : i32, i32
  }
  func.func @transform_2(%arg0: i32, %arg1: i32) -> (i32, i32) {
    %c0_i32 = arith.constant 0 : i32
    %c0_i32_0 = arith.constant 0 : i32
    return %c0_i32, %arg1 : i32, i32
  }
  func.func @transform_3(%arg0: i32, %arg1: i32) -> (i32, i32) {
    %c0_i32 = arith.constant 0 : i32
    return %arg0, %arg1 : i32, i32
  }
}

module attributes {stable_mosaic.version = 11 : i64} {
  func.func @_conv3x3_kernel(%arg0: i32, %arg1: i32, %arg2: memref<1x110x128xbf16, #tpu.memory_space<vmem>>, %arg3: memref<9x128x128xbf16, #tpu.memory_space<vmem>>, %arg4: memref<2x128xf32, #tpu.memory_space<vmem>>, %arg5: memref<1x80x128xbf16, #tpu.memory_space<vmem>>) attributes {dimension_semantics = [#tpu.dimension_semantics<parallel>, #tpu.dimension_semantics<parallel>], iteration_bounds = array<i64: 2, 1>, scalar_prefetch = 0 : i64, scratch_operands = 0 : i64, tpu.core_type = #tpu.core_type<tc>, window_params = [{transform_indices = @transform_0, window_bounds = array<i64: 1, 110, 128>}, {transform_indices = @transform_1, window_bounds = array<i64: 9, 128, 128>}, {transform_indices = @transform_2, window_bounds = array<i64: 2, 128>}, {transform_indices = @transform_3, window_bounds = array<i64: 1, 80, 128>}]} {
    %cst = arith.constant 0.000000e+00 : f32
    %0 = vector.broadcast %cst : f32 to vector<80x128xf32>
    %c0 = arith.constant 0 : index
    %c0_0 = arith.constant 0 : index
    %c0_1 = arith.constant 0 : index
    %1 = vector.load %arg2[%c0, %c0_0, %c0_1] : memref<1x110x128xbf16, #tpu.memory_space<vmem>>, vector<1x80x128xbf16>
    %2 = vector.shape_cast %1 : vector<1x80x128xbf16> to vector<80x128xbf16>
    %c0_2 = arith.constant 0 : index
    %c0_3 = arith.constant 0 : index
    %c0_4 = arith.constant 0 : index
    %3 = vector.load %arg3[%c0_2, %c0_3, %c0_4] : memref<9x128x128xbf16, #tpu.memory_space<vmem>>, vector<1x128x128xbf16>
    %4 = vector.shape_cast %3 : vector<1x128x128xbf16> to vector<128x128xbf16>
    %cst_5 = arith.constant dense<0.000000e+00> : vector<80x128xf32>
    %5 = tpu.matmul %2, %4, %cst_5 {dimension_numbers = #tpu.dot_dimension_numbers<[1], [0], [0], [1], [0, 0, 1, 1], [], []>} : vector<80x128xbf16>, vector<128x128xbf16>, vector<80x128xf32> -> vector<80x128xf32>
    %6 = arith.addf %0, %5 : vector<80x128xf32>
    %c0_6 = arith.constant 0 : index
    %c1 = arith.constant 1 : index
    %c0_7 = arith.constant 0 : index
    %7 = vector.load %arg2[%c0_6, %c1, %c0_7] : memref<1x110x128xbf16, #tpu.memory_space<vmem>>, vector<1x80x128xbf16>
    %8 = vector.shape_cast %7 : vector<1x80x128xbf16> to vector<80x128xbf16>
    %c1_8 = arith.constant 1 : index
    %c0_9 = arith.constant 0 : index
    %c0_10 = arith.constant 0 : index
    %9 = vector.load %arg3[%c1_8, %c0_9, %c0_10] : memref<9x128x128xbf16, #tpu.memory_space<vmem>>, vector<1x128x128xbf16>
    %10 = vector.shape_cast %9 : vector<1x128x128xbf16> to vector<128x128xbf16>
    %cst_11 = arith.constant dense<0.000000e+00> : vector<80x128xf32>
    %11 = tpu.matmul %8, %10, %cst_11 {dimension_numbers = #tpu.dot_dimension_numbers<[1], [0], [0], [1], [0, 0, 1, 1], [], []>} : vector<80x128xbf16>, vector<128x128xbf16>, vector<80x128xf32> -> vector<80x128xf32>
    %12 = arith.addf %6, %11 : vector<80x128xf32>
    %c0_12 = arith.constant 0 : index
    %c2 = arith.constant 2 : index
    %c0_13 = arith.constant 0 : index
    %13 = vector.load %arg2[%c0_12, %c2, %c0_13] : memref<1x110x128xbf16, #tpu.memory_space<vmem>>, vector<1x80x128xbf16>
    %14 = vector.shape_cast %13 : vector<1x80x128xbf16> to vector<80x128xbf16>
    %c2_14 = arith.constant 2 : index
    %c0_15 = arith.constant 0 : index
    %c0_16 = arith.constant 0 : index
    %15 = vector.load %arg3[%c2_14, %c0_15, %c0_16] : memref<9x128x128xbf16, #tpu.memory_space<vmem>>, vector<1x128x128xbf16>
    %16 = vector.shape_cast %15 : vector<1x128x128xbf16> to vector<128x128xbf16>
    %cst_17 = arith.constant dense<0.000000e+00> : vector<80x128xf32>
    %17 = tpu.matmul %14, %16, %cst_17 {dimension_numbers = #tpu.dot_dimension_numbers<[1], [0], [0], [1], [0, 0, 1, 1], [], []>} : vector<80x128xbf16>, vector<128x128xbf16>, vector<80x128xf32> -> vector<80x128xf32>
    %18 = arith.addf %12, %17 : vector<80x128xf32>
    %c0_18 = arith.constant 0 : index
    %c10 = arith.constant 10 : index
    %c0_19 = arith.constant 0 : index
    %19 = vector.load %arg2[%c0_18, %c10, %c0_19] : memref<1x110x128xbf16, #tpu.memory_space<vmem>>, vector<1x80x128xbf16>
    %20 = vector.shape_cast %19 : vector<1x80x128xbf16> to vector<80x128xbf16>
    %c3 = arith.constant 3 : index
    %c0_20 = arith.constant 0 : index
    %c0_21 = arith.constant 0 : index
    %21 = vector.load %arg3[%c3, %c0_20, %c0_21] : memref<9x128x128xbf16, #tpu.memory_space<vmem>>, vector<1x128x128xbf16>
    %22 = vector.shape_cast %21 : vector<1x128x128xbf16> to vector<128x128xbf16>
    %cst_22 = arith.constant dense<0.000000e+00> : vector<80x128xf32>
    %23 = tpu.matmul %20, %22, %cst_22 {dimension_numbers = #tpu.dot_dimension_numbers<[1], [0], [0], [1], [0, 0, 1, 1], [], []>} : vector<80x128xbf16>, vector<128x128xbf16>, vector<80x128xf32> -> vector<80x128xf32>
    %24 = arith.addf %18, %23 : vector<80x128xf32>
    %c0_23 = arith.constant 0 : index
    %c11 = arith.constant 11 : index
    %c0_24 = arith.constant 0 : index
    %25 = vector.load %arg2[%c0_23, %c11, %c0_24] : memref<1x110x128xbf16, #tpu.memory_space<vmem>>, vector<1x80x128xbf16>
    %26 = vector.shape_cast %25 : vector<1x80x128xbf16> to vector<80x128xbf16>
    %c4 = arith.constant 4 : index
    %c0_25 = arith.constant 0 : index
    %c0_26 = arith.constant 0 : index
    %27 = vector.load %arg3[%c4, %c0_25, %c0_26] : memref<9x128x128xbf16, #tpu.memory_space<vmem>>, vector<1x128x128xbf16>
    %28 = vector.shape_cast %27 : vector<1x128x128xbf16> to vector<128x128xbf16>
    %cst_27 = arith.constant dense<0.000000e+00> : vector<80x128xf32>
    %29 = tpu.matmul %26, %28, %cst_27 {dimension_numbers = #tpu.dot_dimension_numbers<[1], [0], [0], [1], [0, 0, 1, 1], [], []>} : vector<80x128xbf16>, vector<128x128xbf16>, vector<80x128xf32> -> vector<80x128xf32>
    %30 = arith.addf %24, %29 : vector<80x128xf32>
    %c0_28 = arith.constant 0 : index
    %c12 = arith.constant 12 : index
    %c0_29 = arith.constant 0 : index
    %31 = vector.load %arg2[%c0_28, %c12, %c0_29] : memref<1x110x128xbf16, #tpu.memory_space<vmem>>, vector<1x80x128xbf16>
    %32 = vector.shape_cast %31 : vector<1x80x128xbf16> to vector<80x128xbf16>
    %c5 = arith.constant 5 : index
    %c0_30 = arith.constant 0 : index
    %c0_31 = arith.constant 0 : index
    %33 = vector.load %arg3[%c5, %c0_30, %c0_31] : memref<9x128x128xbf16, #tpu.memory_space<vmem>>, vector<1x128x128xbf16>
    %34 = vector.shape_cast %33 : vector<1x128x128xbf16> to vector<128x128xbf16>
    %cst_32 = arith.constant dense<0.000000e+00> : vector<80x128xf32>
    %35 = tpu.matmul %32, %34, %cst_32 {dimension_numbers = #tpu.dot_dimension_numbers<[1], [0], [0], [1], [0, 0, 1, 1], [], []>} : vector<80x128xbf16>, vector<128x128xbf16>, vector<80x128xf32> -> vector<80x128xf32>
    %36 = arith.addf %30, %35 : vector<80x128xf32>
    %c0_33 = arith.constant 0 : index
    %c20 = arith.constant 20 : index
    %c0_34 = arith.constant 0 : index
    %37 = vector.load %arg2[%c0_33, %c20, %c0_34] : memref<1x110x128xbf16, #tpu.memory_space<vmem>>, vector<1x80x128xbf16>
    %38 = vector.shape_cast %37 : vector<1x80x128xbf16> to vector<80x128xbf16>
    %c6 = arith.constant 6 : index
    %c0_35 = arith.constant 0 : index
    %c0_36 = arith.constant 0 : index
    %39 = vector.load %arg3[%c6, %c0_35, %c0_36] : memref<9x128x128xbf16, #tpu.memory_space<vmem>>, vector<1x128x128xbf16>
    %40 = vector.shape_cast %39 : vector<1x128x128xbf16> to vector<128x128xbf16>
    %cst_37 = arith.constant dense<0.000000e+00> : vector<80x128xf32>
    %41 = tpu.matmul %38, %40, %cst_37 {dimension_numbers = #tpu.dot_dimension_numbers<[1], [0], [0], [1], [0, 0, 1, 1], [], []>} : vector<80x128xbf16>, vector<128x128xbf16>, vector<80x128xf32> -> vector<80x128xf32>
    %42 = arith.addf %36, %41 : vector<80x128xf32>
    %c0_38 = arith.constant 0 : index
    %c21 = arith.constant 21 : index
    %c0_39 = arith.constant 0 : index
    %43 = vector.load %arg2[%c0_38, %c21, %c0_39] : memref<1x110x128xbf16, #tpu.memory_space<vmem>>, vector<1x80x128xbf16>
    %44 = vector.shape_cast %43 : vector<1x80x128xbf16> to vector<80x128xbf16>
    %c7 = arith.constant 7 : index
    %c0_40 = arith.constant 0 : index
    %c0_41 = arith.constant 0 : index
    %45 = vector.load %arg3[%c7, %c0_40, %c0_41] : memref<9x128x128xbf16, #tpu.memory_space<vmem>>, vector<1x128x128xbf16>
    %46 = vector.shape_cast %45 : vector<1x128x128xbf16> to vector<128x128xbf16>
    %cst_42 = arith.constant dense<0.000000e+00> : vector<80x128xf32>
    %47 = tpu.matmul %44, %46, %cst_42 {dimension_numbers = #tpu.dot_dimension_numbers<[1], [0], [0], [1], [0, 0, 1, 1], [], []>} : vector<80x128xbf16>, vector<128x128xbf16>, vector<80x128xf32> -> vector<80x128xf32>
    %48 = arith.addf %42, %47 : vector<80x128xf32>
    %c0_43 = arith.constant 0 : index
    %c22 = arith.constant 22 : index
    %c0_44 = arith.constant 0 : index
    %49 = vector.load %arg2[%c0_43, %c22, %c0_44] : memref<1x110x128xbf16, #tpu.memory_space<vmem>>, vector<1x80x128xbf16>
    %50 = vector.shape_cast %49 : vector<1x80x128xbf16> to vector<80x128xbf16>
    %c8 = arith.constant 8 : index
    %c0_45 = arith.constant 0 : index
    %c0_46 = arith.constant 0 : index
    %51 = vector.load %arg3[%c8, %c0_45, %c0_46] : memref<9x128x128xbf16, #tpu.memory_space<vmem>>, vector<1x128x128xbf16>
    %52 = vector.shape_cast %51 : vector<1x128x128xbf16> to vector<128x128xbf16>
    %cst_47 = arith.constant dense<0.000000e+00> : vector<80x128xf32>
    %53 = tpu.matmul %50, %52, %cst_47 {dimension_numbers = #tpu.dot_dimension_numbers<[1], [0], [0], [1], [0, 0, 1, 1], [], []>} : vector<80x128xbf16>, vector<128x128xbf16>, vector<80x128xf32> -> vector<80x128xf32>
    %54 = arith.addf %48, %53 : vector<80x128xf32>
    %c0_48 = arith.constant 0 : index
    %c0_49 = arith.constant 0 : index
    %55 = vector.load %arg4[%c0_48, %c0_49] : memref<2x128xf32, #tpu.memory_space<vmem>>, vector<1x128xf32>
    %56 = vector.broadcast %55 : vector<1x128xf32> to vector<80x128xf32>
    %57 = arith.mulf %54, %56 : vector<80x128xf32>
    %c1_50 = arith.constant 1 : index
    %c0_51 = arith.constant 0 : index
    %58 = vector.load %arg4[%c1_50, %c0_51] : memref<2x128xf32, #tpu.memory_space<vmem>>, vector<1x128xf32>
    %59 = vector.broadcast %58 : vector<1x128xf32> to vector<80x128xf32>
    %60 = arith.addf %57, %59 : vector<80x128xf32>
    %cst_52 = arith.constant 0.000000e+00 : f32
    %61 = vector.broadcast %cst_52 : f32 to vector<80x128xf32>
    %62 = arith.maximumf %60, %61 : vector<80x128xf32>
    %63 = arith.truncf %62 : vector<80x128xf32> to vector<80x128xbf16>
    %c0_53 = arith.constant 0 : index
    %c0_54 = arith.constant 0 : index
    %c0_55 = arith.constant 0 : index
    %64 = vector.load %arg5[%c0_53, %c0_54, %c0_55] : memref<1x80x128xbf16, #tpu.memory_space<vmem>>, vector<1x80x128xbf16>
    %65 = vector.shape_cast %64 : vector<1x80x128xbf16> to vector<80x128xbf16>
    %66 = vector.shape_cast %63 : vector<80x128xbf16> to vector<1x80x128xbf16>
    tpu.vector_store %arg5[%c0_53, %c0_54, %c0_55], %66 {strides = array<i32>} : memref<1x80x128xbf16, #tpu.memory_space<vmem>>, vector<1x80x128xbf16>,
    return
  }
  func.func @transform_0(%arg0: i32, %arg1: i32) -> (i32, i32, i32) {
    %c0_i32 = arith.constant 0 : i32
    %c0_i32_0 = arith.constant 0 : i32
    %c0_i32_1 = arith.constant 0 : i32
    return %arg0, %c0_i32, %c0_i32_0 : i32, i32, i32
  }
  func.func @transform_1(%arg0: i32, %arg1: i32) -> (i32, i32, i32) {
    %c0_i32 = arith.constant 0 : i32
    %c0_i32_0 = arith.constant 0 : i32
    %c0_i32_1 = arith.constant 0 : i32
    return %c0_i32, %c0_i32_0, %arg1 : i32, i32, i32
  }
  func.func @transform_2(%arg0: i32, %arg1: i32) -> (i32, i32) {
    %c0_i32 = arith.constant 0 : i32
    %c0_i32_0 = arith.constant 0 : i32
    return %c0_i32, %arg1 : i32, i32
  }
  func.func @transform_3(%arg0: i32, %arg1: i32) -> (i32, i32, i32) {
    %c0_i32 = arith.constant 0 : i32
    %c0_i32_0 = arith.constant 0 : i32
    return %arg0, %c0_i32, %arg1 : i32, i32, i32
  }
}

module attributes {stable_mosaic.version = 11 : i64} {
  func.func @_mm_residual_kernel(%arg0: i32, %arg1: i32, %arg2: memref<128x128xbf16, #tpu.memory_space<vmem>>, %arg3: memref<128x256xbf16, #tpu.memory_space<vmem>>, %arg4: memref<128x64xbf16, #tpu.memory_space<vmem>>, %arg5: memref<64x256xbf16, #tpu.memory_space<vmem>>, %arg6: memref<4x256xf32, #tpu.memory_space<vmem>>, %arg7: memref<128x256xf32, #tpu.memory_space<vmem>>) attributes {dimension_semantics = [#tpu.dimension_semantics<parallel>, #tpu.dimension_semantics<parallel>], iteration_bounds = array<i64: 1, 1>, scalar_prefetch = 0 : i64, scratch_operands = 0 : i64, tpu.core_type = #tpu.core_type<tc>, window_params = [{transform_indices = @transform_0, window_bounds = array<i64: 128, 128>}, {transform_indices = @transform_1, window_bounds = array<i64: 128, 256>}, {transform_indices = @transform_2, window_bounds = array<i64: 128, 64>}, {transform_indices = @transform_3, window_bounds = array<i64: 64, 256>}, {transform_indices = @transform_4, window_bounds = array<i64: 4, 256>}, {transform_indices = @transform_5, window_bounds = array<i64: 128, 256>}]} {
    %c0 = arith.constant 0 : index
    %c0_0 = arith.constant 0 : index
    %0 = vector.load %arg2[%c0, %c0_0] : memref<128x128xbf16, #tpu.memory_space<vmem>>, vector<128x128xbf16>
    %c0_1 = arith.constant 0 : index
    %c0_2 = arith.constant 0 : index
    %1 = vector.load %arg3[%c0_1, %c0_2] : memref<128x256xbf16, #tpu.memory_space<vmem>>, vector<128x256xbf16>
    %cst = arith.constant dense<0.000000e+00> : vector<128x256xf32>
    %2 = tpu.matmul %0, %1, %cst {dimension_numbers = #tpu.dot_dimension_numbers<[1], [0], [0], [1], [0, 0, 1, 1], [], []>} : vector<128x128xbf16>, vector<128x256xbf16>, vector<128x256xf32> -> vector<128x256xf32>
    %c0_3 = arith.constant 0 : index
    %c0_4 = arith.constant 0 : index
    %3 = vector.load %arg4[%c0_3, %c0_4] : memref<128x64xbf16, #tpu.memory_space<vmem>>, vector<128x64xbf16>
    %c0_5 = arith.constant 0 : index
    %c0_6 = arith.constant 0 : index
    %4 = vector.load %arg5[%c0_5, %c0_6] : memref<64x256xbf16, #tpu.memory_space<vmem>>, vector<64x256xbf16>
    %cst_7 = arith.constant dense<0.000000e+00> : vector<128x256xf32>
    %5 = tpu.matmul %3, %4, %cst_7 {dimension_numbers = #tpu.dot_dimension_numbers<[1], [0], [0], [1], [0, 0, 1, 1], [], []>} : vector<128x64xbf16>, vector<64x256xbf16>, vector<128x256xf32> -> vector<128x256xf32>
    %c0_8 = arith.constant 0 : index
    %c0_9 = arith.constant 0 : index
    %6 = vector.load %arg6[%c0_8, %c0_9] : memref<4x256xf32, #tpu.memory_space<vmem>>, vector<1x256xf32>
    %7 = vector.broadcast %6 : vector<1x256xf32> to vector<128x256xf32>
    %8 = arith.mulf %2, %7 : vector<128x256xf32>
    %c1 = arith.constant 1 : index
    %c0_10 = arith.constant 0 : index
    %9 = vector.load %arg6[%c1, %c0_10] : memref<4x256xf32, #tpu.memory_space<vmem>>, vector<1x256xf32>
    %10 = vector.broadcast %9 : vector<1x256xf32> to vector<128x256xf32>
    %11 = arith.addf %8, %10 : vector<128x256xf32>
    %c2 = arith.constant 2 : index
    %c0_11 = arith.constant 0 : index
    %12 = vector.load %arg6[%c2, %c0_11] : memref<4x256xf32, #tpu.memory_space<vmem>>, vector<1x256xf32>
    %13 = vector.broadcast %12 : vector<1x256xf32> to vector<128x256xf32>
    %14 = arith.mulf %5, %13 : vector<128x256xf32>
    %15 = arith.addf %11, %14 : vector<128x256xf32>
    %c3 = arith.constant 3 : index
    %c0_12 = arith.constant 0 : index
    %16 = vector.load %arg6[%c3, %c0_12] : memref<4x256xf32, #tpu.memory_space<vmem>>, vector<1x256xf32>
    %17 = vector.broadcast %16 : vector<1x256xf32> to vector<128x256xf32>
    %18 = arith.addf %15, %17 : vector<128x256xf32>
    %cst_13 = arith.constant 0.000000e+00 : f32
    %19 = vector.broadcast %cst_13 : f32 to vector<128x256xf32>
    %20 = arith.maximumf %18, %19 : vector<128x256xf32>
    %c0_14 = arith.constant 0 : index
    %c0_15 = arith.constant 0 : index
    %21 = vector.load %arg7[%c0_14, %c0_15] : memref<128x256xf32, #tpu.memory_space<vmem>>, vector<128x256xf32>
    tpu.vector_store %arg7[%c0_14, %c0_15], %20 {strides = array<i32>} : memref<128x256xf32, #tpu.memory_space<vmem>>, vector<128x256xf32>,
    return
  }
  func.func @transform_0(%arg0: i32, %arg1: i32) -> (i32, i32) {
    %c0_i32 = arith.constant 0 : i32
    %c0_i32_0 = arith.constant 0 : i32
    return %arg0, %c0_i32 : i32, i32
  }
  func.func @transform_1(%arg0: i32, %arg1: i32) -> (i32, i32) {
    %c0_i32 = arith.constant 0 : i32
    %c0_i32_0 = arith.constant 0 : i32
    return %c0_i32, %arg1 : i32, i32
  }
  func.func @transform_2(%arg0: i32, %arg1: i32) -> (i32, i32) {
    %c0_i32 = arith.constant 0 : i32
    %c0_i32_0 = arith.constant 0 : i32
    return %arg0, %c0_i32 : i32, i32
  }
  func.func @transform_3(%arg0: i32, %arg1: i32) -> (i32, i32) {
    %c0_i32 = arith.constant 0 : i32
    %c0_i32_0 = arith.constant 0 : i32
    return %c0_i32, %arg1 : i32, i32
  }
  func.func @transform_4(%arg0: i32, %arg1: i32) -> (i32, i32) {
    %c0_i32 = arith.constant 0 : i32
    %c0_i32_0 = arith.constant 0 : i32
    return %c0_i32, %arg1 : i32, i32
  }
  func.func @transform_5(%arg0: i32, %arg1: i32) -> (i32, i32) {
    %c0_i32 = arith.constant 0 : i32
    return %arg0, %arg1 : i32, i32
  }
}

</mosaic_0001>

<llo_original>
// kernel: bottleneck_forward.3
$region0: #{bottleneck_forward.3}
  #allocation0 [shape = 'u32[]', space=smem, size = 0x4, offset = 0x4, fixed_abs, tag = 'smem constant byte address 0x4 - core index']
  #allocation1 [shape = 'u32[144,128]{1,0:T(1,128)}', space=vmem, size = 0x12000, scoped, tag = 'internal scratch']
  %s0 = inlined_call_operand.vmem [shape: bf16[128,64], index: 0, kind: input, shape index: {}]
  %s1 = inlined_call_operand.vmem [shape: bf16[64,128], index: 1, kind: input, shape index: {}]
  %s2 = inlined_call_operand.vmem [shape: f32[2,128], index: 2, kind: input, shape index: {}]
  %s3 = inlined_call_operand.vmem [shape: bf16[128,128], index: 3, kind: output, shape index: {}]
  %s4 = sld [smem:[#allocation0]]
  $region22: #{bottleneck_forward.3} parent=0
    _
  %s6 = ssub.s32 1, %s4
  %s7 = scalar_select 0, %s6, %s4
  // Predicated region
  $region2: #{bottleneck_forward.3} parent=0 // pred_check
    _
  $region3: #{bottleneck_forward.3} parent=0 // pred_check_branch
    %9 = sbr.rel (0) target = $region5
  $region4: #{bottleneck_forward.3} parent=0 // pred_region
    _
  $region5: #{bottleneck_forward.3} parent=0 // pred_fallthru
    _
  // Predicated region
  $region6: #{bottleneck_forward.3} parent=0 // pred_check
    _
  $region7: #{bottleneck_forward.3} parent=0 // pred_check_branch
    %11 = sbr.rel (0) target = $region9
  $region8: #{bottleneck_forward.3} parent=0 // pred_region
    _
  $region9: #{bottleneck_forward.3} parent=0 // pred_fallthru
    _
  // Predicated region
  $region10: #{bottleneck_forward.3} parent=0 // pred_check
    _
  $region11: #{bottleneck_forward.3} parent=0 // pred_check_branch
    %13 = sbr.rel (0) target = $region13
  $region12: #{bottleneck_forward.3} parent=0 // pred_region
    _
  $region13: #{bottleneck_forward.3} parent=0 // pred_fallthru
    _
  %v15 = vld [vmem:[%s0] sm:$0xf]
  %v16 = vld [vmem:[%s0 + $0x4] sm:$0xf]
  %v17 = vld [vmem:[%s0 + $0x8] sm:$0xf]
  %v18 = vld [vmem:[%s0 + $0xc] sm:$0xf]
  %v19 = vld [vmem:[%s0 + $0x10] sm:$0xf]
  %v20 = vld [vmem:[%s0 + $0x14] sm:$0xf]
  %v21 = vld [vmem:[%s0 + $0x18] sm:$0xf]
  %v22 = vld [vmem:[%s0 + $0x1c] sm:$0xf]
  %v23 = vld [vmem:[%s0 + $0x20] sm:$0xf]
  %v24 = vld [vmem:[%s0 + $0x24] sm:$0xf]
  %v25 = vld [vmem:[%s0 + $0x28] sm:$0xf]
  %v26 = vld [vmem:[%s0 + $0x2c] sm:$0xf]
  %v27 = vld [vmem:[%s0 + $0x30] sm:$0xf]
  %v28 = vld [vmem:[%s0 + $0x34] sm:$0xf]
  %v29 = vld [vmem:[%s0 + $0x38] sm:$0xf]
  %v30 = vld [vmem:[%s0 + $0x3c] sm:$0xf]
  %v31 = vld [vmem:[%s1] sm:$0xf]
  %v32 = vld [vmem:[%s1 + $0x4] sm:$0xf]
  %v33 = vld [vmem:[%s1 + $0x8] sm:$0xf]
  %v34 = vld [vmem:[%s1 + $0xc] sm:$0xf]
  %v35 = vld [vmem:[%s1 + $0x10] sm:$0xf]
  %v36 = vld [vmem:[%s1 + $0x14] sm:$0xf]
  %v37 = vld [vmem:[%s1 + $0x18] sm:$0xf]
  %v38 = vld [vmem:[%s1 + $0x1c] sm:$0xf]
  %v55 = vunpack.c.l.b16 %v15
  %v56 = vunpack.c.l.b16 %v16
  %v57 = vunpack.c.l.b16 %v17
  %v58 = vunpack.c.l.b16 %v18
  %v59 = vunpack.c.l.b16 %v19
  %v60 = vunpack.c.l.b16 %v20
  %v61 = vunpack.c.l.b16 %v21
  %v62 = vunpack.c.l.b16 %v22
  %v63 = vunpack.c.l.b16 %v23
  %v64 = vunpack.c.l.b16 %v24
  %v65 = vunpack.c.l.b16 %v25
  %v66 = vunpack.c.l.b16 %v26
  %v67 = vunpack.c.l.b16 %v27
  %v68 = vunpack.c.l.b16 %v28
  %v69 = vunpack.c.l.b16 %v29
  %v70 = vunpack.c.l.b16 %v30
  %v71 = vpack.c.b16 %v56, %v55
  %v72 = vpack.c.b16 %v58, %v57
  %v73 = vpack.c.b16 %v60, %v59
  %v74 = vpack.c.b16 %v62, %v61
  %v75 = vpack.c.b16 %v64, %v63
  %v76 = vpack.c.b16 %v66, %v65
  %v77 = vpack.c.b16 %v68, %v67
  %v78 = vpack.c.b16 %v70, %v69
  %v87 = vunpack.c.l.b16 %v31
  %v88 = vunpack.c.l.b16 %v32
  %v89 = vunpack.c.l.b16 %v33
  %v90 = vunpack.c.l.b16 %v34
  %v91 = vunpack.c.l.b16 %v35
  %v92 = vunpack.c.l.b16 %v36
  %v93 = vunpack.c.l.b16 %v37
  %v94 = vunpack.c.l.b16 %v38
  %v95 = vpack.c.b16 %v88, %v87
  %v96 = vpack.c.b16 %v90, %v89
  %v97 = vpack.c.b16 %v92, %v91
  %v98 = vpack.c.b16 %v94, %v93
  %vm103 = vcmask 523264
  %v105 = vsel %vm103, %v71, 0
  %v108 = vsel %vm103, %v72, 0
  %v111 = vsel %vm103, %v73, 0
  %v114 = vsel %vm103, %v74, 0
  %v117 = vsel %vm103, %v75, 0
  %v120 = vsel %vm103, %v76, 0
  %v123 = vsel %vm103, %v77, 0
  %v126 = vsel %vm103, %v78, 0
  %128 = vmatprep.subr.bf16.mxu0 0
  %129 = vmatpush1.bf16.msra.mxu0 %v95
  %130 = vmatprep.subr.bf16.mxu0 0
  %131 = vmatpush1.bf16.msra.mxu0 %v96
  %132 = vmatprep.subr.bf16.mxu0 0
  %133 = vmatpush1.bf16.msra.mxu0 %v97
  %134 = vmatprep.subr.bf16.mxu0 0
  %135 = vmatpush1.bf16.msra.mxu0 %v98
  %136 = vmatprep.subr.bf16.mxu0 0
  %137 = vmatpush1.bf16.msra.mxu0 0
  %138 = vmatprep.subr.bf16.mxu0 0
  %139 = vmatpush1.bf16.msra.mxu0 0
  %140 = vmatprep.subr.bf16.mxu0 0
  %141 = vmatpush1.bf16.msra.mxu0 0
  %142 = vmatprep.subr.bf16.mxu0 0
  %143 = vmatpush1.bf16.msra.mxu0 0
  %144 = vmatprep.subr.bf16.mxu0 0
  %145 = vmatpush1.bf16.msra.mxu0 0
  %146 = vmatprep.subr.bf16.mxu0 0
  %147 = vmatpush1.bf16.msra.mxu0 0
  %148 = vmatprep.subr.bf16.mxu0 0
  %149 = vmatpush1.bf16.msra.mxu0 0
  %150 = vmatprep.subr.bf16.mxu0 0
  %151 = vmatpush1.bf16.msra.mxu0 0
  %152 = vmatprep.subr.bf16.mxu0 0
  %153 = vmatpush1.bf16.msra.mxu0 0
  %154 = vmatprep.subr.bf16.mxu0 0
  %155 = vmatpush1.bf16.msra.mxu0 0
  %156 = vmatprep.subr.bf16.mxu0 0
  %157 = vmatpush1.bf16.msra.mxu0 0
  %158 = vmatprep.subr.bf16.mxu0 0
  %159 = vmatpush1.bf16.msra.mxu0 0
  %160 = vmatprep.mubr.bf16.mxu0 0
  %161 = vmatmul.mubr.bf16.gmra.mrb[0].mxu0 %v105
  %v162 = vpop.f32.mrb[0].mxu0
  %v163 = vadd.f32 0.0, %v162
  %v164 = vpop.f32.mrb[0].mxu0
  %v165 = vpop.f32.mrb[0].mxu0
  %v166 = vadd.f32 0.0, %v165
  %v167 = vpop.f32.mrb[0].mxu0
  %168 = vmatprep.mubr.bf16.mxu0 0
  %169 = vmatmul.mubr.bf16.gmra.mrb[0].mxu0 %v108
  %v170 = vpop.f32.mrb[0].mxu0
  %v171 = vadd.f32 0.0, %v170
  %v172 = vpop.f32.mrb[0].mxu0
  %v173 = vpop.f32.mrb[0].mxu0
  %v174 = vadd.f32 0.0, %v173
  %v175 = vpop.f32.mrb[0].mxu0
  %176 = vmatprep.mubr.bf16.mxu0 0
  %177 = vmatmul.mubr.bf16.gmra.mrb[0].mxu0 %v111
  %v178 = vpop.f32.mrb[0].mxu0
  %v179 = vadd.f32 0.0, %v178
  %v180 = vpop.f32.mrb[0].mxu0
  %v181 = vpop.f32.mrb[0].mxu0
  %v182 = vadd.f32 0.0, %v181
  %v183 = vpop.f32.mrb[0].mxu0
  %184 = vmatprep.mubr.bf16.mxu0 0
  %185 = vmatmul.mubr.bf16.gmra.mrb[0].mxu0 %v114
  %v186 = vpop.f32.mrb[0].mxu0
  %v187 = vadd.f32 0.0, %v186
  %v188 = vpop.f32.mrb[0].mxu0
  %v189 = vpop.f32.mrb[0].mxu0
  %v190 = vadd.f32 0.0, %v189
  %v191 = vpop.f32.mrb[0].mxu0
  %192 = vmatprep.mubr.bf16.mxu0 0
  %193 = vmatmul.mubr.bf16.gmra.mrb[0].mxu0 %v117
  %v194 = vpop.f32.mrb[0].mxu0
  %v195 = vadd.f32 0.0, %v194
  %v196 = vpop.f32.mrb[0].mxu0
  %v197 = vpop.f32.mrb[0].mxu0
  %v198 = vadd.f32 0.0, %v197
  %v199 = vpop.f32.mrb[0].mxu0
  %200 = vmatprep.mubr.bf16.mxu0 0
  %201 = vmatmul.mubr.bf16.gmra.mrb[0].mxu0 %v120
  %v202 = vpop.f32.mrb[0].mxu0
  %v203 = vadd.f32 0.0, %v202
  %v204 = vpop.f32.mrb[0].mxu0
  %v205 = vpop.f32.mrb[0].mxu0
  %v206 = vadd.f32 0.0, %v205
  %v207 = vpop.f32.mrb[0].mxu0
  %208 = vmatprep.mubr.bf16.mxu0 0
  %209 = vmatmul.mubr.bf16.gmra.mrb[0].mxu0 %v123
  %v210 = vpop.f32.mrb[0].mxu0
  %v211 = vadd.f32 0.0, %v210
  %v212 = vpop.f32.mrb[0].mxu0
  %v213 = vpop.f32.mrb[0].mxu0
  %v214 = vadd.f32 0.0, %v213
  %v215 = vpop.f32.mrb[0].mxu0
  %216 = vmatprep.mubr.bf16.mxu0 0
  %217 = vmatmul.mubr.bf16.gmra.mrb[0].mxu0 %v126
  %v218 = vpop.f32.mrb[0].mxu0
  %v219 = vadd.f32 0.0, %v218
  %v220 = vpop.f32.mrb[0].mxu0
  %v221 = vpop.f32.mrb[0].mxu0
  %v222 = vadd.f32 0.0, %v221
  %v223 = vpop.f32.mrb[0].mxu0
  %224 = vdwg.mxu0
  %v225 = vld [vmem:[%s2] sm:$0x1]
  %v226 = vlaneseq
  %v227 = vshrl.u32 %v226, 7
  %v228 = vsub.s32 0, %v227
  %v229 = vrot.slane %v225, %v228
  %v230 = vmul.f32 %v163, %v229
  %v231 = vmul.f32 %v166, %v229
  %v232 = vmul.f32 %v171, %v229
  %v233 = vmul.f32 %v174, %v229
  %v234 = vmul.f32 %v179, %v229
  %v235 = vmul.f32 %v182, %v229
  %v236 = vmul.f32 %v187, %v229
  %v237 = vmul.f32 %v190, %v229
  %v238 = vmul.f32 %v195, %v229
  %v239 = vmul.f32 %v198, %v229
  %v240 = vmul.f32 %v203, %v229
  %v241 = vmul.f32 %v206, %v229
  %v242 = vmul.f32 %v211, %v229
  %v243 = vmul.f32 %v214, %v229
  %v244 = vmul.f32 %v219, %v229
  %v245 = vmul.f32 %v222, %v229
  %v246 = vld [vmem:[%s2 + $0x1] sm:$0x1]
  %v247 = vlaneseq
  %v248 = vshrl.u32 %v247, 7
  %v249 = vsub.s32 0, %v248
  %v250 = vrot.slane %v246, %v249
  %v251 = vadd.f32 %v230, %v250
  %v252 = vadd.f32 %v231, %v250
  %v253 = vadd.f32 %v232, %v250
  %v254 = vadd.f32 %v233, %v250
  %v255 = vadd.f32 %v234, %v250
  %v256 = vadd.f32 %v235, %v250
  %v257 = vadd.f32 %v236, %v250
  %v258 = vadd.f32 %v237, %v250
  %v259 = vadd.f32 %v238, %v250
  %v260 = vadd.f32 %v239, %v250
  %v261 = vadd.f32 %v240, %v250
  %v262 = vadd.f32 %v241, %v250
  %v263 = vadd.f32 %v242, %v250
  %v264 = vadd.f32 %v243, %v250
  %v265 = vadd.f32 %v244, %v250
  %v266 = vadd.f32 %v245, %v250
  %v267 = vmax.f32 %v251, 0.0
  %v268 = vmax.f32 %v252, 0.0
  %v269 = vmax.f32 %v253, 0.0
  %v270 = vmax.f32 %v254, 0.0
  %v271 = vmax.f32 %v255, 0.0
  %v272 = vmax.f32 %v256, 0.0
  %v273 = vmax.f32 %v257, 0.0
  %v274 = vmax.f32 %v258, 0.0
  %v275 = vmax.f32 %v259, 0.0
  %v276 = vmax.f32 %v260, 0.0
  %v277 = vmax.f32 %v261, 0.0
  %v278 = vmax.f32 %v262, 0.0
  %v279 = vmax.f32 %v263, 0.0
  %v280 = vmax.f32 %v264, 0.0
  %v281 = vmax.f32 %v265, 0.0
  %v282 = vmax.f32 %v266, 0.0
  %v283 = vpack.c.bf16 %v268, %v267
  %v284 = vpack.c.bf16 %v270, %v269
  %v285 = vpack.c.bf16 %v272, %v271
  %v286 = vpack.c.bf16 %v274, %v273
  %v287 = vpack.c.bf16 %v276, %v275
  %v288 = vpack.c.bf16 %v278, %v277
  %v289 = vpack.c.bf16 %v280, %v279
  %v290 = vpack.c.bf16 %v282, %v281
  %v299 = vunpack.c.l.b16 %v283
  %v300 = vunpack.c.h.b16 %v283
  %v301 = vunpack.c.l.b16 %v284
  %v302 = vunpack.c.h.b16 %v284
  %v303 = vunpack.c.l.b16 %v285
  %v304 = vunpack.c.h.b16 %v285
  %v305 = vunpack.c.l.b16 %v286
  %v306 = vunpack.c.h.b16 %v286
  %v307 = vunpack.c.l.b16 %v287
  %v308 = vunpack.c.h.b16 %v287
  %v309 = vunpack.c.l.b16 %v288
  %v310 = vunpack.c.h.b16 %v288
  %v311 = vunpack.c.l.b16 %v289
  %v312 = vunpack.c.h.b16 %v289
  %v313 = vunpack.c.l.b16 %v290
  %v314 = vunpack.c.h.b16 %v290
  %v315 = vpack.c.b16 %v299, %v299
  %v316 = vpack.c.b16 %v300, %v300
  %v317 = vpack.c.b16 %v301, %v301
  %v318 = vpack.c.b16 %v302, %v302
  %v319 = vpack.c.b16 %v303, %v303
  %v320 = vpack.c.b16 %v304, %v304
  %v321 = vpack.c.b16 %v305, %v305
  %v322 = vpack.c.b16 %v306, %v306
  %v323 = vpack.c.b16 %v307, %v307
  %v324 = vpack.c.b16 %v308, %v308
  %v325 = vpack.c.b16 %v309, %v309
  %v326 = vpack.c.b16 %v310, %v310
  %v327 = vpack.c.b16 %v311, %v311
  %v328 = vpack.c.b16 %v312, %v312
  %v329 = vpack.c.b16 %v313, %v313
  %v330 = vpack.c.b16 %v314, %v314
  %347 = vst [vmem:[%s3] sm:$0xf] %v315
  %348 = vst [vmem:[%s3 + $0x4] sm:$0xf] %v316
  %349 = vst [vmem:[%s3 + $0x8] sm:$0xf] %v317
  %350 = vst [vmem:[%s3 + $0xc] sm:$0xf] %v318
  %351 = vst [vmem:[%s3 + $0x10] sm:$0xf] %v319
  %352 = vst [vmem:[%s3 + $0x14] sm:$0xf] %v320
  %353 = vst [vmem:[%s3 + $0x18] sm:$0xf] %v321
  %354 = vst [vmem:[%s3 + $0x1c] sm:$0xf] %v322
  %355 = vst [vmem:[%s3 + $0x20] sm:$0xf] %v323
  %356 = vst [vmem:[%s3 + $0x24] sm:$0xf] %v324
  %357 = vst [vmem:[%s3 + $0x28] sm:$0xf] %v325
  %358 = vst [vmem:[%s3 + $0x2c] sm:$0xf] %v326
  %359 = vst [vmem:[%s3 + $0x30] sm:$0xf] %v327
  %360 = vst [vmem:[%s3 + $0x34] sm:$0xf] %v328
  %361 = vst [vmem:[%s3 + $0x38] sm:$0xf] %v329
  %362 = vst [vmem:[%s3 + $0x3c] sm:$0xf] %v330
  // Predicated region
  $region14: #{bottleneck_forward.3} parent=0 // pred_check
    _
  $region15: #{bottleneck_forward.3} parent=0 // pred_check_branch
    %364 = sbr.rel (0) target = $region17
  $region16: #{bottleneck_forward.3} parent=0 // pred_region
    _
  $region17: #{bottleneck_forward.3} parent=0 // pred_fallthru
    _
  // Predicated region
  $region18: #{bottleneck_forward.3} parent=0 // pred_check
    _
  $region19: #{bottleneck_forward.3} parent=0 // pred_check_branch
    %366 = sbr.rel (0) target = $region21
  $region20: #{bottleneck_forward.3} parent=0 // pred_region
    _
  $region21: #{bottleneck_forward.3} parent=0 // pred_fallthru
    _

// kernel: bottleneck_forward.4
$region0: #{bottleneck_forward.4}
  #allocation0 [shape = 'u32[]', space=smem, size = 0x4, offset = 0x4, fixed_abs, tag = 'smem constant byte address 0x4 - core index']
  #allocation1 [shape = 'u32[144,128]{1,0:T(1,128)}', space=vmem, size = 0x12000, scoped, tag = 'internal scratch']
  %s0 = inlined_call_operand.vmem [shape: bf16[2,110,128], index: 0, kind: input, shape index: {}]
  %s1 = inlined_call_operand.vmem [shape: bf16[9,128,128], index: 1, kind: input, shape index: {}]
  %s2 = inlined_call_operand.vmem [shape: f32[2,128], index: 2, kind: input, shape index: {}]
  %s3 = inlined_call_operand.vmem [shape: bf16[2,80,128], index: 3, kind: output, shape index: {}]
  %s4 = sld [smem:[#allocation0]]
  $region45: #{bottleneck_forward.4} parent=0
    _
  %s6 = ssub.s32 1, %s4
  %s7 = scalar_select 0, %s6, %s4
  loop: start=0, step=1, limit=4
  $region2: #{bottleneck_forward.4} parent=0 // loop_pre_header
    _
  $region3: #{bottleneck_forward.4} parent=0 // loop_header
    %s9 = sphi 0, %s13
    %p10 = scmp.ge.s32.totalorder %s9, 4
    %s16 = sphi 0, %s28
    %s17 = sphi 0, %s24
    %s18 = sphi 0, %s16
    %s19 = sphi 0, %s17
    %s20 = sphi 0, %s18
    %s21 = sphi 0, %s19
    %s31 = sphi 0, %s33
    %s34 = sphi 0, %s31
    %s35 = sphi 0, %s34
    %s51 = sphi 0, %s35
    %s57 = sphi 0, %s59
    %s60 = sphi 0, %s57
    %s61 = sphi 0, %s60
    %s77 = sphi 0, %s61
    %s83 = sphi 0, %s85
    %s86 = sphi 0, %s83
    %s87 = sphi 0, %s86
    %s103 = sphi 0, %s87
    %s111 = sphi 0, %s113
    %s114 = sphi 0, %s111
    %s115 = sphi 0, %s114
    %s131 = sphi 0, %s115
  $region4: #{bottleneck_forward.4} parent=0 // loop_header_branch
    %12 = sbr.rel (%p10) target = $region8
  $region5: #{bottleneck_forward.4} parent=0 // loop_body
    %s14 = ssub.s32 %s9, 1
    %s15 = ssub.s32 %s9, 2
    %s22 = sadd.s32 1, %s17
    %p23 = scmp.ge.s32.totalorder %s22, 1
    %s24 = scalar_select %p23, 0, %s22
    %s25 = sadd.s32 1, %s16
    %s26 = scalar_select %p23, %s25, %s16
    %p27 = scmp.ge.s32.totalorder %s26, 2
    %s28 = scalar_select %p27, 0, %s26
    %s29 = ssub.s32 %s16, %s28
    %p30 = scmp.eq.s32.totalorder %s29, 0
    %s32 = sadd.s32 %s31, 1
    %s33 = scalar_select %p30, %s31, %s32
    %p36 = pneg %p30
    %p37 = scmp.eq.s32.totalorder %s9, 1
    %p38 = por %p36, %p37
    %p39 = scmp.ne.s32.totalorder %s31, %s34
    %p40 = scmp.eq.s32.totalorder %s9, 0
    %p41 = por %p39, %p40
    %p42 = scmp.ne.s32.totalorder %s31, %s34
    %p43 = scmp.eq.s32.totalorder %s14, 1
    %p44 = por %p42, %p43
    %p45 = scmp.ne.s32.totalorder %s34, %s35
    %p46 = scmp.eq.s32.totalorder %s14, 0
    %p47 = por %p45, %p46
    %p48 = scmp.ne.s32.totalorder %s34, %s35
    %p49 = scmp.eq.s32.totalorder %s15, 1
    %p50 = por %p48, %p49
    %p52 = scmp.ne.s32.totalorder %s35, %s51
    %p53 = scmp.eq.s32.totalorder %s15, 0
    %p54 = por %p52, %p53
    %s55 = ssub.s32 %s17, %s24
    %p56 = scmp.eq.s32.totalorder %s55, 0
    %s58 = sadd.s32 %s57, 1
    %s59 = scalar_select %p56, %s57, %s58
    %p62 = pneg %p56
    %p63 = scmp.eq.s32.totalorder %s9, 1
    %p64 = por %p62, %p63
    %p65 = scmp.ne.s32.totalorder %s57, %s60
    %p66 = scmp.eq.s32.totalorder %s9, 0
    %p67 = por %p65, %p66
    %p68 = scmp.ne.s32.totalorder %s57, %s60
    %p69 = scmp.eq.s32.totalorder %s14, 1
    %p70 = por %p68, %p69
    %p71 = scmp.ne.s32.totalorder %s60, %s61
    %p72 = scmp.eq.s32.totalorder %s14, 0
    %p73 = por %p71, %p72
    %p74 = scmp.ne.s32.totalorder %s60, %s61
    %p75 = scmp.eq.s32.totalorder %s15, 1
    %p76 = por %p74, %p75
    %p78 = scmp.ne.s32.totalorder %s61, %s77
    %p79 = scmp.eq.s32.totalorder %s15, 0
    %p80 = por %p78, %p79
    %s81 = ssub.s32 %s17, %s24
    %p82 = scmp.eq.s32.totalorder %s81, 0
    %s84 = sadd.s32 %s83, 1
    %s85 = scalar_select %p82, %s83, %s84
    %p88 = pneg %p82
    %p89 = scmp.eq.s32.totalorder %s9, 1
    %p90 = por %p88, %p89
    %p91 = scmp.ne.s32.totalorder %s83, %s86
    %p92 = scmp.eq.s32.totalorder %s9, 0
    %p93 = por %p91, %p92
    %p94 = scmp.ne.s32.totalorder %s83, %s86
    %p95 = scmp.eq.s32.totalorder %s14, 1
    %p96 = por %p94, %p95
    %p97 = scmp.ne.s32.totalorder %s86, %s87
    %p98 = scmp.eq.s32.totalorder %s14, 0
    %p99 = por %p97, %p98
    %p100 = scmp.ne.s32.totalorder %s86, %s87
    %p101 = scmp.eq.s32.totalorder %s15, 1
    %p102 = por %p100, %p101
    %p104 = scmp.ne.s32.totalorder %s87, %s103
    %p105 = scmp.eq.s32.totalorder %s15, 0
    %p106 = por %p104, %p105
    %s107 = ssub.s32 %s16, %s28
    %s108 = ssub.s32 %s17, %s24
    %s109 = sor.u32 %s107, %s108
    %p110 = scmp.eq.s32.totalorder %s109, 0
    %s112 = sadd.s32 %s111, 1
    %s113 = scalar_select %p110, %s111, %s112
    %p116 = pneg %p110
    %p117 = scmp.eq.s32.totalorder %s9, 1
    %p118 = por %p116, %p117
    %p119 = scmp.ne.s32.totalorder %s111, %s114
    %p120 = scmp.eq.s32.totalorder %s9, 0
    %p121 = por %p119, %p120
    %p122 = scmp.ne.s32.totalorder %s111, %s114
    %p123 = scmp.eq.s32.totalorder %s14, 1
    %p124 = por %p122, %p123
    %p125 = scmp.ne.s32.totalorder %s114, %s115
    %p126 = scmp.eq.s32.totalorder %s14, 0
    %p127 = por %p125, %p126
    %p128 = scmp.ne.s32.totalorder %s114, %s115
    %p129 = scmp.eq.s32.totalorder %s15, 1
    %p130 = por %p128, %p129
    %p132 = scmp.ne.s32.totalorder %s115, %s131
    %p133 = scmp.eq.s32.totalorder %s15, 0
    %p134 = por %p132, %p133
    %p135 = scmp.le.s32.totalorder 1, %s9
    %p136 = scmp.lt.s32.totalorder %s9, 3
    %p137 = pnand %p135, %p136
    %p138 = pneg %p137
    // Predicated region
    $region9: #{bottleneck_forward.4} parent=5 // pred_check
      _
    $region10: #{bottleneck_forward.4} parent=5 // pred_check_branch
      %140 = sbr.rel (%p137) target = $region12
    $region11: #{bottleneck_forward.4} parent=5 // pred_region
      %s141 = ssub.s32 %s9, 1
      // Predicated region
      $region13: #{bottleneck_forward.4} parent=11 // pred_check
        %p142 = pneg %p73
      $region14: #{bottleneck_forward.4} parent=11 // pred_check_branch
        %144 = sbr.rel (%p142) target = $region16
      $region15: #{bottleneck_forward.4} parent=11 // pred_region
        %p145 = scmp.lt.s32.totalorder %s19, 0
        %s146 = scalar_select %p145, %s19, 0
        %s147 = smul.addr %s146, 4
        %s148 = scalar_lea.vmem %s1, %s147
      $region16: #{bottleneck_forward.4} parent=11 // pred_fallthru
        _
      // Predicated region
      $region17: #{bottleneck_forward.4} parent=11 // pred_check
        %p149 = pneg %p99
      $region18: #{bottleneck_forward.4} parent=11 // pred_check_branch
        %151 = sbr.rel (%p149) target = $region20
      $region19: #{bottleneck_forward.4} parent=11 // pred_region
        %p152 = scmp.lt.s32.totalorder %s19, 0
        %s153 = scalar_select %p152, %s19, 0
        %s154 = smul.addr %s153, 2
        %s155 = scalar_lea.vmem %s2, %s154
      $region20: #{bottleneck_forward.4} parent=11 // pred_fallthru
        _
    $region12: #{bottleneck_forward.4} parent=5 // pred_fallthru
      _
    %p156 = scmp.lt.s32.totalorder %s9, 2
    // Predicated region
    $region21: #{bottleneck_forward.4} parent=5 // pred_check
      %p157 = pneg %p156
    $region22: #{bottleneck_forward.4} parent=5 // pred_check_branch
      %159 = sbr.rel (%p157) target = $region24
    $region23: #{bottleneck_forward.4} parent=5 // pred_region
      // Predicated region
      $region25: #{bottleneck_forward.4} parent=23 // pred_check
        %p160 = pneg %p41
      $region26: #{bottleneck_forward.4} parent=23 // pred_check_branch
        %162 = sbr.rel (%p160) target = $region28
      $region27: #{bottleneck_forward.4} parent=23 // pred_region
        %p163 = scmp.lt.s32.totalorder %s16, 1
        %s164 = scalar_select %p163, %s16, 1
        %s165 = smul.addr %s164, 14
        %s166 = smul.addr %s165, 4
        %s167 = scalar_lea.vmem %s0, %s166
      $region28: #{bottleneck_forward.4} parent=23 // pred_fallthru
        _
    $region24: #{bottleneck_forward.4} parent=5 // pred_fallthru
      _
    %p168 = scmp.le.s32.totalorder 1, %s9
    %p169 = scmp.lt.s32.totalorder %s9, 3
    %p170 = pnand %p168, %p169
    %p171 = pneg %p170
    // Predicated region
    $region29: #{bottleneck_forward.4} parent=5 // pred_check
      _
    $region30: #{bottleneck_forward.4} parent=5 // pred_check_branch
      %173 = sbr.rel (%p170) target = $region32
    $region31: #{bottleneck_forward.4} parent=5 // pred_region
      %s174 = ssub.s32 %s9, 1
      %p175 = scmp.lt.s32.totalorder %s18, 1
      %s176 = scalar_select %p175, %s18, 1
      %s177 = smul.addr %s176, 14
      %s178 = smul.addr %s177, 4
      %s179 = scalar_lea.vmem %s0, %s178
      %p180 = pneg %p47
      %p181 = pneg %p44
      %p182 = scmp.lt.s32.totalorder %s19, 0
      %s183 = scalar_select %p182, %s19, 0
      %s184 = smul.addr %s183, 4
      %s185 = scalar_lea.vmem %s1, %s184
      %p186 = pneg %p73
      %p187 = pneg %p70
      %p188 = scmp.lt.s32.totalorder %s19, 0
      %s189 = scalar_select %p188, %s19, 0
      %s190 = smul.addr %s189, 2
      %s191 = scalar_lea.vmem %s2, %s190
      %p192 = pneg %p99
      %p193 = pneg %p96
      %p194 = pneg %p127
      %p195 = pneg %p124
      %p196 = scmp.lt.s32.totalorder %s18, 1
      %s197 = scalar_select %p196, %s18, 1
      %p198 = scmp.lt.s32.totalorder %s19, 0
      %s199 = scalar_select %p198, %s19, 0
      %s200 = smul.addr %s197, 10
      %s201 = sadd.s32 %s199, %s200
      %s202 = smul.addr %s201, 4
      %s203 = scalar_lea.vmem %s3, %s202
      %p204 = scmp.lt.s32.totalorder %s18, 1
      %s205 = scalar_select %p204, %s18, 1
      %s206 = smul.addr %s205, 14
      %s207 = smul.addr %s206, 4
      %s208 = scalar_lea.vmem %s0, %s207
      %p209 = scmp.lt.s32.totalorder %s19, 0
      %s210 = scalar_select %p209, %s19, 0
      %s211 = smul.addr %s210, 4
      %s212 = scalar_lea.vmem %s1, %s211
      %p213 = scmp.lt.s32.totalorder %s19, 0
      %s214 = scalar_select %p213, %s19, 0
      %s215 = smul.addr %s214, 2
      %s216 = scalar_lea.vmem %s2, %s215
      %p217 = scmp.lt.s32.totalorder %s18, 1
      %s218 = scalar_select %p217, %s18, 1
      %p219 = scmp.lt.s32.totalorder %s19, 0
      %s220 = scalar_select %p219, %s19, 0
      %s221 = smul.addr %s218, 10
      %s222 = sadd.s32 %s220, %s221
      %s223 = smul.addr %s222, 4
      %s224 = scalar_lea.vmem %s3, %s223
      %v226 = vld [vmem:[%s208] sm:$0xf]
      %v227 = vld [vmem:[%s208 + $0x4] sm:$0xf]
      %v228 = vld [vmem:[%s208 + $0x8] sm:$0xf]
      %v229 = vld [vmem:[%s208 + $0xc] sm:$0xf]
      %v230 = vld [vmem:[%s208 + $0x10] sm:$0xf]
      %v231 = vld [vmem:[%s208 + $0x14] sm:$0xf]
      %v232 = vld [vmem:[%s208 + $0x18] sm:$0xf]
      %v233 = vld [vmem:[%s208 + $0x1c] sm:$0xf]
      %v234 = vld [vmem:[%s208 + $0x20] sm:$0xf]
      %v235 = vld [vmem:[%s208 + $0x24] sm:$0xf]
      %v236 = vld [vmem:[%s212] sm:$0xf]
      %v237 = vld [vmem:[%s212 + $0x4] sm:$0xf]
      %v238 = vld [vmem:[%s212 + $0x8] sm:$0xf]
      %v239 = vld [vmem:[%s212 + $0xc] sm:$0xf]
      %v240 = vld [vmem:[%s212 + $0x10] sm:$0xf]
      %v241 = vld [vmem:[%s212 + $0x14] sm:$0xf]
      %v242 = vld [vmem:[%s212 + $0x18] sm:$0xf]
      %v243 = vld [vmem:[%s212 + $0x1c] sm:$0xf]
      %v244 = vld [vmem:[%s212 + $0x20] sm:$0xf]
      %v245 = vld [vmem:[%s212 + $0x24] sm:$0xf]
      %v246 = vld [vmem:[%s212 + $0x28] sm:$0xf]
      %v247 = vld [vmem:[%s212 + $0x2c] sm:$0xf]
      %v248 = vld [vmem:[%s212 + $0x30] sm:$0xf]
      %v249 = vld [vmem:[%s212 + $0x34] sm:$0xf]
      %v250 = vld [vmem:[%s212 + $0x38] sm:$0xf]
      %v251 = vld [vmem:[%s212 + $0x3c] sm:$0xf]
      %v252 = vld [vmem:[%s208 + $0x28] sm:$0x1]
      %s253 = scalar_lea.vmem %s212, 64
      %v254 = vld [vmem:[%s253] sm:$0xf]
      %v255 = vld [vmem:[%s253 + $0x4] sm:$0xf]
      %v256 = vld [vmem:[%s253 + $0x8] sm:$0xf]
      %v257 = vld [vmem:[%s253 + $0xc] sm:$0xf]
      %v258 = vld [vmem:[%s253 + $0x10] sm:$0xf]
      %v259 = vld [vmem:[%s253 + $0x14] sm:$0xf]
      %v260 = vld [vmem:[%s253 + $0x18] sm:$0xf]
      %v261 = vld [vmem:[%s253 + $0x1c] sm:$0xf]
      %v262 = vld [vmem:[%s253 + $0x20] sm:$0xf]
      %v263 = vld [vmem:[%s253 + $0x24] sm:$0xf]
      %v264 = vld [vmem:[%s253 + $0x28] sm:$0xf]
      %v265 = vld [vmem:[%s253 + $0x2c] sm:$0xf]
      %v266 = vld [vmem:[%s253 + $0x30] sm:$0xf]
      %v267 = vld [vmem:[%s253 + $0x34] sm:$0xf]
      %v268 = vld [vmem:[%s253 + $0x38] sm:$0xf]
      %v269 = vld [vmem:[%s253 + $0x3c] sm:$0xf]
      %v281 = vunpack.c.l.b16 %v226
      %v282 = vunpack.c.l.b16 %v227
      %v283 = vunpack.c.l.b16 %v228
      %v284 = vunpack.c.l.b16 %v229
      %v285 = vunpack.c.l.b16 %v230
      %v286 = vunpack.c.l.b16 %v231
      %v287 = vunpack.c.l.b16 %v232
      %v288 = vunpack.c.l.b16 %v233
      %v289 = vunpack.c.l.b16 %v234
      %v290 = vunpack.c.l.b16 %v235
      %v291 = vunpack.c.l.b16 %v252
      %v292 = vpack.c.b16 %v282, %v281
      %v293 = vpack.c.b16 %v284, %v283
      %v294 = vpack.c.b16 %v286, %v285
      %v295 = vpack.c.b16 %v288, %v287
      %v296 = vpack.c.b16 %v290, %v289
      %v297 = vpack.c.b16 %v291, %v291
      %vm298 = vsmask.f32 7424
      %v300 = vshrl.u32 %v292, 16
      %v302 = vshll.u32 %v292, 16
      %v304 = vrot.slane %v302, 1
      %v305 = vor.u32 %v300, %v304
      %v307 = vshll.u32 %v293, 16
      %v309 = vrot.slane %v307, 1
      %v310 = vsel %vm298, %v305, %v309
      %v311 = vshrl.u32 %v293, 16
      %v313 = vor.u32 %v311, %v309
      %v315 = vshll.u32 %v294, 16
      %v317 = vrot.slane %v315, 1
      %v318 = vsel %vm298, %v313, %v317
      %v319 = vshrl.u32 %v294, 16
      %v321 = vor.u32 %v319, %v317
      %v323 = vshll.u32 %v295, 16
      %v325 = vrot.slane %v323, 1
      %v326 = vsel %vm298, %v321, %v325
      %v327 = vshrl.u32 %v295, 16
      %v329 = vor.u32 %v327, %v325
      %v331 = vshll.u32 %v296, 16
      %v333 = vrot.slane %v331, 1
      %v334 = vsel %vm298, %v329, %v333
      %v335 = vshrl.u32 %v296, 16
      %v337 = vor.u32 %v335, %v333
      %v339 = vshll.u32 %v297, 16
      %v341 = vrot.slane %v339, 1
      %v342 = vsel %vm298, %v337, %v341
      %v364 = vunpack.c.l.b16 %v254
      %v365 = vunpack.c.l.b16 %v255
      %v366 = vunpack.c.l.b16 %v256
      %v367 = vunpack.c.l.b16 %v257
      %v368 = vunpack.c.l.b16 %v258
      %v369 = vunpack.c.l.b16 %v259
      %v370 = vunpack.c.l.b16 %v260
      %v371 = vunpack.c.l.b16 %v261
      %v372 = vunpack.c.l.b16 %v262
      %v373 = vunpack.c.l.b16 %v263
      %v374 = vunpack.c.l.b16 %v264
      %v375 = vunpack.c.l.b16 %v265
      %v376 = vunpack.c.l.b16 %v266
      %v377 = vunpack.c.l.b16 %v267
      %v378 = vunpack.c.l.b16 %v268
      %v379 = vunpack.c.l.b16 %v269
      %v380 = vpack.c.b16 %v365, %v364
      %v381 = vpack.c.b16 %v367, %v366
      %v382 = vpack.c.b16 %v369, %v368
      %v383 = vpack.c.b16 %v371, %v370
      %v384 = vpack.c.b16 %v373, %v372
      %v385 = vpack.c.b16 %v375, %v374
      %v386 = vpack.c.b16 %v377, %v376
      %v387 = vpack.c.b16 %v379, %v378
      %396 = vmatprep.subr.bf16.mxu0 0
      %397 = vmatpush1.bf16.msra.mxu0 %v380
      %398 = vmatprep.subr.bf16.mxu0 0
      %399 = vmatpush1.bf16.msra.mxu0 %v381
      %400 = vmatprep.subr.bf16.mxu0 0
      %401 = vmatpush1.bf16.msra.mxu0 %v382
      %402 = vmatprep.subr.bf16.mxu0 0
      %403 = vmatpush1.bf16.msra.mxu0 %v383
      %404 = vmatprep.subr.bf16.mxu0 0
      %405 = vmatpush1.bf16.msra.mxu0 %v384
      %406 = vmatprep.subr.bf16.mxu0 0
      %407 = vmatpush1.bf16.msra.mxu0 %v385
      %408 = vmatprep.subr.bf16.mxu0 0
      %409 = vmatpush1.bf16.msra.mxu0 %v386
      %410 = vmatprep.subr.bf16.mxu0 0
      %411 = vmatpush1.bf16.msra.mxu0 %v387
      %412 = vmatprep.subr.bf16.mxu0 0
      %413 = vmatpush1.bf16.msra.mxu0 0
      %414 = vmatprep.subr.bf16.mxu0 0
      %415 = vmatpush1.bf16.msra.mxu0 0
      %416 = vmatprep.subr.bf16.mxu0 0
      %417 = vmatpush1.bf16.msra.mxu0 0
      %418 = vmatprep.subr.bf16.mxu0 0
      %419 = vmatpush1.bf16.msra.mxu0 0
      %420 = vmatprep.subr.bf16.mxu0 0
      %421 = vmatpush1.bf16.msra.mxu0 0
      %422 = vmatprep.subr.bf16.mxu0 0
      %423 = vmatpush1.bf16.msra.mxu0 0
      %424 = vmatprep.subr.bf16.mxu0 0
      %425 = vmatpush1.bf16.msra.mxu0 0
      %426 = vmatprep.subr.bf16.mxu0 0
      %427 = vmatpush1.bf16.msra.mxu0 0
      %428 = vmatprep.mubr.bf16.mxu0 0
      %429 = vmatmul.mubr.bf16.gmra.mrb[0].mxu0 %v310
      %v430 = vpop.f32.mrb[0].mxu0
      %v431 = vadd.f32 0.0, %v430
      %v432 = vpop.f32.mrb[0].mxu0
      %v433 = vpop.f32.mrb[0].mxu0
      %v434 = vadd.f32 0.0, %v433
      %v435 = vpop.f32.mrb[0].mxu0
      %436 = vmatprep.mubr.bf16.mxu0 0
      %437 = vmatmul.mubr.bf16.gmra.mrb[0].mxu0 %v318
      %v438 = vpop.f32.mrb[0].mxu0
      %v439 = vadd.f32 0.0, %v438
      %v440 = vpop.f32.mrb[0].mxu0
      %v441 = vpop.f32.mrb[0].mxu0
      %v442 = vadd.f32 0.0, %v441
      %v443 = vpop.f32.mrb[0].mxu0
      %444 = vmatprep.mubr.bf16.mxu0 0
      %445 = vmatmul.mubr.bf16.gmra.mrb[0].mxu0 %v326
      %v446 = vpop.f32.mrb[0].mxu0
      %v447 = vadd.f32 0.0, %v446
      %v448 = vpop.f32.mrb[0].mxu0
      %v449 = vpop.f32.mrb[0].mxu0
      %v450 = vadd.f32 0.0, %v449
      %v451 = vpop.f32.mrb[0].mxu0
      %452 = vmatprep.mubr.bf16.mxu0 0
      %453 = vmatmul.mubr.bf16.gmra.mrb[0].mxu0 %v334
      %v454 = vpop.f32.mrb[0].mxu0
      %v455 = vadd.f32 0.0, %v454
      %v456 = vpop.f32.mrb[0].mxu0
      %v457 = vpop.f32.mrb[0].mxu0
      %v458 = vadd.f32 0.0, %v457
      %v459 = vpop.f32.mrb[0].mxu0
      %460 = vmatprep.mubr.bf16.mxu0 0
      %461 = vmatmul.mubr.bf16.gmra.mrb[0].mxu0 %v342
      %v462 = vpop.f32.mrb[0].mxu0
      %v463 = vadd.f32 0.0, %v462
      %v464 = vpop.f32.mrb[0].mxu0
      %v465 = vpop.f32.mrb[0].mxu0
      %v466 = vadd.f32 0.0, %v465
      %v467 = vpop.f32.mrb[0].mxu0
      %468 = vdwg.mxu0
      %v490 = vunpack.c.l.b16 %v236
      %v491 = vunpack.c.l.b16 %v237
      %v492 = vunpack.c.l.b16 %v238
      %v493 = vunpack.c.l.b16 %v239
      %v494 = vunpack.c.l.b16 %v240
      %v495 = vunpack.c.l.b16 %v241
      %v496 = vunpack.c.l.b16 %v242
      %v497 = vunpack.c.l.b16 %v243
      %v498 = vunpack.c.l.b16 %v244
      %v499 = vunpack.c.l.b16 %v245
      %v500 = vunpack.c.l.b16 %v246
      %v501 = vunpack.c.l.b16 %v247
      %v502 = vunpack.c.l.b16 %v248
      %v503 = vunpack.c.l.b16 %v249
      %v504 = vunpack.c.l.b16 %v250
      %v505 = vunpack.c.l.b16 %v251
      %v506 = vpack.c.b16 %v491, %v490
      %v507 = vpack.c.b16 %v493, %v492
      %v508 = vpack.c.b16 %v495, %v494
      %v509 = vpack.c.b16 %v497, %v496
      %v510 = vpack.c.b16 %v499, %v498
      %v511 = vpack.c.b16 %v501, %v500
      %v512 = vpack.c.b16 %v503, %v502
      %v513 = vpack.c.b16 %v505, %v504
      %522 = vmatprep.subr.bf16.mxu0 0
      %523 = vmatpush1.bf16.msra.mxu0 %v506
      %524 = vmatprep.subr.bf16.mxu0 0
      %525 = vmatpush1.bf16.msra.mxu0 %v507
      %526 = vmatprep.subr.bf16.mxu0 0
      %527 = vmatpush1.bf16.msra.mxu0 %v508
      %528 = vmatprep.subr.bf16.mxu0 0
      %529 = vmatpush1.bf16.msra.mxu0 %v509
      %530 = vmatprep.subr.bf16.mxu0 0
      %531 = vmatpush1.bf16.msra.mxu0 %v510
      %532 = vmatprep.subr.bf16.mxu0 0
      %533 = vmatpush1.bf16.msra.mxu0 %v511
      %534 = vmatprep.subr.bf16.mxu0 0
      %535 = vmatpush1.bf16.msra.mxu0 %v512
      %536 = vmatprep.subr.bf16.mxu0 0
      %537 = vmatpush1.bf16.msra.mxu0 %v513
      %538 = vmatprep.subr.bf16.mxu0 0
      %539 = vmatpush1.bf16.msra.mxu0 0
      %540 = vmatprep.subr.bf16.mxu0 0
      %541 = vmatpush1.bf16.msra.mxu0 0
      %542 = vmatprep.subr.bf16.mxu0 0
      %543 = vmatpush1.bf16.msra.mxu0 0
      %544 = vmatprep.subr.bf16.mxu0 0
      %545 = vmatpush1.bf16.msra.mxu0 0
      %546 = vmatprep.subr.bf16.mxu0 0
      %547 = vmatpush1.bf16.msra.mxu0 0
      %548 = vmatprep.subr.bf16.mxu0 0
      %549 = vmatpush1.bf16.msra.mxu0 0
      %550 = vmatprep.subr.bf16.mxu0 0
      %551 = vmatpush1.bf16.msra.mxu0 0
      %552 = vmatprep.subr.bf16.mxu0 0
      %553 = vmatpush1.bf16.msra.mxu0 0
      %554 = vmatprep.mubr.bf16.mxu0 0
      %555 = vmatmul.mubr.bf16.gmra.mrb[0].mxu0 %v292
      %v556 = vpop.f32.mrb[0].mxu0
      %v557 = vadd.f32 %v431, %v556
      %v558 = vpop.f32.mrb[0].mxu0
      %v559 = vpop.f32.mrb[0].mxu0
      %v560 = vadd.f32 %v434, %v559
      %v561 = vpop.f32.mrb[0].mxu0
      %562 = vmatprep.mubr.bf16.mxu0 0
      %563 = vmatmul.mubr.bf16.gmra.mrb[0].mxu0 %v293
      %v564 = vpop.f32.mrb[0].mxu0
      %v565 = vadd.f32 %v439, %v564
      %v566 = vpop.f32.mrb[0].mxu0
      %v567 = vpop.f32.mrb[0].mxu0
      %v568 = vadd.f32 %v442, %v567
      %v569 = vpop.f32.mrb[0].mxu0
      %570 = vmatprep.mubr.bf16.mxu0 0
      %571 = vmatmul.mubr.bf16.gmra.mrb[0].mxu0 %v294
      %v572 = vpop.f32.mrb[0].mxu0
      %v573 = vadd.f32 %v447, %v572
      %v574 = vpop.f32.mrb[0].mxu0
      %v575 = vpop.f32.mrb[0].mxu0
      %v576 = vadd.f32 %v450, %v575
      %v577 = vpop.f32.mrb[0].mxu0
      %578 = vmatprep.mubr.bf16.mxu0 0
      %579 = vmatmul.mubr.bf16.gmra.mrb[0].mxu0 %v295
      %v580 = vpop.f32.mrb[0].mxu0
      %v581 = vadd.f32 %v455, %v580
      %v582 = vpop.f32.mrb[0].mxu0
      %v583 = vpop.f32.mrb[0].mxu0
      %v584 = vadd.f32 %v458, %v583
      %v585 = vpop.f32.mrb[0].mxu0
      %586 = vmatprep.mubr.bf16.mxu0 0
      %587 = vmatmul.mubr.bf16.gmra.mrb[0].mxu0 %v296
      %v588 = vpop.f32.mrb[0].mxu0
      %v589 = vadd.f32 %v463, %v588
      %v590 = vpop.f32.mrb[0].mxu0
      %v591 = vpop.f32.mrb[0].mxu0
      %v592 = vadd.f32 %v466, %v591
      %v593 = vpop.f32.mrb[0].mxu0
      %594 = vdwg.mxu0
      %v595 = vld [vmem:[%s208] sm:$0xe]
      %s596 = scalar_lea.vmem %s212, 128
      %v597 = vld [vmem:[%s596] sm:$0xf]
      %v598 = vld [vmem:[%s596 + $0x4] sm:$0xf]
      %v599 = vld [vmem:[%s596 + $0x8] sm:$0xf]
      %v600 = vld [vmem:[%s596 + $0xc] sm:$0xf]
      %v601 = vld [vmem:[%s596 + $0x10] sm:$0xf]
      %v602 = vld [vmem:[%s596 + $0x14] sm:$0xf]
      %v603 = vld [vmem:[%s596 + $0x18] sm:$0xf]
      %v604 = vld [vmem:[%s596 + $0x1c] sm:$0xf]
      %v605 = vld [vmem:[%s596 + $0x20] sm:$0xf]
      %v606 = vld [vmem:[%s596 + $0x24] sm:$0xf]
      %v607 = vld [vmem:[%s596 + $0x28] sm:$0xf]
      %v608 = vld [vmem:[%s596 + $0x2c] sm:$0xf]
      %v609 = vld [vmem:[%s596 + $0x30] sm:$0xf]
      %v610 = vld [vmem:[%s596 + $0x34] sm:$0xf]
      %v611 = vld [vmem:[%s596 + $0x38] sm:$0xf]
      %v612 = vld [vmem:[%s596 + $0x3c] sm:$0xf]
      %v614 = vunpack.c.l.b16 %v595
      %v615 = vpack.c.b16 %v282, %v614
      %vm616 = vcmask 1046528
      %v617 = vrot.slane %v615, 1
      %v618 = vrot.slane %v293, 1
      %v619 = vsel %vm616, %v617, %v618
      %v620 = vrot.slane %v294, 1
      %v621 = vsel %vm616, %v618, %v620
      %v622 = vrot.slane %v295, 1
      %v623 = vsel %vm616, %v620, %v622
      %v624 = vrot.slane %v296, 1
      %v625 = vsel %vm616, %v622, %v624
      %v626 = vrot.slane %v297, 1
      %v627 = vsel %vm616, %v624, %v626
      %v649 = vunpack.c.l.b16 %v597
      %v650 = vunpack.c.l.b16 %v598
      %v651 = vunpack.c.l.b16 %v599
      %v652 = vunpack.c.l.b16 %v600
      %v653 = vunpack.c.l.b16 %v601
      %v654 = vunpack.c.l.b16 %v602
      %v655 = vunpack.c.l.b16 %v603
      %v656 = vunpack.c.l.b16 %v604
      %v657 = vunpack.c.l.b16 %v605
      %v658 = vunpack.c.l.b16 %v606
      %v659 = vunpack.c.l.b16 %v607
      %v660 = vunpack.c.l.b16 %v608
      %v661 = vunpack.c.l.b16 %v609
      %v662 = vunpack.c.l.b16 %v610
      %v663 = vunpack.c.l.b16 %v611
      %v664 = vunpack.c.l.b16 %v612
      %v665 = vpack.c.b16 %v650, %v649
      %v666 = vpack.c.b16 %v652, %v651
      %v667 = vpack.c.b16 %v654, %v653
      %v668 = vpack.c.b16 %v656, %v655
      %v669 = vpack.c.b16 %v658, %v657
      %v670 = vpack.c.b16 %v660, %v659
      %v671 = vpack.c.b16 %v662, %v661
      %v672 = vpack.c.b16 %v664, %v663
      %681 = vmatprep.subr.bf16.mxu0 0
      %682 = vmatpush1.bf16.msra.mxu0 %v665
      %683 = vmatprep.subr.bf16.mxu0 0
      %684 = vmatpush1.bf16.msra.mxu0 %v666
      %685 = vmatprep.subr.bf16.mxu0 0
      %686 = vmatpush1.bf16.msra.mxu0 %v667
      %687 = vmatprep.subr.bf16.mxu0 0
      %688 = vmatpush1.bf16.msra.mxu0 %v668
      %689 = vmatprep.subr.bf16.mxu0 0
      %690 = vmatpush1.bf16.msra.mxu0 %v669
      %691 = vmatprep.subr.bf16.mxu0 0
      %692 = vmatpush1.bf16.msra.mxu0 %v670
      %693 = vmatprep.subr.bf16.mxu0 0
      %694 = vmatpush1.bf16.msra.mxu0 %v671
      %695 = vmatprep.subr.bf16.mxu0 0
      %696 = vmatpush1.bf16.msra.mxu0 %v672
      %697 = vmatprep.subr.bf16.mxu0 0
      %698 = vmatpush1.bf16.msra.mxu0 0
      %699 = vmatprep.subr.bf16.mxu0 0
      %700 = vmatpush1.bf16.msra.mxu0 0
      %701 = vmatprep.subr.bf16.mxu0 0
      %702 = vmatpush1.bf16.msra.mxu0 0
      %703 = vmatprep.subr.bf16.mxu0 0
      %704 = vmatpush1.bf16.msra.mxu0 0
      %705 = vmatprep.subr.bf16.mxu0 0
      %706 = vmatpush1.bf16.msra.mxu0 0
      %707 = vmatprep.subr.bf16.mxu0 0
      %708 = vmatpush1.bf16.msra.mxu0 0
      %709 = vmatprep.subr.bf16.mxu0 0
      %710 = vmatpush1.bf16.msra.mxu0 0
      %711 = vmatprep.subr.bf16.mxu0 0
      %712 = vmatpush1.bf16.msra.mxu0 0
      %713 = vmatprep.mubr.bf16.mxu0 0
      %714 = vmatmul.mubr.bf16.gmra.mrb[0].mxu0 %v619
      %v715 = vpop.f32.mrb[0].mxu0
      %v716 = vadd.f32 0.0, %v715
      %v717 = vpop.f32.mrb[0].mxu0
      %v718 = vpop.f32.mrb[0].mxu0
      %v719 = vadd.f32 0.0, %v718
      %v720 = vpop.f32.mrb[0].mxu0
      %721 = vmatprep.mubr.bf16.mxu0 0
      %722 = vmatmul.mubr.bf16.gmra.mrb[0].mxu0 %v621
      %v723 = vpop.f32.mrb[0].mxu0
      %v724 = vadd.f32 0.0, %v723
      %v725 = vpop.f32.mrb[0].mxu0
      %v726 = vpop.f32.mrb[0].mxu0
      %v727 = vadd.f32 0.0, %v726
      %v728 = vpop.f32.mrb[0].mxu0
      %729 = vmatprep.mubr.bf16.mxu0 0
      %730 = vmatmul.mubr.bf16.gmra.mrb[0].mxu0 %v623
      %v731 = vpop.f32.mrb[0].mxu0
      %v732 = vadd.f32 0.0, %v731
      %v733 = vpop.f32.mrb[0].mxu0
      %v734 = vpop.f32.mrb[0].mxu0
      %v735 = vadd.f32 0.0, %v734
      %v736 = vpop.f32.mrb[0].mxu0
      %737 = vmatprep.mubr.bf16.mxu0 0
      %738 = vmatmul.mubr.bf16.gmra.mrb[0].mxu0 %v625
      %v739 = vpop.f32.mrb[0].mxu0
      %v740 = vadd.f32 0.0, %v739
      %v741 = vpop.f32.mrb[0].mxu0
      %v742 = vpop.f32.mrb[0].mxu0
      %v743 = vadd.f32 0.0, %v742
      %v744 = vpop.f32.mrb[0].mxu0
      %745 = vmatprep.mubr.bf16.mxu0 0
      %746 = vmatmul.mubr.bf16.gmra.mrb[0].mxu0 %v627
      %v747 = vpop.f32.mrb[0].mxu0
      %v748 = vadd.f32 0.0, %v747
      %v749 = vpop.f32.mrb[0].mxu0
      %v750 = vpop.f32.mrb[0].mxu0
      %v751 = vadd.f32 0.0, %v750
      %v752 = vpop.f32.mrb[0].mxu0
      %753 = vdwg.mxu0
      %v754 = vadd.f32 %v557, %v716
      %v755 = vadd.f32 %v560, %v719
      %v756 = vadd.f32 %v565, %v724
      %v757 = vadd.f32 %v568, %v727
      %v758 = vadd.f32 %v573, %v732
      %v759 = vadd.f32 %v576, %v735
      %v760 = vadd.f32 %v581, %v740
      %v761 = vadd.f32 %v584, %v743
      %v762 = vadd.f32 %v589, %v748
      %v763 = vadd.f32 %v592, %v751
      %v764 = vld [vmem:[%s208 + $0x4] sm:$0xe]
      %v765 = vld [vmem:[%s208 + $0x8] sm:$0xf]
      %v766 = vld [vmem:[%s208 + $0xc] sm:$0xf]
      %v767 = vld [vmem:[%s208 + $0x10] sm:$0xf]
      %v768 = vld [vmem:[%s208 + $0x14] sm:$0xf]
      %v769 = vld [vmem:[%s208 + $0x18] sm:$0xf]
      %v770 = vld [vmem:[%s208 + $0x1c] sm:$0xf]
      %v771 = vld [vmem:[%s208 + $0x20] sm:$0xf]
      %v772 = vld [vmem:[%s208 + $0x24] sm:$0xf]
      %v773 = vld [vmem:[%s208 + $0x28] sm:$0xf]
      %v774 = vld [vmem:[%s208 + $0x2c] sm:$0x1]
      %s775 = scalar_lea.vmem %s212, 192
      %v776 = vld [vmem:[%s775] sm:$0xf]
      %v777 = vld [vmem:[%s775 + $0x4] sm:$0xf]
      %v778 = vld [vmem:[%s775 + $0x8] sm:$0xf]
      %v779 = vld [vmem:[%s775 + $0xc] sm:$0xf]
      %v780 = vld [vmem:[%s775 + $0x10] sm:$0xf]
      %v781 = vld [vmem:[%s775 + $0x14] sm:$0xf]
      %v782 = vld [vmem:[%s775 + $0x18] sm:$0xf]
      %v783 = vld [vmem:[%s775 + $0x1c] sm:$0xf]
      %v784 = vld [vmem:[%s775 + $0x20] sm:$0xf]
      %v785 = vld [vmem:[%s775 + $0x24] sm:$0xf]
      %v786 = vld [vmem:[%s775 + $0x28] sm:$0xf]
      %v787 = vld [vmem:[%s775 + $0x2c] sm:$0xf]
      %v788 = vld [vmem:[%s775 + $0x30] sm:$0xf]
      %v789 = vld [vmem:[%s775 + $0x34] sm:$0xf]
      %v790 = vld [vmem:[%s775 + $0x38] sm:$0xf]
      %v791 = vld [vmem:[%s775 + $0x3c] sm:$0xf]
      %v803 = vunpack.c.l.b16 %v764
      %v804 = vunpack.c.l.b16 %v765
      %v805 = vunpack.c.l.b16 %v766
      %v806 = vunpack.c.l.b16 %v767
      %v807 = vunpack.c.l.b16 %v768
      %v808 = vunpack.c.l.b16 %v769
      %v809 = vunpack.c.l.b16 %v770
      %v810 = vunpack.c.l.b16 %v771
      %v811 = vunpack.c.l.b16 %v772
      %v812 = vunpack.c.l.b16 %v773
      %v813 = vunpack.c.l.b16 %v774
      %v814 = vpack.c.b16 %v804, %v803
      %v815 = vpack.c.b16 %v806, %v805
      %v816 = vpack.c.b16 %v808, %v807
      %v817 = vpack.c.b16 %v810, %v809
      %v818 = vpack.c.b16 %v812, %v811
      %v819 = vpack.c.b16 %v813, %v813
      %v820 = vrot.slane %v814, 1
      %v821 = vrot.slane %v815, 1
      %v822 = vsel %vm616, %v820, %v821
      %v823 = vrot.slane %v816, 1
      %v824 = vsel %vm616, %v821, %v823
      %v825 = vrot.slane %v817, 1
      %v826 = vsel %vm616, %v823, %v825
      %v827 = vrot.slane %v818, 1
      %v828 = vsel %vm616, %v825, %v827
      %v829 = vrot.slane %v819, 1
      %v830 = vsel %vm616, %v827, %v829
      %v852 = vunpack.c.l.b16 %v776
      %v853 = vunpack.c.l.b16 %v777
      %v854 = vunpack.c.l.b16 %v778
      %v855 = vunpack.c.l.b16 %v779
      %v856 = vunpack.c.l.b16 %v780
      %v857 = vunpack.c.l.b16 %v781
      %v858 = vunpack.c.l.b16 %v782
      %v859 = vunpack.c.l.b16 %v783
      %v860 = vunpack.c.l.b16 %v784
      %v861 = vunpack.c.l.b16 %v785
      %v862 = vunpack.c.l.b16 %v786
      %v863 = vunpack.c.l.b16 %v787
      %v864 = vunpack.c.l.b16 %v788
      %v865 = vunpack.c.l.b16 %v789
      %v866 = vunpack.c.l.b16 %v790
      %v867 = vunpack.c.l.b16 %v791
      %v868 = vpack.c.b16 %v853, %v852
      %v869 = vpack.c.b16 %v855, %v854
      %v870 = vpack.c.b16 %v857, %v856
      %v871 = vpack.c.b16 %v859, %v858
      %v872 = vpack.c.b16 %v861, %v860
      %v873 = vpack.c.b16 %v863, %v862
      %v874 = vpack.c.b16 %v865, %v864
      %v875 = vpack.c.b16 %v867, %v866
      %884 = vmatprep.subr.bf16.mxu0 0
      %885 = vmatpush1.bf16.msra.mxu0 %v868
      %886 = vmatprep.subr.bf16.mxu0 0
      %887 = vmatpush1.bf16.msra.mxu0 %v869
      %888 = vmatprep.subr.bf16.mxu0 0
      %889 = vmatpush1.bf16.msra.mxu0 %v870
      %890 = vmatprep.subr.bf16.mxu0 0
      %891 = vmatpush1.bf16.msra.mxu0 %v871
      %892 = vmatprep.subr.bf16.mxu0 0
      %893 = vmatpush1.bf16.msra.mxu0 %v872
      %894 = vmatprep.subr.bf16.mxu0 0
      %895 = vmatpush1.bf16.msra.mxu0 %v873
      %896 = vmatprep.subr.bf16.mxu0 0
      %897 = vmatpush1.bf16.msra.mxu0 %v874
      %898 = vmatprep.subr.bf16.mxu0 0
      %899 = vmatpush1.bf16.msra.mxu0 %v875
      %900 = vmatprep.subr.bf16.mxu0 0
      %901 = vmatpush1.bf16.msra.mxu0 0
      %902 = vmatprep.subr.bf16.mxu0 0
      %903 = vmatpush1.bf16.msra.mxu0 0
      %904 = vmatprep.subr.bf16.mxu0 0
      %905 = vmatpush1.bf16.msra.mxu0 0
      %906 = vmatprep.subr.bf16.mxu0 0
      %907 = vmatpush1.bf16.msra.mxu0 0
      %908 = vmatprep.subr.bf16.mxu0 0
      %909 = vmatpush1.bf16.msra.mxu0 0
      %910 = vmatprep.subr.bf16.mxu0 0
      %911 = vmatpush1.bf16.msra.mxu0 0
      %912 = vmatprep.subr.bf16.mxu0 0
      %913 = vmatpush1.bf16.msra.mxu0 0
      %914 = vmatprep.subr.bf16.mxu0 0
      %915 = vmatpush1.bf16.msra.mxu0 0
      %916 = vmatprep.mubr.bf16.mxu0 0
      %917 = vmatmul.mubr.bf16.gmra.mrb[0].mxu0 %v822
      %v918 = vpop.f32.mrb[0].mxu0
      %v919 = vadd.f32 0.0, %v918
      %v920 = vpop.f32.mrb[0].mxu0
      %v921 = vpop.f32.mrb[0].mxu0
      %v922 = vadd.f32 0.0, %v921
      %v923 = vpop.f32.mrb[0].mxu0
      %924 = vmatprep.mubr.bf16.mxu0 0
      %925 = vmatmul.mubr.bf16.gmra.mrb[0].mxu0 %v824
      %v926 = vpop.f32.mrb[0].mxu0
      %v927 = vadd.f32 0.0, %v926
      %v928 = vpop.f32.mrb[0].mxu0
      %v929 = vpop.f32.mrb[0].mxu0
      %v930 = vadd.f32 0.0, %v929
      %v931 = vpop.f32.mrb[0].mxu0
      %932 = vmatprep.mubr.bf16.mxu0 0
      %933 = vmatmul.mubr.bf16.gmra.mrb[0].mxu0 %v826
      %v934 = vpop.f32.mrb[0].mxu0
      %v935 = vadd.f32 0.0, %v934
      %v936 = vpop.f32.mrb[0].mxu0
      %v937 = vpop.f32.mrb[0].mxu0
      %v938 = vadd.f32 0.0, %v937
      %v939 = vpop.f32.mrb[0].mxu0
      %940 = vmatprep.mubr.bf16.mxu0 0
      %941 = vmatmul.mubr.bf16.gmra.mrb[0].mxu0 %v828
      %v942 = vpop.f32.mrb[0].mxu0
      %v943 = vadd.f32 0.0, %v942
      %v944 = vpop.f32.mrb[0].mxu0
      %v945 = vpop.f32.mrb[0].mxu0
      %v946 = vadd.f32 0.0, %v945
      %v947 = vpop.f32.mrb[0].mxu0
      %948 = vmatprep.mubr.bf16.mxu0 0
      %949 = vmatmul.mubr.bf16.gmra.mrb[0].mxu0 %v830
      %v950 = vpop.f32.mrb[0].mxu0
      %v951 = vadd.f32 0.0, %v950
      %v952 = vpop.f32.mrb[0].mxu0
      %v953 = vpop.f32.mrb[0].mxu0
      %v954 = vadd.f32 0.0, %v953
      %v955 = vpop.f32.mrb[0].mxu0
      %956 = vdwg.mxu0
      %v957 = vadd.f32 %v754, %v919
      %v958 = vadd.f32 %v755, %v922
      %v959 = vadd.f32 %v756, %v927
      %v960 = vadd.f32 %v757, %v930
      %v961 = vadd.f32 %v758, %v935
      %v962 = vadd.f32 %v759, %v938
      %v963 = vadd.f32 %v760, %v943
      %v964 = vadd.f32 %v761, %v946
      %v965 = vadd.f32 %v762, %v951
      %v966 = vadd.f32 %v763, %v954
      %v967 = vld [vmem:[%s208 + $0x2c] sm:$0x3]
      %s968 = scalar_lea.vmem %s212, 256
      %v969 = vld [vmem:[%s968] sm:$0xf]
      %v970 = vld [vmem:[%s968 + $0x4] sm:$0xf]
      %v971 = vld [vmem:[%s968 + $0x8] sm:$0xf]
      %v972 = vld [vmem:[%s968 + $0xc] sm:$0xf]
      %v973 = vld [vmem:[%s968 + $0x10] sm:$0xf]
      %v974 = vld [vmem:[%s968 + $0x14] sm:$0xf]
      %v975 = vld [vmem:[%s968 + $0x18] sm:$0xf]
      %v976 = vld [vmem:[%s968 + $0x1c] sm:$0xf]
      %v977 = vld [vmem:[%s968 + $0x20] sm:$0xf]
      %v978 = vld [vmem:[%s968 + $0x24] sm:$0xf]
      %v979 = vld [vmem:[%s968 + $0x28] sm:$0xf]
      %v980 = vld [vmem:[%s968 + $0x2c] sm:$0xf]
      %v981 = vld [vmem:[%s968 + $0x30] sm:$0xf]
      %v982 = vld [vmem:[%s968 + $0x34] sm:$0xf]
      %v983 = vld [vmem:[%s968 + $0x38] sm:$0xf]
      %v984 = vld [vmem:[%s968 + $0x3c] sm:$0xf]
      %v986 = vunpack.c.l.b16 %v967
      %v987 = vpack.c.b16 %v986, %v986
      %vm988 = vsmask.f32 6400
      %v990 = vshrl.u32 %v814, 16
      %v992 = vrot.slane %v990, 1
      %v993 = vshll.u32 %v814, 16
      %v995 = vrot.slane %v993, 2
      %v996 = vor.u32 %v992, %v995
      %v998 = vshrl.u32 %v815, 16
      %v1000 = vrot.slane %v998, 1
      %v1001 = vshll.u32 %v815, 16
      %v1003 = vrot.slane %v1001, 2
      %v1004 = vor.u32 %v1000, %v1003
      %v1005 = vsel %vm988, %v996, %v1004
      %v1007 = vshrl.u32 %v816, 16
      %v1009 = vrot.slane %v1007, 1
      %v1010 = vshll.u32 %v816, 16
      %v1012 = vrot.slane %v1010, 2
      %v1013 = vor.u32 %v1009, %v1012
      %v1014 = vsel %vm988, %v1004, %v1013
      %v1016 = vshrl.u32 %v817, 16
      %v1018 = vrot.slane %v1016, 1
      %v1019 = vshll.u32 %v817, 16
      %v1021 = vrot.slane %v1019, 2
      %v1022 = vor.u32 %v1018, %v1021
      %v1023 = vsel %vm988, %v1013, %v1022
      %v1025 = vshrl.u32 %v818, 16
      %v1027 = vrot.slane %v1025, 1
      %v1028 = vshll.u32 %v818, 16
      %v1030 = vrot.slane %v1028, 2
      %v1031 = vor.u32 %v1027, %v1030
      %v1032 = vsel %vm988, %v1022, %v1031
      %v1034 = vshrl.u32 %v987, 16
      %v1036 = vrot.slane %v1034, 1
      %v1037 = vshll.u32 %v987, 16
      %v1039 = vrot.slane %v1037, 2
      %v1040 = vor.u32 %v1036, %v1039
      %v1041 = vsel %vm988, %v1031, %v1040
      %v1063 = vunpack.c.l.b16 %v969
      %v1064 = vunpack.c.l.b16 %v970
      %v1065 = vunpack.c.l.b16 %v971
      %v1066 = vunpack.c.l.b16 %v972
      %v1067 = vunpack.c.l.b16 %v973
      %v1068 = vunpack.c.l.b16 %v974
      %v1069 = vunpack.c.l.b16 %v975
      %v1070 = vunpack.c.l.b16 %v976
      %v1071 = vunpack.c.l.b16 %v977
      %v1072 = vunpack.c.l.b16 %v978
      %v1073 = vunpack.c.l.b16 %v979
      %v1074 = vunpack.c.l.b16 %v980
      %v1075 = vunpack.c.l.b16 %v981
      %v1076 = vunpack.c.l.b16 %v982
      %v1077 = vunpack.c.l.b16 %v983
      %v1078 = vunpack.c.l.b16 %v984
      %v1079 = vpack.c.b16 %v1064, %v1063
      %v1080 = vpack.c.b16 %v1066, %v1065
      %v1081 = vpack.c.b16 %v1068, %v1067
      %v1082 = vpack.c.b16 %v1070, %v1069
      %v1083 = vpack.c.b16 %v1072, %v1071
      %v1084 = vpack.c.b16 %v1074, %v1073
      %v1085 = vpack.c.b16 %v1076, %v1075
      %v1086 = vpack.c.b16 %v1078, %v1077
      %1095 = vmatprep.subr.bf16.mxu0 0
      %1096 = vmatpush1.bf16.msra.mxu0 %v1079
      %1097 = vmatprep.subr.bf16.mxu0 0
      %1098 = vmatpush1.bf16.msra.mxu0 %v1080
      %1099 = vmatprep.subr.bf16.mxu0 0
      %1100 = vmatpush1.bf16.msra.mxu0 %v1081
      %1101 = vmatprep.subr.bf16.mxu0 0
      %1102 = vmatpush1.bf16.msra.mxu0 %v1082
      %1103 = vmatprep.subr.bf16.mxu0 0
      %1104 = vmatpush1.bf16.msra.mxu0 %v1083
      %1105 = vmatprep.subr.bf16.mxu0 0
      %1106 = vmatpush1.bf16.msra.mxu0 %v1084
      %1107 = vmatprep.subr.bf16.mxu0 0
      %1108 = vmatpush1.bf16.msra.mxu0 %v1085
      %1109 = vmatprep.subr.bf16.mxu0 0
      %1110 = vmatpush1.bf16.msra.mxu0 %v1086
      %1111 = vmatprep.subr.bf16.mxu0 0
      %1112 = vmatpush1.bf16.msra.mxu0 0
      %1113 = vmatprep.subr.bf16.mxu0 0
      %1114 = vmatpush1.bf16.msra.mxu0 0
      %1115 = vmatprep.subr.bf16.mxu0 0
      %1116 = vmatpush1.bf16.msra.mxu0 0
      %1117 = vmatprep.subr.bf16.mxu0 0
      %1118 = vmatpush1.bf16.msra.mxu0 0
      %1119 = vmatprep.subr.bf16.mxu0 0
      %1120 = vmatpush1.bf16.msra.mxu0 0
      %1121 = vmatprep.subr.bf16.mxu0 0
      %1122 = vmatpush1.bf16.msra.mxu0 0
      %1123 = vmatprep.subr.bf16.mxu0 0
      %1124 = vmatpush1.bf16.msra.mxu0 0
      %1125 = vmatprep.subr.bf16.mxu0 0
      %1126 = vmatpush1.bf16.msra.mxu0 0
      %1127 = vmatprep.mubr.bf16.mxu0 0
      %1128 = vmatmul.mubr.bf16.gmra.mrb[0].mxu0 %v1005
      %v1129 = vpop.f32.mrb[0].mxu0
      %v1130 = vadd.f32 0.0, %v1129
      %v1131 = vpop.f32.mrb[0].mxu0
      %v1132 = vpop.f32.mrb[0].mxu0
      %v1133 = vadd.f32 0.0, %v1132
      %v1134 = vpop.f32.mrb[0].mxu0
      %1135 = vmatprep.mubr.bf16.mxu0 0
      %1136 = vmatmul.mubr.bf16.gmra.mrb[0].mxu0 %v1014
      %v1137 = vpop.f32.mrb[0].mxu0
      %v1138 = vadd.f32 0.0, %v1137
      %v1139 = vpop.f32.mrb[0].mxu0
      %v1140 = vpop.f32.mrb[0].mxu0
      %v1141 = vadd.f32 0.0, %v1140
      %v1142 = vpop.f32.mrb[0].mxu0
      %1143 = vmatprep.mubr.bf16.mxu0 0
      %1144 = vmatmul.mubr.bf16.gmra.mrb[0].mxu0 %v1023
      %v1145 = vpop.f32.mrb[0].mxu0
      %v1146 = vadd.f32 0.0, %v1145
      %v1147 = vpop.f32.mrb[0].mxu0
      %v1148 = vpop.f32.mrb[0].mxu0
      %v1149 = vadd.f32 0.0, %v1148
      %v1150 = vpop.f32.mrb[0].mxu0
      %1151 = vmatprep.mubr.bf16.mxu0 0
      %1152 = vmatmul.mubr.bf16.gmra.mrb[0].mxu0 %v1032
      %v1153 = vpop.f32.mrb[0].mxu0
      %v1154 = vadd.f32 0.0, %v1153
      %v1155 = vpop.f32.mrb[0].mxu0
      %v1156 = vpop.f32.mrb[0].mxu0
      %v1157 = vadd.f32 0.0, %v1156
      %v1158 = vpop.f32.mrb[0].mxu0
      %1159 = vmatprep.mubr.bf16.mxu0 0
      %1160 = vmatmul.mubr.bf16.gmra.mrb[0].mxu0 %v1041
      %v1161 = vpop.f32.mrb[0].mxu0
      %v1162 = vadd.f32 0.0, %v1161
      %v1163 = vpop.f32.mrb[0].mxu0
      %v1164 = vpop.f32.mrb[0].mxu0
      %v1165 = vadd.f32 0.0, %v1164
      %v1166 = vpop.f32.mrb[0].mxu0
      %1167 = vdwg.mxu0
      %v1168 = vadd.f32 %v957, %v1130
      %v1169 = vadd.f32 %v958, %v1133
      %v1170 = vadd.f32 %v959, %v1138
      %v1171 = vadd.f32 %v960, %v1141
      %v1172 = vadd.f32 %v961, %v1146
      %v1173 = vadd.f32 %v962, %v1149
      %v1174 = vadd.f32 %v963, %v1154
      %v1175 = vadd.f32 %v964, %v1157
      %v1176 = vadd.f32 %v965, %v1162
      %v1177 = vadd.f32 %v966, %v1165
      %v1178 = vld [vmem:[%s208 + $0x4] sm:$0xc]
      %s1179 = scalar_lea.vmem %s212, 320
      %v1180 = vld [vmem:[%s1179] sm:$0xf]
      %v1181 = vld [vmem:[%s1179 + $0x4] sm:$0xf]
      %v1182 = vld [vmem:[%s1179 + $0x8] sm:$0xf]
      %v1183 = vld [vmem:[%s1179 + $0xc] sm:$0xf]
      %v1184 = vld [vmem:[%s1179 + $0x10] sm:$0xf]
      %v1185 = vld [vmem:[%s1179 + $0x14] sm:$0xf]
      %v1186 = vld [vmem:[%s1179 + $0x18] sm:$0xf]
      %v1187 = vld [vmem:[%s1179 + $0x1c] sm:$0xf]
      %v1188 = vld [vmem:[%s1179 + $0x20] sm:$0xf]
      %v1189 = vld [vmem:[%s1179 + $0x24] sm:$0xf]
      %v1190 = vld [vmem:[%s1179 + $0x28] sm:$0xf]
      %v1191 = vld [vmem:[%s1179 + $0x2c] sm:$0xf]
      %v1192 = vld [vmem:[%s1179 + $0x30] sm:$0xf]
      %v1193 = vld [vmem:[%s1179 + $0x34] sm:$0xf]
      %v1194 = vld [vmem:[%s1179 + $0x38] sm:$0xf]
      %v1195 = vld [vmem:[%s1179 + $0x3c] sm:$0xf]
      %v1197 = vunpack.c.l.b16 %v1178
      %v1198 = vpack.c.b16 %v804, %v1197
      %vm1199 = vcmask 1045504
      %v1200 = vrot.slane %v1198, 2
      %v1201 = vrot.slane %v815, 2
      %v1202 = vsel %vm1199, %v1200, %v1201
      %v1203 = vrot.slane %v816, 2
      %v1204 = vsel %vm1199, %v1201, %v1203
      %v1205 = vrot.slane %v817, 2
      %v1206 = vsel %vm1199, %v1203, %v1205
      %v1207 = vrot.slane %v818, 2
      %v1208 = vsel %vm1199, %v1205, %v1207
      %v1209 = vrot.slane %v987, 2
      %v1210 = vsel %vm1199, %v1207, %v1209
      %v1232 = vunpack.c.l.b16 %v1180
      %v1233 = vunpack.c.l.b16 %v1181
      %v1234 = vunpack.c.l.b16 %v1182
      %v1235 = vunpack.c.l.b16 %v1183
      %v1236 = vunpack.c.l.b16 %v1184
      %v1237 = vunpack.c.l.b16 %v1185
      %v1238 = vunpack.c.l.b16 %v1186
      %v1239 = vunpack.c.l.b16 %v1187
      %v1240 = vunpack.c.l.b16 %v1188
      %v1241 = vunpack.c.l.b16 %v1189
      %v1242 = vunpack.c.l.b16 %v1190
      %v1243 = vunpack.c.l.b16 %v1191
      %v1244 = vunpack.c.l.b16 %v1192
      %v1245 = vunpack.c.l.b16 %v1193
      %v1246 = vunpack.c.l.b16 %v1194
      %v1247 = vunpack.c.l.b16 %v1195
      %v1248 = vpack.c.b16 %v1233, %v1232
      %v1249 = vpack.c.b16 %v1235, %v1234
      %v1250 = vpack.c.b16 %v1237, %v1236
      %v1251 = vpack.c.b16 %v1239, %v1238
      %v1252 = vpack.c.b16 %v1241, %v1240
      %v1253 = vpack.c.b16 %v1243, %v1242
      %v1254 = vpack.c.b16 %v1245, %v1244
      %v1255 = vpack.c.b16 %v1247, %v1246
      %1264 = vmatprep.subr.bf16.mxu0 0
      %1265 = vmatpush1.bf16.msra.mxu0 %v1248
      %1266 = vmatprep.subr.bf16.mxu0 0
      %1267 = vmatpush1.bf16.msra.mxu0 %v1249
      %1268 = vmatprep.subr.bf16.mxu0 0
      %1269 = vmatpush1.bf16.msra.mxu0 %v1250
      %1270 = vmatprep.subr.bf16.mxu0 0
      %1271 = vmatpush1.bf16.msra.mxu0 %v1251
      %1272 = vmatprep.subr.bf16.mxu0 0
      %1273 = vmatpush1.bf16.msra.mxu0 %v1252
      %1274 = vmatprep.subr.bf16.mxu0 0
      %1275 = vmatpush1.bf16.msra.mxu0 %v1253
      %1276 = vmatprep.subr.bf16.mxu0 0
      %1277 = vmatpush1.bf16.msra.mxu0 %v1254
      %1278 = vmatprep.subr.bf16.mxu0 0
      %1279 = vmatpush1.bf16.msra.mxu0 %v1255
      %1280 = vmatprep.subr.bf16.mxu0 0
      %1281 = vmatpush1.bf16.msra.mxu0 0
      %1282 = vmatprep.subr.bf16.mxu0 0
      %1283 = vmatpush1.bf16.msra.mxu0 0
      %1284 = vmatprep.subr.bf16.mxu0 0
      %1285 = vmatpush1.bf16.msra.mxu0 0
      %1286 = vmatprep.subr.bf16.mxu0 0
      %1287 = vmatpush1.bf16.msra.mxu0 0
      %1288 = vmatprep.subr.bf16.mxu0 0
      %1289 = vmatpush1.bf16.msra.mxu0 0
      %1290 = vmatprep.subr.bf16.mxu0 0
      %1291 = vmatpush1.bf16.msra.mxu0 0
      %1292 = vmatprep.subr.bf16.mxu0 0
      %1293 = vmatpush1.bf16.msra.mxu0 0
      %1294 = vmatprep.subr.bf16.mxu0 0
      %1295 = vmatpush1.bf16.msra.mxu0 0
      %1296 = vmatprep.mubr.bf16.mxu0 0
      %1297 = vmatmul.mubr.bf16.gmra.mrb[0].mxu0 %v1202
      %v1298 = vpop.f32.mrb[0].mxu0
      %v1299 = vadd.f32 0.0, %v1298
      %v1300 = vpop.f32.mrb[0].mxu0
      %v1301 = vpop.f32.mrb[0].mxu0
      %v1302 = vadd.f32 0.0, %v1301
      %v1303 = vpop.f32.mrb[0].mxu0
      %1304 = vmatprep.mubr.bf16.mxu0 0
      %1305 = vmatmul.mubr.bf16.gmra.mrb[0].mxu0 %v1204
      %v1306 = vpop.f32.mrb[0].mxu0
      %v1307 = vadd.f32 0.0, %v1306
      %v1308 = vpop.f32.mrb[0].mxu0
      %v1309 = vpop.f32.mrb[0].mxu0
      %v1310 = vadd.f32 0.0, %v1309
      %v1311 = vpop.f32.mrb[0].mxu0
      %1312 = vmatprep.mubr.bf16.mxu0 0
      %1313 = vmatmul.mubr.bf16.gmra.mrb[0].mxu0 %v1206
      %v1314 = vpop.f32.mrb[0].mxu0
      %v1315 = vadd.f32 0.0, %v1314
      %v1316 = vpop.f32.mrb[0].mxu0
      %v1317 = vpop.f32.mrb[0].mxu0
      %v1318 = vadd.f32 0.0, %v1317
      %v1319 = vpop.f32.mrb[0].mxu0
      %1320 = vmatprep.mubr.bf16.mxu0 0
      %1321 = vmatmul.mubr.bf16.gmra.mrb[0].mxu0 %v1208
      %v1322 = vpop.f32.mrb[0].mxu0
      %v1323 = vadd.f32 0.0, %v1322
      %v1324 = vpop.f32.mrb[0].mxu0
      %v1325 = vpop.f32.mrb[0].mxu0
      %v1326 = vadd.f32 0.0, %v1325
      %v1327 = vpop.f32.mrb[0].mxu0
      %1328 = vmatprep.mubr.bf16.mxu0 0
      %1329 = vmatmul.mubr.bf16.gmra.mrb[0].mxu0 %v1210
      %v1330 = vpop.f32.mrb[0].mxu0
      %v1331 = vadd.f32 0.0, %v1330
      %v1332 = vpop.f32.mrb[0].mxu0
      %v1333 = vpop.f32.mrb[0].mxu0
      %v1334 = vadd.f32 0.0, %v1333
      %v1335 = vpop.f32.mrb[0].mxu0
      %1336 = vdwg.mxu0
      %v1337 = vadd.f32 %v1168, %v1299
      %v1338 = vadd.f32 %v1169, %v1302
      %v1339 = vadd.f32 %v1170, %v1307
      %v1340 = vadd.f32 %v1171, %v1310
      %v1341 = vadd.f32 %v1172, %v1315
      %v1342 = vadd.f32 %v1173, %v1318
      %v1343 = vadd.f32 %v1174, %v1323
      %v1344 = vadd.f32 %v1175, %v1326
      %v1345 = vadd.f32 %v1176, %v1331
      %v1346 = vadd.f32 %v1177, %v1334
      %v1347 = vld [vmem:[%s208 + $0x8] sm:$0xc]
      %v1348 = vld [vmem:[%s208 + $0xc] sm:$0xf]
      %v1349 = vld [vmem:[%s208 + $0x10] sm:$0xf]
      %v1350 = vld [vmem:[%s208 + $0x14] sm:$0xf]
      %v1351 = vld [vmem:[%s208 + $0x18] sm:$0xf]
      %v1352 = vld [vmem:[%s208 + $0x1c] sm:$0xf]
      %v1353 = vld [vmem:[%s208 + $0x20] sm:$0xf]
      %v1354 = vld [vmem:[%s208 + $0x24] sm:$0xf]
      %v1355 = vld [vmem:[%s208 + $0x28] sm:$0xf]
      %v1356 = vld [vmem:[%s208 + $0x2c] sm:$0xf]
      %v1357 = vld [vmem:[%s208 + $0x30] sm:$0x3]
      %s1358 = scalar_lea.vmem %s212, 384
      %v1359 = vld [vmem:[%s1358] sm:$0xf]
      %v1360 = vld [vmem:[%s1358 + $0x4] sm:$0xf]
      %v1361 = vld [vmem:[%s1358 + $0x8] sm:$0xf]
      %v1362 = vld [vmem:[%s1358 + $0xc] sm:$0xf]
      %v1363 = vld [vmem:[%s1358 + $0x10] sm:$0xf]
      %v1364 = vld [vmem:[%s1358 + $0x14] sm:$0xf]
      %v1365 = vld [vmem:[%s1358 + $0x18] sm:$0xf]
      %v1366 = vld [vmem:[%s1358 + $0x1c] sm:$0xf]
      %v1367 = vld [vmem:[%s1358 + $0x20] sm:$0xf]
      %v1368 = vld [vmem:[%s1358 + $0x24] sm:$0xf]
      %v1369 = vld [vmem:[%s1358 + $0x28] sm:$0xf]
      %v1370 = vld [vmem:[%s1358 + $0x2c] sm:$0xf]
      %v1371 = vld [vmem:[%s1358 + $0x30] sm:$0xf]
      %v1372 = vld [vmem:[%s1358 + $0x34] sm:$0xf]
      %v1373 = vld [vmem:[%s1358 + $0x38] sm:$0xf]
      %v1374 = vld [vmem:[%s1358 + $0x3c] sm:$0xf]
      %v1386 = vunpack.c.l.b16 %v1347
      %v1387 = vunpack.c.l.b16 %v1348
      %v1388 = vunpack.c.l.b16 %v1349
      %v1389 = vunpack.c.l.b16 %v1350
      %v1390 = vunpack.c.l.b16 %v1351
      %v1391 = vunpack.c.l.b16 %v1352
      %v1392 = vunpack.c.l.b16 %v1353
      %v1393 = vunpack.c.l.b16 %v1354
      %v1394 = vunpack.c.l.b16 %v1355
      %v1395 = vunpack.c.l.b16 %v1356
      %v1396 = vunpack.c.l.b16 %v1357
      %v1397 = vpack.c.b16 %v1387, %v1386
      %v1398 = vpack.c.b16 %v1389, %v1388
      %v1399 = vpack.c.b16 %v1391, %v1390
      %v1400 = vpack.c.b16 %v1393, %v1392
      %v1401 = vpack.c.b16 %v1395, %v1394
      %v1402 = vpack.c.b16 %v1396, %v1396
      %v1403 = vrot.slane %v1397, 2
      %v1404 = vrot.slane %v1398, 2
      %v1405 = vsel %vm1199, %v1403, %v1404
      %v1406 = vrot.slane %v1399, 2
      %v1407 = vsel %vm1199, %v1404, %v1406
      %v1408 = vrot.slane %v1400, 2
      %v1409 = vsel %vm1199, %v1406, %v1408
      %v1410 = vrot.slane %v1401, 2
      %v1411 = vsel %vm1199, %v1408, %v1410
      %v1412 = vrot.slane %v1402, 2
      %v1413 = vsel %vm1199, %v1410, %v1412
      %v1435 = vunpack.c.l.b16 %v1359
      %v1436 = vunpack.c.l.b16 %v1360
      %v1437 = vunpack.c.l.b16 %v1361
      %v1438 = vunpack.c.l.b16 %v1362
      %v1439 = vunpack.c.l.b16 %v1363
      %v1440 = vunpack.c.l.b16 %v1364
      %v1441 = vunpack.c.l.b16 %v1365
      %v1442 = vunpack.c.l.b16 %v1366
      %v1443 = vunpack.c.l.b16 %v1367
      %v1444 = vunpack.c.l.b16 %v1368
      %v1445 = vunpack.c.l.b16 %v1369
      %v1446 = vunpack.c.l.b16 %v1370
      %v1447 = vunpack.c.l.b16 %v1371
      %v1448 = vunpack.c.l.b16 %v1372
      %v1449 = vunpack.c.l.b16 %v1373
      %v1450 = vunpack.c.l.b16 %v1374
      %v1451 = vpack.c.b16 %v1436, %v1435
      %v1452 = vpack.c.b16 %v1438, %v1437
      %v1453 = vpack.c.b16 %v1440, %v1439
      %v1454 = vpack.c.b16 %v1442, %v1441
      %v1455 = vpack.c.b16 %v1444, %v1443
      %v1456 = vpack.c.b16 %v1446, %v1445
      %v1457 = vpack.c.b16 %v1448, %v1447
      %v1458 = vpack.c.b16 %v1450, %v1449
      %1467 = vmatprep.subr.bf16.mxu0 0
      %1468 = vmatpush1.bf16.msra.mxu0 %v1451
      %1469 = vmatprep.subr.bf16.mxu0 0
      %1470 = vmatpush1.bf16.msra.mxu0 %v1452
      %1471 = vmatprep.subr.bf16.mxu0 0
      %1472 = vmatpush1.bf16.msra.mxu0 %v1453
      %1473 = vmatprep.subr.bf16.mxu0 0
      %1474 = vmatpush1.bf16.msra.mxu0 %v1454
      %1475 = vmatprep.subr.bf16.mxu0 0
      %1476 = vmatpush1.bf16.msra.mxu0 %v1455
      %1477 = vmatprep.subr.bf16.mxu0 0
      %1478 = vmatpush1.bf16.msra.mxu0 %v1456
      %1479 = vmatprep.subr.bf16.mxu0 0
      %1480 = vmatpush1.bf16.msra.mxu0 %v1457
      %1481 = vmatprep.subr.bf16.mxu0 0
      %1482 = vmatpush1.bf16.msra.mxu0 %v1458
      %1483 = vmatprep.subr.bf16.mxu0 0
      %1484 = vmatpush1.bf16.msra.mxu0 0
      %1485 = vmatprep.subr.bf16.mxu0 0
      %1486 = vmatpush1.bf16.msra.mxu0 0
      %1487 = vmatprep.subr.bf16.mxu0 0
      %1488 = vmatpush1.bf16.msra.mxu0 0
      %1489 = vmatprep.subr.bf16.mxu0 0
      %1490 = vmatpush1.bf16.msra.mxu0 0
      %1491 = vmatprep.subr.bf16.mxu0 0
      %1492 = vmatpush1.bf16.msra.mxu0 0
      %1493 = vmatprep.subr.bf16.mxu0 0
      %1494 = vmatpush1.bf16.msra.mxu0 0
      %1495 = vmatprep.subr.bf16.mxu0 0
      %1496 = vmatpush1.bf16.msra.mxu0 0
      %1497 = vmatprep.subr.bf16.mxu0 0
      %1498 = vmatpush1.bf16.msra.mxu0 0
      %1499 = vmatprep.mubr.bf16.mxu0 0
      %1500 = vmatmul.mubr.bf16.gmra.mrb[0].mxu0 %v1405
      %v1501 = vpop.f32.mrb[0].mxu0
      %v1502 = vadd.f32 0.0, %v1501
      %v1503 = vpop.f32.mrb[0].mxu0
      %v1504 = vpop.f32.mrb[0].mxu0
      %v1505 = vadd.f32 0.0, %v1504
      %v1506 = vpop.f32.mrb[0].mxu0
      %1507 = vmatprep.mubr.bf16.mxu0 0
      %1508 = vmatmul.mubr.bf16.gmra.mrb[0].mxu0 %v1407
      %v1509 = vpop.f32.mrb[0].mxu0
      %v1510 = vadd.f32 0.0, %v1509
      %v1511 = vpop.f32.mrb[0].mxu0
      %v1512 = vpop.f32.mrb[0].mxu0
      %v1513 = vadd.f32 0.0, %v1512
      %v1514 = vpop.f32.mrb[0].mxu0
      %1515 = vmatprep.mubr.bf16.mxu0 0
      %1516 = vmatmul.mubr.bf16.gmra.mrb[0].mxu0 %v1409
      %v1517 = vpop.f32.mrb[0].mxu0
      %v1518 = vadd.f32 0.0, %v1517
      %v1519 = vpop.f32.mrb[0].mxu0
      %v1520 = vpop.f32.mrb[0].mxu0
      %v1521 = vadd.f32 0.0, %v1520
      %v1522 = vpop.f32.mrb[0].mxu0
      %1523 = vmatprep.mubr.bf16.mxu0 0
      %1524 = vmatmul.mubr.bf16.gmra.mrb[0].mxu0 %v1411
      %v1525 = vpop.f32.mrb[0].mxu0
      %v1526 = vadd.f32 0.0, %v1525
      %v1527 = vpop.f32.mrb[0].mxu0
      %v1528 = vpop.f32.mrb[0].mxu0
      %v1529 = vadd.f32 0.0, %v1528
      %v1530 = vpop.f32.mrb[0].mxu0
      %1531 = vmatprep.mubr.bf16.mxu0 0
      %1532 = vmatmul.mubr.bf16.gmra.mrb[0].mxu0 %v1413
      %v1533 = vpop.f32.mrb[0].mxu0
      %v1534 = vadd.f32 0.0, %v1533
      %v1535 = vpop.f32.mrb[0].mxu0
      %v1536 = vpop.f32.mrb[0].mxu0
      %v1537 = vadd.f32 0.0, %v1536
      %v1538 = vpop.f32.mrb[0].mxu0
      %1539 = vdwg.mxu0
      %v1540 = vadd.f32 %v1337, %v1502
      %v1541 = vadd.f32 %v1338, %v1505
      %v1542 = vadd.f32 %v1339, %v1510
      %v1543 = vadd.f32 %v1340, %v1513
      %v1544 = vadd.f32 %v1341, %v1518
      %v1545 = vadd.f32 %v1342, %v1521
      %v1546 = vadd.f32 %v1343, %v1526
      %v1547 = vadd.f32 %v1344, %v1529
      %v1548 = vadd.f32 %v1345, %v1534
      %v1549 = vadd.f32 %v1346, %v1537
      %v1550 = vld [vmem:[%s208 + $0x30] sm:$0x7]
      %s1551 = scalar_lea.vmem %s212, 448
      %v1552 = vld [vmem:[%s1551] sm:$0xf]
      %v1553 = vld [vmem:[%s1551 + $0x4] sm:$0xf]
      %v1554 = vld [vmem:[%s1551 + $0x8] sm:$0xf]
      %v1555 = vld [vmem:[%s1551 + $0xc] sm:$0xf]
      %v1556 = vld [vmem:[%s1551 + $0x10] sm:$0xf]
      %v1557 = vld [vmem:[%s1551 + $0x14] sm:$0xf]
      %v1558 = vld [vmem:[%s1551 + $0x18] sm:$0xf]
      %v1559 = vld [vmem:[%s1551 + $0x1c] sm:$0xf]
      %v1560 = vld [vmem:[%s1551 + $0x20] sm:$0xf]
      %v1561 = vld [vmem:[%s1551 + $0x24] sm:$0xf]
      %v1562 = vld [vmem:[%s1551 + $0x28] sm:$0xf]
      %v1563 = vld [vmem:[%s1551 + $0x2c] sm:$0xf]
      %v1564 = vld [vmem:[%s1551 + $0x30] sm:$0xf]
      %v1565 = vld [vmem:[%s1551 + $0x34] sm:$0xf]
      %v1566 = vld [vmem:[%s1551 + $0x38] sm:$0xf]
      %v1567 = vld [vmem:[%s1551 + $0x3c] sm:$0xf]
      %v1569 = vunpack.c.l.b16 %v1550
      %v1570 = vpack.c.b16 %v1569, %v1569
      %vm1571 = vsmask.f32 5376
      %v1573 = vshrl.u32 %v1397, 16
      %v1575 = vrot.slane %v1573, 2
      %v1576 = vshll.u32 %v1397, 16
      %v1578 = vrot.slane %v1576, 3
      %v1579 = vor.u32 %v1575, %v1578
      %v1581 = vshrl.u32 %v1398, 16
      %v1583 = vrot.slane %v1581, 2
      %v1584 = vshll.u32 %v1398, 16
      %v1586 = vrot.slane %v1584, 3
      %v1587 = vor.u32 %v1583, %v1586
      %v1588 = vsel %vm1571, %v1579, %v1587
      %v1590 = vshrl.u32 %v1399, 16
      %v1592 = vrot.slane %v1590, 2
      %v1593 = vshll.u32 %v1399, 16
      %v1595 = vrot.slane %v1593, 3
      %v1596 = vor.u32 %v1592, %v1595
      %v1597 = vsel %vm1571, %v1587, %v1596
      %v1599 = vshrl.u32 %v1400, 16
      %v1601 = vrot.slane %v1599, 2
      %v1602 = vshll.u32 %v1400, 16
      %v1604 = vrot.slane %v1602, 3
      %v1605 = vor.u32 %v1601, %v1604
      %v1606 = vsel %vm1571, %v1596, %v1605
      %v1608 = vshrl.u32 %v1401, 16
      %v1610 = vrot.slane %v1608, 2
      %v1611 = vshll.u32 %v1401, 16
      %v1613 = vrot.slane %v1611, 3
      %v1614 = vor.u32 %v1610, %v1613
      %v1615 = vsel %vm1571, %v1605, %v1614
      %v1617 = vshrl.u32 %v1570, 16
      %v1619 = vrot.slane %v1617, 2
      %v1620 = vshll.u32 %v1570, 16
      %v1622 = vrot.slane %v1620, 3
      %v1623 = vor.u32 %v1619, %v1622
      %v1624 = vsel %vm1571, %v1614, %v1623
      %v1646 = vunpack.c.l.b16 %v1552
      %v1647 = vunpack.c.l.b16 %v1553
      %v1648 = vunpack.c.l.b16 %v1554
      %v1649 = vunpack.c.l.b16 %v1555
      %v1650 = vunpack.c.l.b16 %v1556
      %v1651 = vunpack.c.l.b16 %v1557
      %v1652 = vunpack.c.l.b16 %v1558
      %v1653 = vunpack.c.l.b16 %v1559
      %v1654 = vunpack.c.l.b16 %v1560
      %v1655 = vunpack.c.l.b16 %v1561
      %v1656 = vunpack.c.l.b16 %v1562
      %v1657 = vunpack.c.l.b16 %v1563
      %v1658 = vunpack.c.l.b16 %v1564
      %v1659 = vunpack.c.l.b16 %v1565
      %v1660 = vunpack.c.l.b16 %v1566
      %v1661 = vunpack.c.l.b16 %v1567
      %v1662 = vpack.c.b16 %v1647, %v1646
      %v1663 = vpack.c.b16 %v1649, %v1648
      %v1664 = vpack.c.b16 %v1651, %v1650
      %v1665 = vpack.c.b16 %v1653, %v1652
      %v1666 = vpack.c.b16 %v1655, %v1654
      %v1667 = vpack.c.b16 %v1657, %v1656
      %v1668 = vpack.c.b16 %v1659, %v1658
      %v1669 = vpack.c.b16 %v1661, %v1660
      %1678 = vmatprep.subr.bf16.mxu0 0
      %1679 = vmatpush1.bf16.msra.mxu0 %v1662
      %1680 = vmatprep.subr.bf16.mxu0 0
      %1681 = vmatpush1.bf16.msra.mxu0 %v1663
      %1682 = vmatprep.subr.bf16.mxu0 0
      %1683 = vmatpush1.bf16.msra.mxu0 %v1664
      %1684 = vmatprep.subr.bf16.mxu0 0
      %1685 = vmatpush1.bf16.msra.mxu0 %v1665
      %1686 = vmatprep.subr.bf16.mxu0 0
      %1687 = vmatpush1.bf16.msra.mxu0 %v1666
      %1688 = vmatprep.subr.bf16.mxu0 0
      %1689 = vmatpush1.bf16.msra.mxu0 %v1667
      %1690 = vmatprep.subr.bf16.mxu0 0
      %1691 = vmatpush1.bf16.msra.mxu0 %v1668
      %1692 = vmatprep.subr.bf16.mxu0 0
      %1693 = vmatpush1.bf16.msra.mxu0 %v1669
      %1694 = vmatprep.subr.bf16.mxu0 0
      %1695 = vmatpush1.bf16.msra.mxu0 0
      %1696 = vmatprep.subr.bf16.mxu0 0
      %1697 = vmatpush1.bf16.msra.mxu0 0
      %1698 = vmatprep.subr.bf16.mxu0 0
      %1699 = vmatpush1.bf16.msra.mxu0 0
      %1700 = vmatprep.subr.bf16.mxu0 0
      %1701 = vmatpush1.bf16.msra.mxu0 0
      %1702 = vmatprep.subr.bf16.mxu0 0
      %1703 = vmatpush1.bf16.msra.mxu0 0
      %1704 = vmatprep.subr.bf16.mxu0 0
      %1705 = vmatpush1.bf16.msra.mxu0 0
      %1706 = vmatprep.subr.bf16.mxu0 0
      %1707 = vmatpush1.bf16.msra.mxu0 0
      %1708 = vmatprep.subr.bf16.mxu0 0
      %1709 = vmatpush1.bf16.msra.mxu0 0
      %1710 = vmatprep.mubr.bf16.mxu0 0
      %1711 = vmatmul.mubr.bf16.gmra.mrb[0].mxu0 %v1588
      %v1712 = vpop.f32.mrb[0].mxu0
      %v1713 = vadd.f32 0.0, %v1712
      %v1714 = vpop.f32.mrb[0].mxu0
      %v1715 = vpop.f32.mrb[0].mxu0
      %v1716 = vadd.f32 0.0, %v1715
      %v1717 = vpop.f32.mrb[0].mxu0
      %1718 = vmatprep.mubr.bf16.mxu0 0
      %1719 = vmatmul.mubr.bf16.gmra.mrb[0].mxu0 %v1597
      %v1720 = vpop.f32.mrb[0].mxu0
      %v1721 = vadd.f32 0.0, %v1720
      %v1722 = vpop.f32.mrb[0].mxu0
      %v1723 = vpop.f32.mrb[0].mxu0
      %v1724 = vadd.f32 0.0, %v1723
      %v1725 = vpop.f32.mrb[0].mxu0
      %1726 = vmatprep.mubr.bf16.mxu0 0
      %1727 = vmatmul.mubr.bf16.gmra.mrb[0].mxu0 %v1606
      %v1728 = vpop.f32.mrb[0].mxu0
      %v1729 = vadd.f32 0.0, %v1728
      %v1730 = vpop.f32.mrb[0].mxu0
      %v1731 = vpop.f32.mrb[0].mxu0
      %v1732 = vadd.f32 0.0, %v1731
      %v1733 = vpop.f32.mrb[0].mxu0
      %1734 = vmatprep.mubr.bf16.mxu0 0
      %1735 = vmatmul.mubr.bf16.gmra.mrb[0].mxu0 %v1615
      %v1736 = vpop.f32.mrb[0].mxu0
      %v1737 = vadd.f32 0.0, %v1736
      %v1738 = vpop.f32.mrb[0].mxu0
      %v1739 = vpop.f32.mrb[0].mxu0
      %v1740 = vadd.f32 0.0, %v1739
      %v1741 = vpop.f32.mrb[0].mxu0
      %1742 = vmatprep.mubr.bf16.mxu0 0
      %1743 = vmatmul.mubr.bf16.gmra.mrb[0].mxu0 %v1624
      %v1744 = vpop.f32.mrb[0].mxu0
      %v1745 = vadd.f32 0.0, %v1744
      %v1746 = vpop.f32.mrb[0].mxu0
      %v1747 = vpop.f32.mrb[0].mxu0
      %v1748 = vadd.f32 0.0, %v1747
      %v1749 = vpop.f32.mrb[0].mxu0
      %1750 = vdwg.mxu0
      %v1751 = vadd.f32 %v1540, %v1713
      %v1752 = vadd.f32 %v1541, %v1716
      %v1753 = vadd.f32 %v1542, %v1721
      %v1754 = vadd.f32 %v1543, %v1724
      %v1755 = vadd.f32 %v1544, %v1729
      %v1756 = vadd.f32 %v1545, %v1732
      %v1757 = vadd.f32 %v1546, %v1737
      %v1758 = vadd.f32 %v1547, %v1740
      %v1759 = vadd.f32 %v1548, %v1745
      %v1760 = vadd.f32 %v1549, %v1748
      %v1761 = vld [vmem:[%s208 + $0x8] sm:$0x8]
      %s1762 = scalar_lea.vmem %s212, 512
      %v1763 = vld [vmem:[%s1762] sm:$0xf]
      %v1764 = vld [vmem:[%s1762 + $0x4] sm:$0xf]
      %v1765 = vld [vmem:[%s1762 + $0x8] sm:$0xf]
      %v1766 = vld [vmem:[%s1762 + $0xc] sm:$0xf]
      %v1767 = vld [vmem:[%s1762 + $0x10] sm:$0xf]
      %v1768 = vld [vmem:[%s1762 + $0x14] sm:$0xf]
      %v1769 = vld [vmem:[%s1762 + $0x18] sm:$0xf]
      %v1770 = vld [vmem:[%s1762 + $0x1c] sm:$0xf]
      %v1771 = vld [vmem:[%s1762 + $0x20] sm:$0xf]
      %v1772 = vld [vmem:[%s1762 + $0x24] sm:$0xf]
      %v1773 = vld [vmem:[%s1762 + $0x28] sm:$0xf]
      %v1774 = vld [vmem:[%s1762 + $0x2c] sm:$0xf]
      %v1775 = vld [vmem:[%s1762 + $0x30] sm:$0xf]
      %v1776 = vld [vmem:[%s1762 + $0x34] sm:$0xf]
      %v1777 = vld [vmem:[%s1762 + $0x38] sm:$0xf]
      %v1778 = vld [vmem:[%s1762 + $0x3c] sm:$0xf]
      %v1780 = vunpack.c.l.b16 %v1761
      %v1781 = vpack.c.b16 %v1387, %v1780
      %vm1782 = vcmask 1044480
      %v1783 = vrot.slane %v1781, 3
      %v1784 = vrot.slane %v1398, 3
      %v1785 = vsel %vm1782, %v1783, %v1784
      %v1786 = vrot.slane %v1399, 3
      %v1787 = vsel %vm1782, %v1784, %v1786
      %v1788 = vrot.slane %v1400, 3
      %v1789 = vsel %vm1782, %v1786, %v1788
      %v1790 = vrot.slane %v1401, 3
      %v1791 = vsel %vm1782, %v1788, %v1790
      %v1792 = vrot.slane %v1570, 3
      %v1793 = vsel %vm1782, %v1790, %v1792
      %v1815 = vunpack.c.l.b16 %v1763
      %v1816 = vunpack.c.l.b16 %v1764
      %v1817 = vunpack.c.l.b16 %v1765
      %v1818 = vunpack.c.l.b16 %v1766
      %v1819 = vunpack.c.l.b16 %v1767
      %v1820 = vunpack.c.l.b16 %v1768
      %v1821 = vunpack.c.l.b16 %v1769
      %v1822 = vunpack.c.l.b16 %v1770
      %v1823 = vunpack.c.l.b16 %v1771
      %v1824 = vunpack.c.l.b16 %v1772
      %v1825 = vunpack.c.l.b16 %v1773
      %v1826 = vunpack.c.l.b16 %v1774
      %v1827 = vunpack.c.l.b16 %v1775
      %v1828 = vunpack.c.l.b16 %v1776
      %v1829 = vunpack.c.l.b16 %v1777
      %v1830 = vunpack.c.l.b16 %v1778
      %v1831 = vpack.c.b16 %v1816, %v1815
      %v1832 = vpack.c.b16 %v1818, %v1817
      %v1833 = vpack.c.b16 %v1820, %v1819
      %v1834 = vpack.c.b16 %v1822, %v1821
      %v1835 = vpack.c.b16 %v1824, %v1823
      %v1836 = vpack.c.b16 %v1826, %v1825
      %v1837 = vpack.c.b16 %v1828, %v1827
      %v1838 = vpack.c.b16 %v1830, %v1829
      %1847 = vmatprep.subr.bf16.mxu0 0
      %1848 = vmatpush1.bf16.msra.mxu0 %v1831
      %1849 = vmatprep.subr.bf16.mxu0 0
      %1850 = vmatpush1.bf16.msra.mxu0 %v1832
      %1851 = vmatprep.subr.bf16.mxu0 0
      %1852 = vmatpush1.bf16.msra.mxu0 %v1833
      %1853 = vmatprep.subr.bf16.mxu0 0
      %1854 = vmatpush1.bf16.msra.mxu0 %v1834
      %1855 = vmatprep.subr.bf16.mxu0 0
      %1856 = vmatpush1.bf16.msra.mxu0 %v1835
      %1857 = vmatprep.subr.bf16.mxu0 0
      %1858 = vmatpush1.bf16.msra.mxu0 %v1836
      %1859 = vmatprep.subr.bf16.mxu0 0
      %1860 = vmatpush1.bf16.msra.mxu0 %v1837
      %1861 = vmatprep.subr.bf16.mxu0 0
      %1862 = vmatpush1.bf16.msra.mxu0 %v1838
      %1863 = vmatprep.subr.bf16.mxu0 0
      %1864 = vmatpush1.bf16.msra.mxu0 0
      %1865 = vmatprep.subr.bf16.mxu0 0
      %1866 = vmatpush1.bf16.msra.mxu0 0
      %1867 = vmatprep.subr.bf16.mxu0 0
      %1868 = vmatpush1.bf16.msra.mxu0 0
      %1869 = vmatprep.subr.bf16.mxu0 0
      %1870 = vmatpush1.bf16.msra.mxu0 0
      %1871 = vmatprep.subr.bf16.mxu0 0
      %1872 = vmatpush1.bf16.msra.mxu0 0
      %1873 = vmatprep.subr.bf16.mxu0 0
      %1874 = vmatpush1.bf16.msra.mxu0 0
      %1875 = vmatprep.subr.bf16.mxu0 0
      %1876 = vmatpush1.bf16.msra.mxu0 0
      %1877 = vmatprep.subr.bf16.mxu0 0
      %1878 = vmatpush1.bf16.msra.mxu0 0
      %1879 = vmatprep.mubr.bf16.mxu0 0
      %1880 = vmatmul.mubr.bf16.gmra.mrb[0].mxu0 %v1785
      %v1881 = vpop.f32.mrb[0].mxu0
      %v1882 = vadd.f32 0.0, %v1881
      %v1883 = vpop.f32.mrb[0].mxu0
      %v1884 = vpop.f32.mrb[0].mxu0
      %v1885 = vadd.f32 0.0, %v1884
      %v1886 = vpop.f32.mrb[0].mxu0
      %1887 = vmatprep.mubr.bf16.mxu0 0
      %1888 = vmatmul.mubr.bf16.gmra.mrb[0].mxu0 %v1787
      %v1889 = vpop.f32.mrb[0].mxu0
      %v1890 = vadd.f32 0.0, %v1889
      %v1891 = vpop.f32.mrb[0].mxu0
      %v1892 = vpop.f32.mrb[0].mxu0
      %v1893 = vadd.f32 0.0, %v1892
      %v1894 = vpop.f32.mrb[0].mxu0
      %1895 = vmatprep.mubr.bf16.mxu0 0
      %1896 = vmatmul.mubr.bf16.gmra.mrb[0].mxu0 %v1789
      %v1897 = vpop.f32.mrb[0].mxu0
      %v1898 = vadd.f32 0.0, %v1897
      %v1899 = vpop.f32.mrb[0].mxu0
      %v1900 = vpop.f32.mrb[0].mxu0
      %v1901 = vadd.f32 0.0, %v1900
      %v1902 = vpop.f32.mrb[0].mxu0
      %1903 = vmatprep.mubr.bf16.mxu0 0
      %1904 = vmatmul.mubr.bf16.gmra.mrb[0].mxu0 %v1791
      %v1905 = vpop.f32.mrb[0].mxu0
      %v1906 = vadd.f32 0.0, %v1905
      %v1907 = vpop.f32.mrb[0].mxu0
      %v1908 = vpop.f32.mrb[0].mxu0
      %v1909 = vadd.f32 0.0, %v1908
      %v1910 = vpop.f32.mrb[0].mxu0
      %1911 = vmatprep.mubr.bf16.mxu0 0
      %1912 = vmatmul.mubr.bf16.gmra.mrb[0].mxu0 %v1793
      %v1913 = vpop.f32.mrb[0].mxu0
      %v1914 = vadd.f32 0.0, %v1913
      %v1915 = vpop.f32.mrb[0].mxu0
      %v1916 = vpop.f32.mrb[0].mxu0
      %v1917 = vadd.f32 0.0, %v1916
      %v1918 = vpop.f32.mrb[0].mxu0
      %1919 = vdwg.mxu0
      %v1920 = vadd.f32 %v1751, %v1882
      %v1921 = vadd.f32 %v1752, %v1885
      %v1922 = vadd.f32 %v1753, %v1890
      %v1923 = vadd.f32 %v1754, %v1893
      %v1924 = vadd.f32 %v1755, %v1898
      %v1925 = vadd.f32 %v1756, %v1901
      %v1926 = vadd.f32 %v1757, %v1906
      %v1927 = vadd.f32 %v1758, %v1909
      %v1928 = vadd.f32 %v1759, %v1914
      %v1929 = vadd.f32 %v1760, %v1917
      %v1930 = vld [vmem:[%s216] sm:$0x1]
      %v1931 = vlaneseq
      %v1932 = vshrl.u32 %v1931, 7
      %v1933 = vsub.s32 0, %v1932
      %v1934 = vrot.slane %v1930, %v1933
      %v1935 = vmul.f32 %v1920, %v1934
      %v1936 = vmul.f32 %v1921, %v1934
      %v1937 = vmul.f32 %v1922, %v1934
      %v1938 = vmul.f32 %v1923, %v1934
      %v1939 = vmul.f32 %v1924, %v1934
      %v1940 = vmul.f32 %v1925, %v1934
      %v1941 = vmul.f32 %v1926, %v1934
      %v1942 = vmul.f32 %v1927, %v1934
      %v1943 = vmul.f32 %v1928, %v1934
      %v1944 = vmul.f32 %v1929, %v1934
      %v1945 = vld [vmem:[%s216 + $0x1] sm:$0x1]
      %v1946 = vlaneseq
      %v1947 = vshrl.u32 %v1946, 7
      %v1948 = vsub.s32 0, %v1947
      %v1949 = vrot.slane %v1945, %v1948
      %v1950 = vadd.f32 %v1935, %v1949
      %v1951 = vadd.f32 %v1936, %v1949
      %v1952 = vadd.f32 %v1937, %v1949
      %v1953 = vadd.f32 %v1938, %v1949
      %v1954 = vadd.f32 %v1939, %v1949
      %v1955 = vadd.f32 %v1940, %v1949
      %v1956 = vadd.f32 %v1941, %v1949
      %v1957 = vadd.f32 %v1942, %v1949
      %v1958 = vadd.f32 %v1943, %v1949
      %v1959 = vadd.f32 %v1944, %v1949
      %v1960 = vmax.f32 %v1950, 0.0
      %v1961 = vmax.f32 %v1951, 0.0
      %v1962 = vmax.f32 %v1952, 0.0
      %v1963 = vmax.f32 %v1953, 0.0
      %v1964 = vmax.f32 %v1954, 0.0
      %v1965 = vmax.f32 %v1955, 0.0
      %v1966 = vmax.f32 %v1956, 0.0
      %v1967 = vmax.f32 %v1957, 0.0
      %v1968 = vmax.f32 %v1958, 0.0
      %v1969 = vmax.f32 %v1959, 0.0
      %v1970 = vpack.c.bf16 %v1961, %v1960
      %v1971 = vpack.c.bf16 %v1963, %v1962
      %v1972 = vpack.c.bf16 %v1965, %v1964
      %v1973 = vpack.c.bf16 %v1967, %v1966
      %v1974 = vpack.c.bf16 %v1969, %v1968
      %v1980 = vunpack.c.l.b16 %v1970
      %v1981 = vunpack.c.h.b16 %v1970
      %v1982 = vunpack.c.l.b16 %v1971
      %v1983 = vunpack.c.h.b16 %v1971
      %v1984 = vunpack.c.l.b16 %v1972
      %v1985 = vunpack.c.h.b16 %v1972
      %v1986 = vunpack.c.l.b16 %v1973
      %v1987 = vunpack.c.h.b16 %v1973
      %v1988 = vunpack.c.l.b16 %v1974
      %v1989 = vunpack.c.h.b16 %v1974
      %v1990 = vpack.c.b16 %v1980, %v1980
      %v1991 = vpack.c.b16 %v1981, %v1981
      %v1992 = vpack.c.b16 %v1982, %v1982
      %v1993 = vpack.c.b16 %v1983, %v1983
      %v1994 = vpack.c.b16 %v1984, %v1984
      %v1995 = vpack.c.b16 %v1985, %v1985
      %v1996 = vpack.c.b16 %v1986, %v1986
      %v1997 = vpack.c.b16 %v1987, %v1987
      %v1998 = vpack.c.b16 %v1988, %v1988
      %v1999 = vpack.c.b16 %v1989, %v1989
      %2010 = vst [vmem:[%s224] sm:$0xf] %v1990
      %2011 = vst [vmem:[%s224 + $0x4] sm:$0xf] %v1991
      %2012 = vst [vmem:[%s224 + $0x8] sm:$0xf] %v1992
      %2013 = vst [vmem:[%s224 + $0xc] sm:$0xf] %v1993
      %2014 = vst [vmem:[%s224 + $0x10] sm:$0xf] %v1994
      %2015 = vst [vmem:[%s224 + $0x14] sm:$0xf] %v1995
      %2016 = vst [vmem:[%s224 + $0x18] sm:$0xf] %v1996
      %2017 = vst [vmem:[%s224 + $0x1c] sm:$0xf] %v1997
      %2018 = vst [vmem:[%s224 + $0x20] sm:$0xf] %v1998
      %2019 = vst [vmem:[%s224 + $0x24] sm:$0xf] %v1999
      %p2020 = scmp.lt.s32.totalorder %s18, 1
      %s2021 = scalar_select %p2020, %s18, 1
      %p2022 = scmp.lt.s32.totalorder %s19, 0
      %s2023 = scalar_select %p2022, %s19, 0
      %s2024 = smul.addr %s2021, 10
      %s2025 = sadd.s32 %s2023, %s2024
      %s2026 = smul.addr %s2025, 4
      %s2027 = scalar_lea.vmem %s3, %s2026
      // Predicated region
      $region33: #{bottleneck_forward.4} parent=31 // pred_check
        %p2028 = pneg %p124
      $region34: #{bottleneck_forward.4} parent=31 // pred_check_branch
        %2030 = sbr.rel (%p2028) target = $region36
      $region35: #{bottleneck_forward.4} parent=31 // pred_region
        _
      $region36: #{bottleneck_forward.4} parent=31 // pred_fallthru
        _
    $region32: #{bottleneck_forward.4} parent=5 // pred_fallthru
      _
    %p2031 = scmp.le.s32.totalorder 2, %s9
    // Predicated region
    $region37: #{bottleneck_forward.4} parent=5 // pred_check
      %p2032 = pneg %p2031
    $region38: #{bottleneck_forward.4} parent=5 // pred_check_branch
      %2034 = sbr.rel (%p2032) target = $region40
    $region39: #{bottleneck_forward.4} parent=5 // pred_region
      %s2035 = ssub.s32 %s9, 2
      // Predicated region
      $region41: #{bottleneck_forward.4} parent=39 // pred_check
        %p2036 = pneg %p130
      $region42: #{bottleneck_forward.4} parent=39 // pred_check_branch
        %2038 = sbr.rel (%p2036) target = $region44
      $region43: #{bottleneck_forward.4} parent=39 // pred_region
        %p2039 = scmp.lt.s32.totalorder %s20, 1
        %s2040 = scalar_select %p2039, %s20, 1
        %p2041 = scmp.lt.s32.totalorder %s21, 0
        %s2042 = scalar_select %p2041, %s21, 0
        %s2043 = smul.addr %s2040, 10
        %s2044 = sadd.s32 %s2042, %s2043
        %s2045 = smul.addr %s2044, 4
        %s2046 = scalar_lea.vmem %s3, %s2045
      $region44: #{bottleneck_forward.4} parent=39 // pred_fallthru
        _
    $region40: #{bottleneck_forward.4} parent=5 // pred_fallthru
      _
  $region6: #{bottleneck_forward.4} parent=0 // loop_footer
    %s13 = sadd.s32 1, %s9
  $region7: #{bottleneck_forward.4} parent=0 // loop_footer_branch
    %8 = sbr.rel target = $region3
  $region8: #{bottleneck_forward.4} parent=0 // loop_exit
    _

// kernel: bottleneck_forward.5
$region0: #{bottleneck_forward.5}
  #allocation0 [shape = 'u32[]', space=smem, size = 0x4, offset = 0x4, fixed_abs, tag = 'smem constant byte address 0x4 - core index']
  #allocation1 [shape = 'u32[144,128]{1,0:T(1,128)}', space=vmem, size = 0x12000, scoped, tag = 'internal scratch']
  %s0 = inlined_call_operand.vmem [shape: bf16[128,128], index: 0, kind: input, shape index: {}]
  %s1 = inlined_call_operand.vmem [shape: bf16[128,256], index: 1, kind: input, shape index: {}]
  %s2 = inlined_call_operand.vmem [shape: bf16[128,64], index: 2, kind: input, shape index: {}]
  %s3 = inlined_call_operand.vmem [shape: bf16[64,256], index: 3, kind: input, shape index: {}]
  %s4 = inlined_call_operand.vmem [shape: f32[4,256], index: 4, kind: input, shape index: {}]
  %s5 = inlined_call_operand.hbm [shape: f32[128,256], index: 5, kind: output, shape index: {}]
  %s6 = sld [smem:[#allocation0]]
  $region30: #{bottleneck_forward.5} parent=0
    _
  %s8 = ssub.s32 1, %s6
  %s9 = scalar_select 0, %s8, %s6
  $region1: #{bottleneck_forward.5} parent=0
    #allocation2 [shape = 'u8[131072]{0}', space=vmem, size = 0x20000, scoped, tag = 'output window, operand 0, single buffered']
    #allocation3 [shape = 's32[1]{0}', space=sflag, size = 0x4, scoped, tag = 'scoped memory for bottleneck_forward.5']
    %10 = vsyncpa [#allocation3], 0
    // Predicated region
    $region2: #{bottleneck_forward.5} parent=1 // pred_check
      _
    $region3: #{bottleneck_forward.5} parent=1 // pred_check_branch
      %12 = sbr.rel (0) target = $region5
    $region4: #{bottleneck_forward.5} parent=1 // pred_region
      _
    $region5: #{bottleneck_forward.5} parent=1 // pred_fallthru
      _
    // Predicated region
    $region6: #{bottleneck_forward.5} parent=1 // pred_check
      _
    $region7: #{bottleneck_forward.5} parent=1 // pred_check_branch
      %14 = sbr.rel (0) target = $region9
    $region8: #{bottleneck_forward.5} parent=1 // pred_region
      _
    $region9: #{bottleneck_forward.5} parent=1 // pred_fallthru
      _
    // Predicated region
    $region10: #{bottleneck_forward.5} parent=1 // pred_check
      _
    $region11: #{bottleneck_forward.5} parent=1 // pred_check_branch
      %16 = sbr.rel (0) target = $region13
    $region12: #{bottleneck_forward.5} parent=1 // pred_region
      _
    $region13: #{bottleneck_forward.5} parent=1 // pred_fallthru
      _
    // Predicated region
    $region14: #{bottleneck_forward.5} parent=1 // pred_check
      _
    $region15: #{bottleneck_forward.5} parent=1 // pred_check_branch
      %18 = sbr.rel (0) target = $region17
    $region16: #{bottleneck_forward.5} parent=1 // pred_region
      _
    $region17: #{bottleneck_forward.5} parent=1 // pred_fallthru
      _
    // Predicated region
    $region18: #{bottleneck_forward.5} parent=1 // pred_check
      _
    $region19: #{bottleneck_forward.5} parent=1 // pred_check_branch
      %20 = sbr.rel (0) target = $region21
    $region20: #{bottleneck_forward.5} parent=1 // pred_region
      _
    $region21: #{bottleneck_forward.5} parent=1 // pred_fallthru
      _
    %v22 = vld [vmem:[%s0] sm:$0xf]
    %v23 = vld [vmem:[%s0 + $0x4] sm:$0xf]
    %v24 = vld [vmem:[%s0 + $0x8] sm:$0xf]
    %v25 = vld [vmem:[%s0 + $0xc] sm:$0xf]
    %v26 = vld [vmem:[%s0 + $0x10] sm:$0xf]
    %v27 = vld [vmem:[%s0 + $0x14] sm:$0xf]
    %v28 = vld [vmem:[%s0 + $0x18] sm:$0xf]
    %v29 = vld [vmem:[%s0 + $0x1c] sm:$0xf]
    %v30 = vld [vmem:[%s0 + $0x20] sm:$0xf]
    %v31 = vld [vmem:[%s0 + $0x24] sm:$0xf]
    %v32 = vld [vmem:[%s0 + $0x28] sm:$0xf]
    %v33 = vld [vmem:[%s0 + $0x2c] sm:$0xf]
    %v34 = vld [vmem:[%s0 + $0x30] sm:$0xf]
    %v35 = vld [vmem:[%s0 + $0x34] sm:$0xf]
    %v36 = vld [vmem:[%s0 + $0x38] sm:$0xf]
    %v37 = vld [vmem:[%s0 + $0x3c] sm:$0xf]
    %v38 = vld [vmem:[%s1] sm:$0xff]
    %v39 = vld [vmem:[%s1 + $0x8] sm:$0xff]
    %v40 = vld [vmem:[%s1 + $0x10] sm:$0xff]
    %v41 = vld [vmem:[%s1 + $0x18] sm:$0xff]
    %v42 = vld [vmem:[%s1 + $0x20] sm:$0xff]
    %v43 = vld [vmem:[%s1 + $0x28] sm:$0xff]
    %v44 = vld [vmem:[%s1 + $0x30] sm:$0xff]
    %v45 = vld [vmem:[%s1 + $0x38] sm:$0xff]
    %v46 = vld [vmem:[%s1 + $0x40] sm:$0xff]
    %v47 = vld [vmem:[%s1 + $0x48] sm:$0xff]
    %v48 = vld [vmem:[%s1 + $0x50] sm:$0xff]
    %v49 = vld [vmem:[%s1 + $0x58] sm:$0xff]
    %v50 = vld [vmem:[%s1 + $0x60] sm:$0xff]
    %v51 = vld [vmem:[%s1 + $0x68] sm:$0xff]
    %v52 = vld [vmem:[%s1 + $0x70] sm:$0xff]
    %v53 = vld [vmem:[%s1 + $0x78] sm:$0xff]
    %v70 = vunpack.c.l.b16 %v22
    %v71 = vunpack.c.l.b16 %v23
    %v72 = vunpack.c.l.b16 %v24
    %v73 = vunpack.c.l.b16 %v25
    %v74 = vunpack.c.l.b16 %v26
    %v75 = vunpack.c.l.b16 %v27
    %v76 = vunpack.c.l.b16 %v28
    %v77 = vunpack.c.l.b16 %v29
    %v78 = vunpack.c.l.b16 %v30
    %v79 = vunpack.c.l.b16 %v31
    %v80 = vunpack.c.l.b16 %v32
    %v81 = vunpack.c.l.b16 %v33
    %v82 = vunpack.c.l.b16 %v34
    %v83 = vunpack.c.l.b16 %v35
    %v84 = vunpack.c.l.b16 %v36
    %v85 = vunpack.c.l.b16 %v37
    %v86 = vpack.c.b16 %v71, %v70
    %v87 = vpack.c.b16 %v73, %v72
    %v88 = vpack.c.b16 %v75, %v74
    %v89 = vpack.c.b16 %v77, %v76
    %v90 = vpack.c.b16 %v79, %v78
    %v91 = vpack.c.b16 %v81, %v80
    %v92 = vpack.c.b16 %v83, %v82
    %v93 = vpack.c.b16 %v85, %v84
    %v118 = vunpack.c.l.b16 %v38
    %v119 = vunpack.c.h.b16 %v38
    %v120 = vunpack.c.l.b16 %v39
    %v121 = vunpack.c.h.b16 %v39
    %v122 = vunpack.c.l.b16 %v40
    %v123 = vunpack.c.h.b16 %v40
    %v124 = vunpack.c.l.b16 %v41
    %v125 = vunpack.c.h.b16 %v41
    %v126 = vunpack.c.l.b16 %v42
    %v127 = vunpack.c.h.b16 %v42
    %v128 = vunpack.c.l.b16 %v43
    %v129 = vunpack.c.h.b16 %v43
    %v130 = vunpack.c.l.b16 %v44
    %v131 = vunpack.c.h.b16 %v44
    %v132 = vunpack.c.l.b16 %v45
    %v133 = vunpack.c.h.b16 %v45
    %v134 = vunpack.c.l.b16 %v46
    %v135 = vunpack.c.h.b16 %v46
    %v136 = vunpack.c.l.b16 %v47
    %v137 = vunpack.c.h.b16 %v47
    %v138 = vunpack.c.l.b16 %v48
    %v139 = vunpack.c.h.b16 %v48
    %v140 = vunpack.c.l.b16 %v49
    %v141 = vunpack.c.h.b16 %v49
    %v142 = vunpack.c.l.b16 %v50
    %v143 = vunpack.c.h.b16 %v50
    %v144 = vunpack.c.l.b16 %v51
    %v145 = vunpack.c.h.b16 %v51
    %v146 = vunpack.c.l.b16 %v52
    %v147 = vunpack.c.h.b16 %v52
    %v148 = vunpack.c.l.b16 %v53
    %v149 = vunpack.c.h.b16 %v53
    %v150 = vpack.c.b16 %v120, %v118
    %v151 = vpack.c.b16 %v121, %v119
    %v152 = vpack.c.b16 %v124, %v122
    %v153 = vpack.c.b16 %v125, %v123
    %v154 = vpack.c.b16 %v128, %v126
    %v155 = vpack.c.b16 %v129, %v127
    %v156 = vpack.c.b16 %v132, %v130
    %v157 = vpack.c.b16 %v133, %v131
    %v158 = vpack.c.b16 %v136, %v134
    %v159 = vpack.c.b16 %v137, %v135
    %v160 = vpack.c.b16 %v140, %v138
    %v161 = vpack.c.b16 %v141, %v139
    %v162 = vpack.c.b16 %v144, %v142
    %v163 = vpack.c.b16 %v145, %v143
    %v164 = vpack.c.b16 %v148, %v146
    %v165 = vpack.c.b16 %v149, %v147
    %182 = vmatprep.subr.bf16.mxu0 %v151
    %183 = vmatpush1.bf16.msra.mxu0 %v150
    %184 = vmatprep.subr.bf16.mxu0 %v153
    %185 = vmatpush1.bf16.msra.mxu0 %v152
    %186 = vmatprep.subr.bf16.mxu0 %v155
    %187 = vmatpush1.bf16.msra.mxu0 %v154
    %188 = vmatprep.subr.bf16.mxu0 %v157
    %189 = vmatpush1.bf16.msra.mxu0 %v156
    %190 = vmatprep.subr.bf16.mxu0 %v159
    %191 = vmatpush1.bf16.msra.mxu0 %v158
    %192 = vmatprep.subr.bf16.mxu0 %v161
    %193 = vmatpush1.bf16.msra.mxu0 %v160
    %194 = vmatprep.subr.bf16.mxu0 %v163
    %195 = vmatpush1.bf16.msra.mxu0 %v162
    %196 = vmatprep.subr.bf16.mxu0 %v165
    %197 = vmatpush1.bf16.msra.mxu0 %v164
    %198 = vmatprep.subr.bf16.mxu0 0
    %199 = vmatpush1.bf16.msra.mxu0 0
    %200 = vmatprep.subr.bf16.mxu0 0
    %201 = vmatpush1.bf16.msra.mxu0 0
    %202 = vmatprep.subr.bf16.mxu0 0
    %203 = vmatpush1.bf16.msra.mxu0 0
    %204 = vmatprep.subr.bf16.mxu0 0
    %205 = vmatpush1.bf16.msra.mxu0 0
    %206 = vmatprep.subr.bf16.mxu0 0
    %207 = vmatpush1.bf16.msra.mxu0 0
    %208 = vmatprep.subr.bf16.mxu0 0
    %209 = vmatpush1.bf16.msra.mxu0 0
    %210 = vmatprep.subr.bf16.mxu0 0
    %211 = vmatpush1.bf16.msra.mxu0 0
    %212 = vmatprep.subr.bf16.mxu0 0
    %213 = vmatpush1.bf16.msra.mxu0 0
    %214 = vmatprep.mubr.bf16.mxu0 0
    %215 = vmatmul.mubr.bf16.gmra.mrb[0].mxu0 %v86
    %v216 = vpop.f32.mrb[0].mxu0
    %v217 = vadd.f32 0.0, %v216
    %v218 = vpop.f32.mrb[0].mxu0
    %v219 = vadd.f32 0.0, %v218
    %v220 = vpop.f32.mrb[0].mxu0
    %v221 = vadd.f32 0.0, %v220
    %v222 = vpop.f32.mrb[0].mxu0
    %v223 = vadd.f32 0.0, %v222
    %224 = vmatprep.mubr.bf16.mxu0 0
    %225 = vmatmul.mubr.bf16.gmra.mrb[0].mxu0 %v87
    %v226 = vpop.f32.mrb[0].mxu0
    %v227 = vadd.f32 0.0, %v226
    %v228 = vpop.f32.mrb[0].mxu0
    %v229 = vadd.f32 0.0, %v228
    %v230 = vpop.f32.mrb[0].mxu0
    %v231 = vadd.f32 0.0, %v230
    %v232 = vpop.f32.mrb[0].mxu0
    %v233 = vadd.f32 0.0, %v232
    %234 = vmatprep.mubr.bf16.mxu0 0
    %235 = vmatmul.mubr.bf16.gmra.mrb[0].mxu0 %v88
    %v236 = vpop.f32.mrb[0].mxu0
    %v237 = vadd.f32 0.0, %v236
    %v238 = vpop.f32.mrb[0].mxu0
    %v239 = vadd.f32 0.0, %v238
    %v240 = vpop.f32.mrb[0].mxu0
    %v241 = vadd.f32 0.0, %v240
    %v242 = vpop.f32.mrb[0].mxu0
    %v243 = vadd.f32 0.0, %v242
    %244 = vmatprep.mubr.bf16.mxu0 0
    %245 = vmatmul.mubr.bf16.gmra.mrb[0].mxu0 %v89
    %v246 = vpop.f32.mrb[0].mxu0
    %v247 = vadd.f32 0.0, %v246
    %v248 = vpop.f32.mrb[0].mxu0
    %v249 = vadd.f32 0.0, %v248
    %v250 = vpop.f32.mrb[0].mxu0
    %v251 = vadd.f32 0.0, %v250
    %v252 = vpop.f32.mrb[0].mxu0
    %v253 = vadd.f32 0.0, %v252
    %254 = vmatprep.mubr.bf16.mxu0 0
    %255 = vmatmul.mubr.bf16.gmra.mrb[0].mxu0 %v90
    %v256 = vpop.f32.mrb[0].mxu0
    %v257 = vadd.f32 0.0, %v256
    %v258 = vpop.f32.mrb[0].mxu0
    %v259 = vadd.f32 0.0, %v258
    %v260 = vpop.f32.mrb[0].mxu0
    %v261 = vadd.f32 0.0, %v260
    %v262 = vpop.f32.mrb[0].mxu0
    %v263 = vadd.f32 0.0, %v262
    %264 = vmatprep.mubr.bf16.mxu0 0
    %265 = vmatmul.mubr.bf16.gmra.mrb[0].mxu0 %v91
    %v266 = vpop.f32.mrb[0].mxu0
    %v267 = vadd.f32 0.0, %v266
    %v268 = vpop.f32.mrb[0].mxu0
    %v269 = vadd.f32 0.0, %v268
    %v270 = vpop.f32.mrb[0].mxu0
    %v271 = vadd.f32 0.0, %v270
    %v272 = vpop.f32.mrb[0].mxu0
    %v273 = vadd.f32 0.0, %v272
    %274 = vmatprep.mubr.bf16.mxu0 0
    %275 = vmatmul.mubr.bf16.gmra.mrb[0].mxu0 %v92
    %v276 = vpop.f32.mrb[0].mxu0
    %v277 = vadd.f32 0.0, %v276
    %v278 = vpop.f32.mrb[0].mxu0
    %v279 = vadd.f32 0.0, %v278
    %v280 = vpop.f32.mrb[0].mxu0
    %v281 = vadd.f32 0.0, %v280
    %v282 = vpop.f32.mrb[0].mxu0
    %v283 = vadd.f32 0.0, %v282
    %284 = vmatprep.mubr.bf16.mxu0 0
    %285 = vmatmul.mubr.bf16.gmra.mrb[0].mxu0 %v93
    %v286 = vpop.f32.mrb[0].mxu0
    %v287 = vadd.f32 0.0, %v286
    %v288 = vpop.f32.mrb[0].mxu0
    %v289 = vadd.f32 0.0, %v288
    %v290 = vpop.f32.mrb[0].mxu0
    %v291 = vadd.f32 0.0, %v290
    %v292 = vpop.f32.mrb[0].mxu0
    %v293 = vadd.f32 0.0, %v292
    %294 = vdwg.mxu0
    %v295 = vld [vmem:[%s2] sm:$0xf]
    %v296 = vld [vmem:[%s2 + $0x4] sm:$0xf]
    %v297 = vld [vmem:[%s2 + $0x8] sm:$0xf]
    %v298 = vld [vmem:[%s2 + $0xc] sm:$0xf]
    %v299 = vld [vmem:[%s2 + $0x10] sm:$0xf]
    %v300 = vld [vmem:[%s2 + $0x14] sm:$0xf]
    %v301 = vld [vmem:[%s2 + $0x18] sm:$0xf]
    %v302 = vld [vmem:[%s2 + $0x1c] sm:$0xf]
    %v303 = vld [vmem:[%s2 + $0x20] sm:$0xf]
    %v304 = vld [vmem:[%s2 + $0x24] sm:$0xf]
    %v305 = vld [vmem:[%s2 + $0x28] sm:$0xf]
    %v306 = vld [vmem:[%s2 + $0x2c] sm:$0xf]
    %v307 = vld [vmem:[%s2 + $0x30] sm:$0xf]
    %v308 = vld [vmem:[%s2 + $0x34] sm:$0xf]
    %v309 = vld [vmem:[%s2 + $0x38] sm:$0xf]
    %v310 = vld [vmem:[%s2 + $0x3c] sm:$0xf]
    %v311 = vld [vmem:[%s3] sm:$0xff]
    %v312 = vld [vmem:[%s3 + $0x8] sm:$0xff]
    %v313 = vld [vmem:[%s3 + $0x10] sm:$0xff]
    %v314 = vld [vmem:[%s3 + $0x18] sm:$0xff]
    %v315 = vld [vmem:[%s3 + $0x20] sm:$0xff]
    %v316 = vld [vmem:[%s3 + $0x28] sm:$0xff]
    %v317 = vld [vmem:[%s3 + $0x30] sm:$0xff]
    %v318 = vld [vmem:[%s3 + $0x38] sm:$0xff]
    %v335 = vunpack.c.l.b16 %v295
    %v336 = vunpack.c.l.b16 %v296
    %v337 = vunpack.c.l.b16 %v297
    %v338 = vunpack.c.l.b16 %v298
    %v339 = vunpack.c.l.b16 %v299
    %v340 = vunpack.c.l.b16 %v300
    %v341 = vunpack.c.l.b16 %v301
    %v342 = vunpack.c.l.b16 %v302
    %v343 = vunpack.c.l.b16 %v303
    %v344 = vunpack.c.l.b16 %v304
    %v345 = vunpack.c.l.b16 %v305
    %v346 = vunpack.c.l.b16 %v306
    %v347 = vunpack.c.l.b16 %v307
    %v348 = vunpack.c.l.b16 %v308
    %v349 = vunpack.c.l.b16 %v309
    %v350 = vunpack.c.l.b16 %v310
    %v351 = vpack.c.b16 %v336, %v335
    %v352 = vpack.c.b16 %v338, %v337
    %v353 = vpack.c.b16 %v340, %v339
    %v354 = vpack.c.b16 %v342, %v341
    %v355 = vpack.c.b16 %v344, %v343
    %v356 = vpack.c.b16 %v346, %v345
    %v357 = vpack.c.b16 %v348, %v347
    %v358 = vpack.c.b16 %v350, %v349
    %v367 = vunpack.c.l.b16 %v311
    %v368 = vunpack.c.h.b16 %v311
    %v369 = vunpack.c.l.b16 %v312
    %v370 = vunpack.c.h.b16 %v312
    %v371 = vunpack.c.l.b16 %v313
    %v372 = vunpack.c.h.b16 %v313
    %v373 = vunpack.c.l.b16 %v314
    %v374 = vunpack.c.h.b16 %v314
    %v375 = vunpack.c.l.b16 %v315
    %v376 = vunpack.c.h.b16 %v315
    %v377 = vunpack.c.l.b16 %v316
    %v378 = vunpack.c.h.b16 %v316
    %v379 = vunpack.c.l.b16 %v317
    %v380 = vunpack.c.h.b16 %v317
    %v381 = vunpack.c.l.b16 %v318
    %v382 = vunpack.c.h.b16 %v318
    %v383 = vpack.c.b16 %v369, %v367
    %v384 = vpack.c.b16 %v370, %v368
    %v385 = vpack.c.b16 %v373, %v371
    %v386 = vpack.c.b16 %v374, %v372
    %v387 = vpack.c.b16 %v377, %v375
    %v388 = vpack.c.b16 %v378, %v376
    %v389 = vpack.c.b16 %v381, %v379
    %v390 = vpack.c.b16 %v382, %v380
    %vm399 = vcmask 523264
    %v401 = vsel %vm399, %v351, 0
    %v404 = vsel %vm399, %v352, 0
    %v407 = vsel %vm399, %v353, 0
    %v410 = vsel %vm399, %v354, 0
    %v413 = vsel %vm399, %v355, 0
    %v416 = vsel %vm399, %v356, 0
    %v419 = vsel %vm399, %v357, 0
    %v422 = vsel %vm399, %v358, 0
    %424 = vmatprep.subr.bf16.mxu0 %v384
    %425 = vmatpush1.bf16.msra.mxu0 %v383
    %426 = vmatprep.subr.bf16.mxu0 %v386
    %427 = vmatpush1.bf16.msra.mxu0 %v385
    %428 = vmatprep.subr.bf16.mxu0 %v388
    %429 = vmatpush1.bf16.msra.mxu0 %v387
    %430 = vmatprep.subr.bf16.mxu0 %v390
    %431 = vmatpush1.bf16.msra.mxu0 %v389
    %432 = vmatprep.subr.bf16.mxu0 0
    %433 = vmatpush1.bf16.msra.mxu0 0
    %434 = vmatprep.subr.bf16.mxu0 0
    %435 = vmatpush1.bf16.msra.mxu0 0
    %436 = vmatprep.subr.bf16.mxu0 0
    %437 = vmatpush1.bf16.msra.mxu0 0
    %438 = vmatprep.subr.bf16.mxu0 0
    %439 = vmatpush1.bf16.msra.mxu0 0
    %440 = vmatprep.subr.bf16.mxu0 0
    %441 = vmatpush1.bf16.msra.mxu0 0
    %442 = vmatprep.subr.bf16.mxu0 0
    %443 = vmatpush1.bf16.msra.mxu0 0
    %444 = vmatprep.subr.bf16.mxu0 0
    %445 = vmatpush1.bf16.msra.mxu0 0
    %446 = vmatprep.subr.bf16.mxu0 0
    %447 = vmatpush1.bf16.msra.mxu0 0
    %448 = vmatprep.subr.bf16.mxu0 0
    %449 = vmatpush1.bf16.msra.mxu0 0
    %450 = vmatprep.subr.bf16.mxu0 0
    %451 = vmatpush1.bf16.msra.mxu0 0
    %452 = vmatprep.subr.bf16.mxu0 0
    %453 = vmatpush1.bf16.msra.mxu0 0
    %454 = vmatprep.subr.bf16.mxu0 0
    %455 = vmatpush1.bf16.msra.mxu0 0
    %456 = vmatprep.mubr.bf16.mxu0 0
    %457 = vmatmul.mubr.bf16.gmra.mrb[0].mxu0 %v401
    %v458 = vpop.f32.mrb[0].mxu0
    %v459 = vadd.f32 0.0, %v458
    %v460 = vpop.f32.mrb[0].mxu0
    %v461 = vadd.f32 0.0, %v460
    %v462 = vpop.f32.mrb[0].mxu0
    %v463 = vadd.f32 0.0, %v462
    %v464 = vpop.f32.mrb[0].mxu0
    %v465 = vadd.f32 0.0, %v464
    %466 = vmatprep.mubr.bf16.mxu0 0
    %467 = vmatmul.mubr.bf16.gmra.mrb[0].mxu0 %v404
    %v468 = vpop.f32.mrb[0].mxu0
    %v469 = vadd.f32 0.0, %v468
    %v470 = vpop.f32.mrb[0].mxu0
    %v471 = vadd.f32 0.0, %v470
    %v472 = vpop.f32.mrb[0].mxu0
    %v473 = vadd.f32 0.0, %v472
    %v474 = vpop.f32.mrb[0].mxu0
    %v475 = vadd.f32 0.0, %v474
    %476 = vmatprep.mubr.bf16.mxu0 0
    %477 = vmatmul.mubr.bf16.gmra.mrb[0].mxu0 %v407
    %v478 = vpop.f32.mrb[0].mxu0
    %v479 = vadd.f32 0.0, %v478
    %v480 = vpop.f32.mrb[0].mxu0
    %v481 = vadd.f32 0.0, %v480
    %v482 = vpop.f32.mrb[0].mxu0
    %v483 = vadd.f32 0.0, %v482
    %v484 = vpop.f32.mrb[0].mxu0
    %v485 = vadd.f32 0.0, %v484
    %486 = vmatprep.mubr.bf16.mxu0 0
    %487 = vmatmul.mubr.bf16.gmra.mrb[0].mxu0 %v410
    %v488 = vpop.f32.mrb[0].mxu0
    %v489 = vadd.f32 0.0, %v488
    %v490 = vpop.f32.mrb[0].mxu0
    %v491 = vadd.f32 0.0, %v490
    %v492 = vpop.f32.mrb[0].mxu0
    %v493 = vadd.f32 0.0, %v492
    %v494 = vpop.f32.mrb[0].mxu0
    %v495 = vadd.f32 0.0, %v494
    %496 = vmatprep.mubr.bf16.mxu0 0
    %497 = vmatmul.mubr.bf16.gmra.mrb[0].mxu0 %v413
    %v498 = vpop.f32.mrb[0].mxu0
    %v499 = vadd.f32 0.0, %v498
    %v500 = vpop.f32.mrb[0].mxu0
    %v501 = vadd.f32 0.0, %v500
    %v502 = vpop.f32.mrb[0].mxu0
    %v503 = vadd.f32 0.0, %v502
    %v504 = vpop.f32.mrb[0].mxu0
    %v505 = vadd.f32 0.0, %v504
    %506 = vmatprep.mubr.bf16.mxu0 0
    %507 = vmatmul.mubr.bf16.gmra.mrb[0].mxu0 %v416
    %v508 = vpop.f32.mrb[0].mxu0
    %v509 = vadd.f32 0.0, %v508
    %v510 = vpop.f32.mrb[0].mxu0
    %v511 = vadd.f32 0.0, %v510
    %v512 = vpop.f32.mrb[0].mxu0
    %v513 = vadd.f32 0.0, %v512
    %v514 = vpop.f32.mrb[0].mxu0
    %v515 = vadd.f32 0.0, %v514
    %516 = vmatprep.mubr.bf16.mxu0 0
    %517 = vmatmul.mubr.bf16.gmra.mrb[0].mxu0 %v419
    %v518 = vpop.f32.mrb[0].mxu0
    %v519 = vadd.f32 0.0, %v518
    %v520 = vpop.f32.mrb[0].mxu0
    %v521 = vadd.f32 0.0, %v520
    %v522 = vpop.f32.mrb[0].mxu0
    %v523 = vadd.f32 0.0, %v522
    %v524 = vpop.f32.mrb[0].mxu0
    %v525 = vadd.f32 0.0, %v524
    %526 = vmatprep.mubr.bf16.mxu0 0
    %527 = vmatmul.mubr.bf16.gmra.mrb[0].mxu0 %v422
    %v528 = vpop.f32.mrb[0].mxu0
    %v529 = vadd.f32 0.0, %v528
    %v530 = vpop.f32.mrb[0].mxu0
    %v531 = vadd.f32 0.0, %v530
    %v532 = vpop.f32.mrb[0].mxu0
    %v533 = vadd.f32 0.0, %v532
    %v534 = vpop.f32.mrb[0].mxu0
    %v535 = vadd.f32 0.0, %v534
    %536 = vdwg.mxu0
    %v537 = vld [vmem:[%s4] ss:$4 sm:$0x3]
    %v539 = vlaneseq
    %v540 = vshrl.u32 %v539, 7
    %v541 = vsub.s32 0, %v540
    %v542 = vrot.slane %v537, %v541
    %v543 = vlaneseq
    %v544 = vshrl.u32 %v543, 7
    %v545 = vsub.s32 1, %v544
    %v546 = vrot.slane %v537, %v545
    %v549 = vmul.f32 %v217, %v542
    %v550 = vmul.f32 %v219, %v546
    %v551 = vmul.f32 %v221, %v542
    %v552 = vmul.f32 %v223, %v546
    %v553 = vmul.f32 %v227, %v542
    %v554 = vmul.f32 %v229, %v546
    %v555 = vmul.f32 %v231, %v542
    %v556 = vmul.f32 %v233, %v546
    %v557 = vmul.f32 %v237, %v542
    %v558 = vmul.f32 %v239, %v546
    %v559 = vmul.f32 %v241, %v542
    %v560 = vmul.f32 %v243, %v546
    %v561 = vmul.f32 %v247, %v542
    %v562 = vmul.f32 %v249, %v546
    %v563 = vmul.f32 %v251, %v542
    %v564 = vmul.f32 %v253, %v546
    %v565 = vmul.f32 %v257, %v542
    %v566 = vmul.f32 %v259, %v546
    %v567 = vmul.f32 %v261, %v542
    %v568 = vmul.f32 %v263, %v546
    %v569 = vmul.f32 %v267, %v542
    %v570 = vmul.f32 %v269, %v546
    %v571 = vmul.f32 %v271, %v542
    %v572 = vmul.f32 %v273, %v546
    %v573 = vmul.f32 %v277, %v542
    %v574 = vmul.f32 %v279, %v546
    %v575 = vmul.f32 %v281, %v542
    %v576 = vmul.f32 %v283, %v546
    %v577 = vmul.f32 %v287, %v542
    %v578 = vmul.f32 %v289, %v546
    %v579 = vmul.f32 %v291, %v542
    %v580 = vmul.f32 %v293, %v546
    %s581 = scalar_lea.vmem %s4, 1
    %v582 = vld [vmem:[%s581] ss:$4 sm:$0x3]
    %v584 = vlaneseq
    %v585 = vshrl.u32 %v584, 7
    %v586 = vsub.s32 0, %v585
    %v587 = vrot.slane %v582, %v586
    %v588 = vlaneseq
    %v589 = vshrl.u32 %v588, 7
    %v590 = vsub.s32 1, %v589
    %v591 = vrot.slane %v582, %v590
    %v594 = vadd.f32 %v549, %v587
    %v595 = vadd.f32 %v550, %v591
    %v596 = vadd.f32 %v551, %v587
    %v597 = vadd.f32 %v552, %v591
    %v598 = vadd.f32 %v553, %v587
    %v599 = vadd.f32 %v554, %v591
    %v600 = vadd.f32 %v555, %v587
    %v601 = vadd.f32 %v556, %v591
    %v602 = vadd.f32 %v557, %v587
    %v603 = vadd.f32 %v558, %v591
    %v604 = vadd.f32 %v559, %v587
    %v605 = vadd.f32 %v560, %v591
    %v606 = vadd.f32 %v561, %v587
    %v607 = vadd.f32 %v562, %v591
    %v608 = vadd.f32 %v563, %v587
    %v609 = vadd.f32 %v564, %v591
    %v610 = vadd.f32 %v565, %v587
    %v611 = vadd.f32 %v566, %v591
    %v612 = vadd.f32 %v567, %v587
    %v613 = vadd.f32 %v568, %v591
    %v614 = vadd.f32 %v569, %v587
    %v615 = vadd.f32 %v570, %v591
    %v616 = vadd.f32 %v571, %v587
    %v617 = vadd.f32 %v572, %v591
    %v618 = vadd.f32 %v573, %v587
    %v619 = vadd.f32 %v574, %v591
    %v620 = vadd.f32 %v575, %v587
    %v621 = vadd.f32 %v576, %v591
    %v622 = vadd.f32 %v577, %v587
    %v623 = vadd.f32 %v578, %v591
    %v624 = vadd.f32 %v579, %v587
    %v625 = vadd.f32 %v580, %v591
    %s626 = scalar_lea.vmem %s4, 2
    %v627 = vld [vmem:[%s626] ss:$4 sm:$0x3]
    %v629 = vlaneseq
    %v630 = vshrl.u32 %v629, 7
    %v631 = vsub.s32 0, %v630
    %v632 = vrot.slane %v627, %v631
    %v633 = vlaneseq
    %v634 = vshrl.u32 %v633, 7
    %v635 = vsub.s32 1, %v634
    %v636 = vrot.slane %v627, %v635
    %v639 = vmul.f32 %v459, %v632
    %v640 = vmul.f32 %v461, %v636
    %v641 = vmul.f32 %v463, %v632
    %v642 = vmul.f32 %v465, %v636
    %v643 = vmul.f32 %v469, %v632
    %v644 = vmul.f32 %v471, %v636
    %v645 = vmul.f32 %v473, %v632
    %v646 = vmul.f32 %v475, %v636
    %v647 = vmul.f32 %v479, %v632
    %v648 = vmul.f32 %v481, %v636
    %v649 = vmul.f32 %v483, %v632
    %v650 = vmul.f32 %v485, %v636
    %v651 = vmul.f32 %v489, %v632
    %v652 = vmul.f32 %v491, %v636
    %v653 = vmul.f32 %v493, %v632
    %v654 = vmul.f32 %v495, %v636
    %v655 = vmul.f32 %v499, %v632
    %v656 = vmul.f32 %v501, %v636
    %v657 = vmul.f32 %v503, %v632
    %v658 = vmul.f32 %v505, %v636
    %v659 = vmul.f32 %v509, %v632
    %v660 = vmul.f32 %v511, %v636
    %v661 = vmul.f32 %v513, %v632
    %v662 = vmul.f32 %v515, %v636
    %v663 = vmul.f32 %v519, %v632
    %v664 = vmul.f32 %v521, %v636
    %v665 = vmul.f32 %v523, %v632
    %v666 = vmul.f32 %v525, %v636
    %v667 = vmul.f32 %v529, %v632
    %v668 = vmul.f32 %v531, %v636
    %v669 = vmul.f32 %v533, %v632
    %v670 = vmul.f32 %v535, %v636
    %v671 = vadd.f32 %v594, %v639
    %v672 = vadd.f32 %v595, %v640
    %v673 = vadd.f32 %v596, %v641
    %v674 = vadd.f32 %v597, %v642
    %v675 = vadd.f32 %v598, %v643
    %v676 = vadd.f32 %v599, %v644
    %v677 = vadd.f32 %v600, %v645
    %v678 = vadd.f32 %v601, %v646
    %v679 = vadd.f32 %v602, %v647
    %v680 = vadd.f32 %v603, %v648
    %v681 = vadd.f32 %v604, %v649
    %v682 = vadd.f32 %v605, %v650
    %v683 = vadd.f32 %v606, %v651
    %v684 = vadd.f32 %v607, %v652
    %v685 = vadd.f32 %v608, %v653
    %v686 = vadd.f32 %v609, %v654
    %v687 = vadd.f32 %v610, %v655
    %v688 = vadd.f32 %v611, %v656
    %v689 = vadd.f32 %v612, %v657
    %v690 = vadd.f32 %v613, %v658
    %v691 = vadd.f32 %v614, %v659
    %v692 = vadd.f32 %v615, %v660
    %v693 = vadd.f32 %v616, %v661
    %v694 = vadd.f32 %v617, %v662
    %v695 = vadd.f32 %v618, %v663
    %v696 = vadd.f32 %v619, %v664
    %v697 = vadd.f32 %v620, %v665
    %v698 = vadd.f32 %v621, %v666
    %v699 = vadd.f32 %v622, %v667
    %v700 = vadd.f32 %v623, %v668
    %v701 = vadd.f32 %v624, %v669
    %v702 = vadd.f32 %v625, %v670
    %s703 = scalar_lea.vmem %s4, 3
    %v704 = vld [vmem:[%s703] ss:$4 sm:$0x3]
    %v706 = vlaneseq
    %v707 = vshrl.u32 %v706, 7
    %v708 = vsub.s32 0, %v707
    %v709 = vrot.slane %v704, %v708
    %v710 = vlaneseq
    %v711 = vshrl.u32 %v710, 7
    %v712 = vsub.s32 1, %v711
    %v713 = vrot.slane %v704, %v712
    %v716 = vadd.f32 %v671, %v709
    %v717 = vadd.f32 %v672, %v713
    %v718 = vadd.f32 %v673, %v709
    %v719 = vadd.f32 %v674, %v713
    %v720 = vadd.f32 %v675, %v709
    %v721 = vadd.f32 %v676, %v713
    %v722 = vadd.f32 %v677, %v709
    %v723 = vadd.f32 %v678, %v713
    %v724 = vadd.f32 %v679, %v709
    %v725 = vadd.f32 %v680, %v713
    %v726 = vadd.f32 %v681, %v709
    %v727 = vadd.f32 %v682, %v713
    %v728 = vadd.f32 %v683, %v709
    %v729 = vadd.f32 %v684, %v713
    %v730 = vadd.f32 %v685, %v709
    %v731 = vadd.f32 %v686, %v713
    %v732 = vadd.f32 %v687, %v709
    %v733 = vadd.f32 %v688, %v713
    %v734 = vadd.f32 %v689, %v709
    %v735 = vadd.f32 %v690, %v713
    %v736 = vadd.f32 %v691, %v709
    %v737 = vadd.f32 %v692, %v713
    %v738 = vadd.f32 %v693, %v709
    %v739 = vadd.f32 %v694, %v713
    %v740 = vadd.f32 %v695, %v709
    %v741 = vadd.f32 %v696, %v713
    %v742 = vadd.f32 %v697, %v709
    %v743 = vadd.f32 %v698, %v713
    %v744 = vadd.f32 %v699, %v709
    %v745 = vadd.f32 %v700, %v713
    %v746 = vadd.f32 %v701, %v709
    %v747 = vadd.f32 %v702, %v713
    %v748 = vmax.f32 %v716, 0.0
    %v749 = vmax.f32 %v717, 0.0
    %v750 = vmax.f32 %v718, 0.0
    %v751 = vmax.f32 %v719, 0.0
    %v752 = vmax.f32 %v720, 0.0
    %v753 = vmax.f32 %v721, 0.0
    %v754 = vmax.f32 %v722, 0.0
    %v755 = vmax.f32 %v723, 0.0
    %v756 = vmax.f32 %v724, 0.0
    %v757 = vmax.f32 %v725, 0.0
    %v758 = vmax.f32 %v726, 0.0
    %v759 = vmax.f32 %v727, 0.0
    %v760 = vmax.f32 %v728, 0.0
    %v761 = vmax.f32 %v729, 0.0
    %v762 = vmax.f32 %v730, 0.0
    %v763 = vmax.f32 %v731, 0.0
    %v764 = vmax.f32 %v732, 0.0
    %v765 = vmax.f32 %v733, 0.0
    %v766 = vmax.f32 %v734, 0.0
    %v767 = vmax.f32 %v735, 0.0
    %v768 = vmax.f32 %v736, 0.0
    %v769 = vmax.f32 %v737, 0.0
    %v770 = vmax.f32 %v738, 0.0
    %v771 = vmax.f32 %v739, 0.0
    %v772 = vmax.f32 %v740, 0.0
    %v773 = vmax.f32 %v741, 0.0
    %v774 = vmax.f32 %v742, 0.0
    %v775 = vmax.f32 %v743, 0.0
    %v776 = vmax.f32 %v744, 0.0
    %v777 = vmax.f32 %v745, 0.0
    %v778 = vmax.f32 %v746, 0.0
    %v779 = vmax.f32 %v747, 0.0
    %780 = vst [vmem:[#allocation2] sm:$0xff] %v748
    %781 = vst [vmem:[#allocation2 + $0x8] sm:$0xff] %v749
    %782 = vst [vmem:[#allocation2 + $0x10] sm:$0xff] %v750
    %783 = vst [vmem:[#allocation2 + $0x18] sm:$0xff] %v751
    %784 = vst [vmem:[#allocation2 + $0x20] sm:$0xff] %v752
    %785 = vst [vmem:[#allocation2 + $0x28] sm:$0xff] %v753
    %786 = vst [vmem:[#allocation2 + $0x30] sm:$0xff] %v754
    %787 = vst [vmem:[#allocation2 + $0x38] sm:$0xff] %v755
    %788 = vst [vmem:[#allocation2 + $0x40] sm:$0xff] %v756
    %789 = vst [vmem:[#allocation2 + $0x48] sm:$0xff] %v757
    %790 = vst [vmem:[#allocation2 + $0x50] sm:$0xff] %v758
    %791 = vst [vmem:[#allocation2 + $0x58] sm:$0xff] %v759
    %792 = vst [vmem:[#allocation2 + $0x60] sm:$0xff] %v760
    %793 = vst [vmem:[#allocation2 + $0x68] sm:$0xff] %v761
    %794 = vst [vmem:[#allocation2 + $0x70] sm:$0xff] %v762
    %795 = vst [vmem:[#allocation2 + $0x78] sm:$0xff] %v763
    %796 = vst [vmem:[#allocation2 + $0x80] sm:$0xff] %v764
    %797 = vst [vmem:[#allocation2 + $0x88] sm:$0xff] %v765
    %798 = vst [vmem:[#allocation2 + $0x90] sm:$0xff] %v766
    %799 = vst [vmem:[#allocation2 + $0x98] sm:$0xff] %v767
    %800 = vst [vmem:[#allocation2 + $0xa0] sm:$0xff] %v768
    %801 = vst [vmem:[#allocation2 + $0xa8] sm:$0xff] %v769
    %802 = vst [vmem:[#allocation2 + $0xb0] sm:$0xff] %v770
    %803 = vst [vmem:[#allocation2 + $0xb8] sm:$0xff] %v771
    %804 = vst [vmem:[#allocation2 + $0xc0] sm:$0xff] %v772
    %805 = vst [vmem:[#allocation2 + $0xc8] sm:$0xff] %v773
    %806 = vst [vmem:[#allocation2 + $0xd0] sm:$0xff] %v774
    %807 = vst [vmem:[#allocation2 + $0xd8] sm:$0xff] %v775
    %808 = vst [vmem:[#allocation2 + $0xe0] sm:$0xff] %v776
    %809 = vst [vmem:[#allocation2 + $0xe8] sm:$0xff] %v777
    %810 = vst [vmem:[#allocation2 + $0xf0] sm:$0xff] %v778
    %811 = vst [vmem:[#allocation2 + $0xf8] sm:$0xff] %v779
    // Predicated region
    $region22: #{bottleneck_forward.5} parent=1 // pred_check
      _
    $region23: #{bottleneck_forward.5} parent=1 // pred_check_branch
      %813 = sbr.rel (0) target = $region25
    $region24: #{bottleneck_forward.5} parent=1 // pred_region
      %s815 = ssub.s32 4096, 4096
      %816 = vsyncadd [#allocation3], %s815
      %s817 = sshll.u32 [#allocation2], 4
      %s818 = int_to_ptr.vmem [resolvable:$true] %s817
      %823 = dma.vmem_to_hbm [thread:$0]  %s818, 4096, %s5, [#allocation3], 256, 256, 16
    $region25: #{bottleneck_forward.5} parent=1 // pred_fallthru
      _
    // Predicated region
    $region26: #{bottleneck_forward.5} parent=1 // pred_check
      _
    $region27: #{bottleneck_forward.5} parent=1 // pred_check_branch
      %825 = sbr.rel (0) target = $region29
    $region28: #{bottleneck_forward.5} parent=1 // pred_region
      %826 = dma.done [#allocation3], 4096
    $region29: #{bottleneck_forward.5} parent=1 // pred_fallthru
      _
    %827 = vsyncpa [#allocation3], 1

</llo_original>
